<compile_context>
chip_gen: v5e
topology: v5e:2x2
jax: 0.10.0
libtpu: 0.0.40
codegen_flags: <defaults>
</compile_context>

<pallas_src>
import jax
import jax.numpy as jnp
from jax.experimental import pallas as pl
from jax.experimental.pallas import tpu as pltpu

_BN_EPS = 1e-5


def _round_up(n, m=128):
    return ((n + m - 1) // m) * m


# ----------------------------------------------------------------------------
# Static layout of the packed weight / bias slabs
# ----------------------------------------------------------------------------
def _layout(input_size, latent_dim, hidden_dim, forward_dim):
    IN_P = _round_up(input_size)
    FD_P = _round_up(forward_dim)
    LAT_P = _round_up(latent_dim)
    HID_P = _round_up(hidden_dim)
    F_P = _round_up(64)
    dims = {"IN_P": IN_P, "FD_P": FD_P, "LAT_P": LAT_P, "HID_P": HID_P, "F_P": F_P}

    # (name, padded_K, padded_N) -- every K/N is a multiple of 128, so every
    # row offset in the slab is 128-aligned (safe for bf16 sublane packing).
    w_entries = [
        ("f1",   IN_P,  F_P),
        ("f2",   F_P,   F_P),
        ("f3",   F_P,   F_P),
        ("f4",   F_P,   FD_P),
        ("e1x",  IN_P,  HID_P),
        ("e1p",  FD_P,  HID_P),
        ("e2",   HID_P, HID_P),
        ("head", HID_P, 2 * LAT_P),
        ("d1z",  LAT_P, HID_P),
        ("d1y",  FD_P,  HID_P),
        ("d2",   HID_P, IN_P),
    ]
    W, off = {}, 0
    for name, k, n in w_entries:
        W[name] = (off, k, n)
        off += k
    w_rows = off

    b_entries = [("f1", F_P), ("f2", F_P), ("f3", F_P), ("f4", FD_P),
                 ("e1", HID_P), ("e2", HID_P), ("head", 2 * LAT_P),
                 ("d1", HID_P), ("d2", IN_P)]
    BI = {name: i for i, (name, _) in enumerate(b_entries)}       # bias slot index
    BW = dict(b_entries)                                          # bias width
    maxW = max(max(n for _, _, n in w_entries), max(BW.values()))
    return dims, W, w_rows, BI, BW, maxW


# ----------------------------------------------------------------------------
# Kernel
# ----------------------------------------------------------------------------
def _make_kernel(dims, W, BI, BW, mxu_dtype):
    IN_P, FD_P, LAT_P = dims["IN_P"], dims["FD_P"], dims["LAT_P"]

    def kernel(x_ref, y_ref, eps_ref, w_ref, b_ref, out_ref):
        def mm(a, name):
            off, k, n = W[name]
            return jnp.dot(a.astype(mxu_dtype), w_ref[off:off + k, :n],
                           preferred_element_type=jnp.float32)

        def bias(name):
            r = 8 * BI[name]                      # sublane-aligned bias row
            return b_ref[r:r + 1, :BW[name]]      # (1, N) f32, broadcasts over rows

        x = x_ref[...]

        # ---- forward_net: Linear/ReLU x3 (+ folded BN) + Linear ----
        h = jnp.maximum(mm(x, "f1") + bias("f1"), 0.0)
        h = jnp.maximum(mm(h, "f2") + bias("f2"), 0.0)     # BN1 folded into f2
        h = jnp.maximum(mm(h, "f3") + bias("f3"), 0.0)     # BN2 folded into f3
        y_pred = mm(h, "f4") + bias("f4")

        # ---- encoder on cat(x, y_pred): split matmul (no in-kernel concat) ----
        he = jnp.maximum(mm(x, "e1x") + mm(y_pred, "e1p") + bias("e1"), 0.0)
        he = jnp.maximum(mm(he, "e2") + bias("e2"), 0.0)   # BN_e folded into e2

        # ---- fused mu|logvar head (single N=2*LAT_P matmul) ----
        hl = mm(he, "head") + bias("head")
        mu = hl[:, :LAT_P]
        lv = hl[:, LAT_P:]

        # ---- reparameterize: z = mu + eps * exp(0.5 * logvar)  (all f32) ----
        z = mu + eps_ref[...] * jnp.exp(0.5 * lv)

        # ---- decoder on cat(z, y): split matmul ----
        hd = jnp.maximum(mm(z, "d1z") + mm(y_ref[...], "d1y") + bias("d1"), 0.0)
        recon = mm(hd, "d2") + bias("d2")                   # BN_d folded into d2

        # ---- single lane-dense output slab: [recon | mu | logvar | y_pred] ----
        out_ref[:, :IN_P] = recon
        out_ref[:, IN_P:IN_P + LAT_P] = mu
        out_ref[:, IN_P + LAT_P:IN_P + 2 * LAT_P] = lv
        out_ref[:, IN_P + 2 * LAT_P:] = y_pred

    return kernel


# ----------------------------------------------------------------------------
# Wrapper
# ----------------------------------------------------------------------------
def cvae_forward(x, y, eps, prepared, *, input_size, latent_dim, forward_dim,
                 hidden_dim, tb=256):
    """Fused cVAE_new.forward. Returns (recon_x, mu, logvar, y_pred)."""
    B = x.shape[0]
    assert B % tb == 0 and tb % 8 == 0, "batch tile must divide B and be a multiple of 8"

    dims, W, w_rows, BI, BW, maxW = _layout(input_size, latent_dim, hidden_dim,
                                            forward_dim)
    IN_P, FD_P, LAT_P = dims["IN_P"], dims["FD_P"], dims["LAT_P"]
    OUT_W = IN_P + 2 * LAT_P + FD_P

    def pad_cols(a, c):
        return jnp.pad(a, ((0, 0), (0, c - a.shape[1])))

    x_p = pad_cols(x, IN_P)
    y_p = pad_cols(y, FD_P)
    eps_p = pad_cols(eps, LAT_P)

    w_slab = prepared["w_slab"]
    b_slab = prepared["b_slab"]
    assert w_slab.shape == (w_rows, maxW) and b_slab.shape == (8 * len(BI), maxW)

    grid = (B // tb,)

    def row(cols):
        return pl.BlockSpec((tb, cols), lambda i: (i, 0))

    def const(a):
        return pl.BlockSpec(a.shape, lambda i: (0, 0))   # grid-invariant: stays resident

    in_specs = [row(IN_P), row(FD_P), row(LAT_P), const(w_slab), const(b_slab)]
    out_specs = pl.BlockSpec((tb, OUT_W), lambda i: (i, 0))
    out_shape = jax.ShapeDtypeStruct((B, OUT_W), jnp.float32)

    flops = 2 * B * sum(k * n for (_, k, n) in W.values())
    bytes_accessed = (x_p.size + y_p.size + eps_p.size + B * OUT_W) * 4 \
        + int(w_slab.size) * w_slab.dtype.itemsize + int(b_slab.size) * 4
    ce = pl.CostEstimate(flops=int(flops), transcendentals=int(B * LAT_P),
                         bytes_accessed=int(bytes_accessed))

    out = pl.pallas_call(
        _make_kernel(dims, W, BI, BW, w_slab.dtype),
        grid_spec=pltpu.PrefetchScalarGridSpec(
            num_scalar_prefetch=0,
            grid=grid,
            in_specs=in_specs,
            out_specs=out_specs),
        out_shape=out_shape,
        compiler_params=pltpu.CompilerParams(
            dimension_semantics=("parallel",)),
        cost_estimate=ce,
    )(x_p, y_p, eps_p, w_slab, b_slab)

    recon = out[:, :input_size]
    mu = out[:, IN_P:IN_P + latent_dim]
    logvar = out[:, IN_P + LAT_P:IN_P + LAT_P + latent_dim]
    y_pred = out[:, IN_P + 2 * LAT_P:IN_P + 2 * LAT_P + forward_dim]
    return recon, mu, logvar, y_pred


# ----------------------------------------------------------------------------
# Raw PyTorch-like parameters and preparation (fold BN, fuse heads, pack slabs)
# ----------------------------------------------------------------------------
def init_raw_params(key, input_size, latent_dim, hidden_dim, forward_dim):
    keys = iter(jax.random.split(key, 24))

    def linear(fan_in, fan_out):
        lim = 1.0 / (fan_in ** 0.5)
        kw, kb = jax.random.split(next(keys))
        w = jax.random.uniform(kw, (fan_in, fan_out), jnp.float32, -lim, lim)
        b = jax.random.uniform(kb, (fan_out,), jnp.float32, -lim, lim)
        return w, b

    def bn(n):
        k1, k2, k3, k4 = jax.random.split(next(keys), 4)
        return {"gamma": 1.0 + 0.1 * jax.random.normal(k1, (n,), jnp.float32),
                "beta": 0.1 * jax.random.normal(k2, (n,), jnp.float32),
                "mean": 0.1 * jax.random.normal(k3, (n,), jnp.float32),
                "var": 1.0 + 0.1 * jax.random.uniform(k4, (n,), jnp.float32)}

    raw = {}
    raw["f1_w"], raw["f1_b"] = linear(input_size, 64)
    raw["f_bn1"] = bn(64)
    raw["f2_w"], raw["f2_b"] = linear(64, 64)
    raw["f_bn2"] = bn(64)
    raw["f3_w"], raw["f3_b"] = linear(64, 64)
    raw["f4_w"], raw["f4_b"] = linear(64, forward_dim)
    raw["e1_w"], raw["e1_b"] = linear(input_size + forward_dim, hidden_dim)
    raw["e_bn"] = bn(hidden_dim)
    raw["e2_w"], raw["e2_b"] = linear(hidden_dim, hidden_dim)
    raw["mu_w"], raw["mu_b"] = linear(hidden_dim, latent_dim)
    raw["lv_w"], raw["lv_b"] = linear(hidden_dim, latent_dim)
    raw["d1_w"], raw["d1_b"] = linear(latent_dim + forward_dim, hidden_dim)
    raw["d_bn"] = bn(hidden_dim)
    raw["d2_w"], raw["d2_b"] = linear(hidden_dim, input_size)
    return raw


def prepare_params(raw, input_size, latent_dim, hidden_dim, forward_dim,
                   weight_dtype=jnp.bfloat16):
    """Fold eval-mode BatchNorm into the following Linear, split the concat
    matmuls, fuse mu/logvar heads, zero-pad to 128 lanes, and pack everything
    into one bf16 weight slab + one f32 bias slab."""
    dims, W, w_rows, BI, BW, maxW = _layout(input_size, latent_dim, hidden_dim,
                                            forward_dim)
    LAT_P = dims["LAT_P"]

    def fold(bnp, w, b):
        s = bnp["gamma"] / jnp.sqrt(bnp["var"] + _BN_EPS)
        t = bnp["beta"] - bnp["mean"] * s
        return s[:, None] * w, t @ w + b

    f2_w, f2_b = fold(raw["f_bn1"], raw["f2_w"], raw["f2_b"])
    f3_w, f3_b = fold(raw["f_bn2"], raw["f3_w"], raw["f3_b"])
    e2_w, e2_b = fold(raw["e_bn"], raw["e2_w"], raw["e2_b"])
    d2_w, d2_b = fold(raw["d_bn"], raw["d2_w"], raw["d2_b"])

    e1x = raw["e1_w"][:input_size]       # rows multiplying x
    e1p = raw["e1_w"][input_size:]       # rows multiplying y_pred
    d1z = raw["d1_w"][:latent_dim]       # rows multiplying z
    d1y = raw["d1_w"][latent_dim:]       # rows multiplying y

    # fused mu | logvar head (each half padded to LAT_P lanes)
    head_w = jnp.zeros((hidden_dim, 2 * LAT_P), jnp.float32)
    head_w = head_w.at[:, :latent_dim].set(raw["mu_w"])
    head_w = head_w.at[:, LAT_P:LAT_P + latent_dim].set(raw["lv_w"])
    head_b = jnp.zeros((2 * LAT_P,), jnp.float32)
    head_b = head_b.at[:latent_dim].set(raw["mu_b"])
    head_b = head_b.at[LAT_P:LAT_P + latent_dim].set(raw["lv_b"])

    weights = {"f1": raw["f1_w"], "f2": f2_w, "f3": f3_w, "f4": raw["f4_w"],
               "e1x": e1x, "e1p": e1p, "e2": e2_w, "head": head_w,
               "d1z": d1z, "d1y": d1y, "d2": d2_w}
    biases = {"f1": raw["f1_b"], "f2": f2_b, "f3": f3_b, "f4": raw["f4_b"],
              "e1": raw["e1_b"], "e2": e2_b, "head": head_b,
              "d1": raw["d1_b"], "d2": d2_b}

    w_slab = jnp.zeros((w_rows, maxW), jnp.float32)
    for name, (off, _, _) in W.items():
        w = weights[name]
        w_slab = w_slab.at[off:off + w.shape[0], :w.shape[1]].set(w)
    w_slab = w_slab.astype(weight_dtype)          # MXU operands only

    b_slab = jnp.zeros((8 * len(BI), maxW), jnp.float32)   # f32, sublane-aligned rows
    for name, i in BI.items():
        b = biases[name]
        b_slab = b_slab.at[8 * i, :b.shape[0]].set(b)

    return {"w_slab": w_slab, "b_slab": b_slab}


# ----------------------------------------------------------------------------
# Pure-JAX reference (unfolded, unpadded, f32; eval-mode BN)
# ----------------------------------------------------------------------------
def _reference(x, y, eps, raw):
    hi = jax.lax.Precision.HIGHEST

    def mm(a, b):
        return jnp.dot(a, b, precision=hi)

    def bn(u, p):
        return p["gamma"] * (u - p["mean"]) / jnp.sqrt(p["var"] + _BN_EPS) + p["beta"]

    h = jnp.maximum(mm(x, raw["f1_w"]) + raw["f1_b"], 0.0)
    h = bn(h, raw["f_bn1"])
    h = jnp.maximum(mm(h, raw["f2_w"]) + raw["f2_b"], 0.0)
    h = bn(h, raw["f_bn2"])
    h = jnp.maximum(mm(h, raw["f3_w"]) + raw["f3_b"], 0.0)
    y_pred = mm(h, raw["f4_w"]) + raw["f4_b"]

    xe = jnp.concatenate([x, y_pred], axis=1)
    he = jnp.maximum(mm(xe, raw["e1_w"]) + raw["e1_b"], 0.0)
    he = bn(he, raw["e_bn"])
    he = jnp.maximum(mm(he, raw["e2_w"]) + raw["e2_b"], 0.0)

    mu = mm(he, raw["mu_w"]) + raw["mu_b"]
    logvar = mm(he, raw["lv_w"]) + raw["lv_b"]
    z = mu + eps * jnp.exp(0.5 * logvar)

    zd = jnp.concatenate([z, y], axis=1)
    hd = jnp.maximum(mm(zd, raw["d1_w"]) + raw["d1_b"], 0.0)
    hd = bn(hd, raw["d_bn"])
    recon = mm(hd, raw["d2_w"]) + raw["d2_b"]
    return recon, mu, logvar, y_pred


if __name__ == "__main__":
    B = 512
    INPUT_SIZE = 16
    LATENT_DIM = 8
    HIDDEN_DIM = 256     # module default
    FORWARD_DIM = 3      # module default
    TB = 256             # batch tile -> grid=(2,) so both v7x TCs get a step

    key = jax.random.PRNGKey(0)
    kx, ky, keps, kp = jax.random.split(key, 4)
    x = jax.random.normal(kx, (B, INPUT_SIZE), jnp.float32)
    y = jax.random.normal(ky, (B, FORWARD_DIM), jnp.float32)
    eps = jax.random.normal(keps, (B, LATENT_DIM), jnp.float32)   # reparam noise

    raw = init_raw_params(kp, INPUT_SIZE, LATENT_DIM, HIDDEN_DIM, FORWARD_DIM)
    prepared = prepare_params(raw, INPUT_SIZE, LATENT_DIM, HIDDEN_DIM, FORWARD_DIM,
                              weight_dtype=jnp.bfloat16)

    recon, mu, logvar, y_pred = jax.block_until_ready(
        cvae_forward(x, y, eps, prepared,
                     input_size=INPUT_SIZE, latent_dim=LATENT_DIM,
                     forward_dim=FORWARD_DIM, hidden_dim=HIDDEN_DIM, tb=TB))

    r_recon, r_mu, r_lv, r_yp = _reference(x, y, eps, raw)

    # Tolerance covers bf16 MXU operands (f32 accumulation) on all generations.
    assert jnp.allclose(y_pred, r_yp, atol=5e-2, rtol=5e-2), "y_pred mismatch"
    assert jnp.allclose(mu, r_mu, atol=5e-2, rtol=5e-2), "mu mismatch"
    assert jnp.allclose(logvar, r_lv, atol=5e-2, rtol=5e-2), "logvar mismatch"
    assert jnp.allclose(recon, r_recon, atol=5e-2, rtol=5e-2), "recon mismatch"

    print("KERNEL_OK")
</pallas_src>

<mosaic_0001>
module attributes {stable_mosaic.version = 11 : i64} {
  func.func @kernel(%arg0: i32, %arg1: memref<256x128xf32, #tpu.memory_space<vmem>>, %arg2: memref<256x128xf32, #tpu.memory_space<vmem>>, %arg3: memref<256x128xf32, #tpu.memory_space<vmem>>, %arg4: memref<1792x256xbf16, #tpu.memory_space<vmem>>, %arg5: memref<72x256xf32, #tpu.memory_space<vmem>>, %arg6: memref<256x512xf32, #tpu.memory_space<vmem>>) attributes {dimension_semantics = [#tpu.dimension_semantics<parallel>], iteration_bounds = array<i64: 2>, scalar_prefetch = 0 : i64, scratch_operands = 0 : i64, tpu.core_type = #tpu.core_type<tc>, window_params = [{transform_indices = @transform_0, window_bounds = array<i64: 256, 128>}, {transform_indices = @transform_1, window_bounds = array<i64: 256, 128>}, {transform_indices = @transform_2, window_bounds = array<i64: 256, 128>}, {pipeline_mode = #tpu.pipeline_mode<synchronous>, transform_indices = @transform_3, window_bounds = array<i64: 1792, 256>}, {pipeline_mode = #tpu.pipeline_mode<synchronous>, transform_indices = @transform_4, window_bounds = array<i64: 72, 256>}, {transform_indices = @transform_5, window_bounds = array<i64: 256, 512>}]} {
    %c0 = arith.constant 0 : index
    %c0_0 = arith.constant 0 : index
    %0 = vector.load %arg1[%c0, %c0_0] : memref<256x128xf32, #tpu.memory_space<vmem>>, vector<256x128xf32>
    %1 = arith.truncf %0 : vector<256x128xf32> to vector<256x128xbf16>
    %c0_1 = arith.constant 0 : index
    %c0_2 = arith.constant 0 : index
    %2 = vector.load %arg4[%c0_1, %c0_2] : memref<1792x256xbf16, #tpu.memory_space<vmem>>, vector<128x128xbf16>
    %cst = arith.constant dense<0.000000e+00> : vector<256x128xf32>
    %3 = tpu.matmul %1, %2, %cst {dimension_numbers = #tpu.dot_dimension_numbers<[1], [0], [0], [1], [0, 0, 1, 1], [], []>} : vector<256x128xbf16>, vector<128x128xbf16>, vector<256x128xf32> -> vector<256x128xf32>
    %c0_3 = arith.constant 0 : index
    %c0_4 = arith.constant 0 : index
    %4 = vector.load %arg5[%c0_3, %c0_4] : memref<72x256xf32, #tpu.memory_space<vmem>>, vector<1x128xf32>
    %5 = vector.broadcast %4 : vector<1x128xf32> to vector<256x128xf32>
    %6 = arith.addf %3, %5 : vector<256x128xf32>
    %cst_5 = arith.constant 0.000000e+00 : f32
    %7 = vector.broadcast %cst_5 : f32 to vector<256x128xf32>
    %8 = arith.maximumf %6, %7 : vector<256x128xf32>
    %9 = arith.truncf %8 : vector<256x128xf32> to vector<256x128xbf16>
    %c128 = arith.constant 128 : index
    %c0_6 = arith.constant 0 : index
    %10 = vector.load %arg4[%c128, %c0_6] : memref<1792x256xbf16, #tpu.memory_space<vmem>>, vector<128x128xbf16>
    %cst_7 = arith.constant dense<0.000000e+00> : vector<256x128xf32>
    %11 = tpu.matmul %9, %10, %cst_7 {dimension_numbers = #tpu.dot_dimension_numbers<[1], [0], [0], [1], [0, 0, 1, 1], [], []>} : vector<256x128xbf16>, vector<128x128xbf16>, vector<256x128xf32> -> vector<256x128xf32>
    %c8 = arith.constant 8 : index
    %c0_8 = arith.constant 0 : index
    %12 = vector.load %arg5[%c8, %c0_8] : memref<72x256xf32, #tpu.memory_space<vmem>>, vector<1x128xf32>
    %13 = vector.broadcast %12 : vector<1x128xf32> to vector<256x128xf32>
    %14 = arith.addf %11, %13 : vector<256x128xf32>
    %cst_9 = arith.constant 0.000000e+00 : f32
    %15 = vector.broadcast %cst_9 : f32 to vector<256x128xf32>
    %16 = arith.maximumf %14, %15 : vector<256x128xf32>
    %17 = arith.truncf %16 : vector<256x128xf32> to vector<256x128xbf16>
    %c256 = arith.constant 256 : index
    %c0_10 = arith.constant 0 : index
    %18 = vector.load %arg4[%c256, %c0_10] : memref<1792x256xbf16, #tpu.memory_space<vmem>>, vector<128x128xbf16>
    %cst_11 = arith.constant dense<0.000000e+00> : vector<256x128xf32>
    %19 = tpu.matmul %17, %18, %cst_11 {dimension_numbers = #tpu.dot_dimension_numbers<[1], [0], [0], [1], [0, 0, 1, 1], [], []>} : vector<256x128xbf16>, vector<128x128xbf16>, vector<256x128xf32> -> vector<256x128xf32>
    %c16 = arith.constant 16 : index
    %c0_12 = arith.constant 0 : index
    %20 = vector.load %arg5[%c16, %c0_12] : memref<72x256xf32, #tpu.memory_space<vmem>>, vector<1x128xf32>
    %21 = vector.broadcast %20 : vector<1x128xf32> to vector<256x128xf32>
    %22 = arith.addf %19, %21 : vector<256x128xf32>
    %cst_13 = arith.constant 0.000000e+00 : f32
    %23 = vector.broadcast %cst_13 : f32 to vector<256x128xf32>
    %24 = arith.maximumf %22, %23 : vector<256x128xf32>
    %25 = arith.truncf %24 : vector<256x128xf32> to vector<256x128xbf16>
    %c384 = arith.constant 384 : index
    %c0_14 = arith.constant 0 : index
    %26 = vector.load %arg4[%c384, %c0_14] : memref<1792x256xbf16, #tpu.memory_space<vmem>>, vector<128x128xbf16>
    %cst_15 = arith.constant dense<0.000000e+00> : vector<256x128xf32>
    %27 = tpu.matmul %25, %26, %cst_15 {dimension_numbers = #tpu.dot_dimension_numbers<[1], [0], [0], [1], [0, 0, 1, 1], [], []>} : vector<256x128xbf16>, vector<128x128xbf16>, vector<256x128xf32> -> vector<256x128xf32>
    %c24 = arith.constant 24 : index
    %c0_16 = arith.constant 0 : index
    %28 = vector.load %arg5[%c24, %c0_16] : memref<72x256xf32, #tpu.memory_space<vmem>>, vector<1x128xf32>
    %29 = vector.broadcast %28 : vector<1x128xf32> to vector<256x128xf32>
    %30 = arith.addf %27, %29 : vector<256x128xf32>
    %31 = arith.truncf %0 : vector<256x128xf32> to vector<256x128xbf16>
    %c512 = arith.constant 512 : index
    %c0_17 = arith.constant 0 : index
    %32 = vector.load %arg4[%c512, %c0_17] : memref<1792x256xbf16, #tpu.memory_space<vmem>>, vector<128x256xbf16>
    %cst_18 = arith.constant dense<0.000000e+00> : vector<256x256xf32>
    %33 = tpu.matmul %31, %32, %cst_18 {dimension_numbers = #tpu.dot_dimension_numbers<[1], [0], [0], [1], [0, 0, 1, 1], [], []>} : vector<256x128xbf16>, vector<128x256xbf16>, vector<256x256xf32> -> vector<256x256xf32>
    %34 = arith.truncf %30 : vector<256x128xf32> to vector<256x128xbf16>
    %c640 = arith.constant 640 : index
    %c0_19 = arith.constant 0 : index
    %35 = vector.load %arg4[%c640, %c0_19] : memref<1792x256xbf16, #tpu.memory_space<vmem>>, vector<128x256xbf16>
    %cst_20 = arith.constant dense<0.000000e+00> : vector<256x256xf32>
    %36 = tpu.matmul %34, %35, %cst_20 {dimension_numbers = #tpu.dot_dimension_numbers<[1], [0], [0], [1], [0, 0, 1, 1], [], []>} : vector<256x128xbf16>, vector<128x256xbf16>, vector<256x256xf32> -> vector<256x256xf32>
    %37 = arith.addf %33, %36 : vector<256x256xf32>
    %c32 = arith.constant 32 : index
    %c0_21 = arith.constant 0 : index
    %38 = vector.load %arg5[%c32, %c0_21] : memref<72x256xf32, #tpu.memory_space<vmem>>, vector<1x256xf32>
    %39 = vector.broadcast %38 : vector<1x256xf32> to vector<256x256xf32>
    %40 = arith.addf %37, %39 : vector<256x256xf32>
    %cst_22 = arith.constant 0.000000e+00 : f32
    %41 = vector.broadcast %cst_22 : f32 to vector<256x256xf32>
    %42 = arith.maximumf %40, %41 : vector<256x256xf32>
    %43 = arith.truncf %42 : vector<256x256xf32> to vector<256x256xbf16>
    %c768 = arith.constant 768 : index
    %c0_23 = arith.constant 0 : index
    %44 = vector.load %arg4[%c768, %c0_23] : memref<1792x256xbf16, #tpu.memory_space<vmem>>, vector<256x256xbf16>
    %cst_24 = arith.constant dense<0.000000e+00> : vector<256x256xf32>
    %45 = tpu.matmul %43, %44, %cst_24 {dimension_numbers = #tpu.dot_dimension_numbers<[1], [0], [0], [1], [0, 0, 1, 1], [], []>} : vector<256x256xbf16>, vector<256x256xbf16>, vector<256x256xf32> -> vector<256x256xf32>
    %c40 = arith.constant 40 : index
    %c0_25 = arith.constant 0 : index
    %46 = vector.load %arg5[%c40, %c0_25] : memref<72x256xf32, #tpu.memory_space<vmem>>, vector<1x256xf32>
    %47 = vector.broadcast %46 : vector<1x256xf32> to vector<256x256xf32>
    %48 = arith.addf %45, %47 : vector<256x256xf32>
    %cst_26 = arith.constant 0.000000e+00 : f32
    %49 = vector.broadcast %cst_26 : f32 to vector<256x256xf32>
    %50 = arith.maximumf %48, %49 : vector<256x256xf32>
    %51 = arith.truncf %50 : vector<256x256xf32> to vector<256x256xbf16>
    %c1024 = arith.constant 1024 : index
    %c0_27 = arith.constant 0 : index
    %52 = vector.load %arg4[%c1024, %c0_27] : memref<1792x256xbf16, #tpu.memory_space<vmem>>, vector<256x256xbf16>
    %cst_28 = arith.constant dense<0.000000e+00> : vector<256x256xf32>
    %53 = tpu.matmul %51, %52, %cst_28 {dimension_numbers = #tpu.dot_dimension_numbers<[1], [0], [0], [1], [0, 0, 1, 1], [], []>} : vector<256x256xbf16>, vector<256x256xbf16>, vector<256x256xf32> -> vector<256x256xf32>
    %c48 = arith.constant 48 : index
    %c0_29 = arith.constant 0 : index
    %54 = vector.load %arg5[%c48, %c0_29] : memref<72x256xf32, #tpu.memory_space<vmem>>, vector<1x256xf32>
    %55 = vector.broadcast %54 : vector<1x256xf32> to vector<256x256xf32>
    %56 = arith.addf %53, %55 : vector<256x256xf32>
    %57 = vector.extract_strided_slice %56 {offsets = [0, 0], sizes = [256, 128], strides = [1, 1]} : vector<256x256xf32> to vector<256x128xf32>
    %58 = vector.extract_strided_slice %56 {offsets = [0, 128], sizes = [256, 128], strides = [1, 1]} : vector<256x256xf32> to vector<256x128xf32>
    %c0_30 = arith.constant 0 : index
    %c0_31 = arith.constant 0 : index
    %59 = vector.load %arg3[%c0_30, %c0_31] : memref<256x128xf32, #tpu.memory_space<vmem>>, vector<256x128xf32>
    %cst_32 = arith.constant 5.000000e-01 : f32
    %60 = vector.broadcast %cst_32 : f32 to vector<256x128xf32>
    %61 = arith.mulf %60, %58 : vector<256x128xf32>
    %62 = math.exp %61 : vector<256x128xf32>
    %63 = arith.mulf %59, %62 : vector<256x128xf32>
    %64 = arith.addf %57, %63 : vector<256x128xf32>
    %65 = arith.truncf %64 : vector<256x128xf32> to vector<256x128xbf16>
    %c1280 = arith.constant 1280 : index
    %c0_33 = arith.constant 0 : index
    %66 = vector.load %arg4[%c1280, %c0_33] : memref<1792x256xbf16, #tpu.memory_space<vmem>>, vector<128x256xbf16>
    %cst_34 = arith.constant dense<0.000000e+00> : vector<256x256xf32>
    %67 = tpu.matmul %65, %66, %cst_34 {dimension_numbers = #tpu.dot_dimension_numbers<[1], [0], [0], [1], [0, 0, 1, 1], [], []>} : vector<256x128xbf16>, vector<128x256xbf16>, vector<256x256xf32> -> vector<256x256xf32>
    %c0_35 = arith.constant 0 : index
    %c0_36 = arith.constant 0 : index
    %68 = vector.load %arg2[%c0_35, %c0_36] : memref<256x128xf32, #tpu.memory_space<vmem>>, vector<256x128xf32>
    %69 = arith.truncf %68 : vector<256x128xf32> to vector<256x128xbf16>
    %c1408 = arith.constant 1408 : index
    %c0_37 = arith.constant 0 : index
    %70 = vector.load %arg4[%c1408, %c0_37] : memref<1792x256xbf16, #tpu.memory_space<vmem>>, vector<128x256xbf16>
    %cst_38 = arith.constant dense<0.000000e+00> : vector<256x256xf32>
    %71 = tpu.matmul %69, %70, %cst_38 {dimension_numbers = #tpu.dot_dimension_numbers<[1], [0], [0], [1], [0, 0, 1, 1], [], []>} : vector<256x128xbf16>, vector<128x256xbf16>, vector<256x256xf32> -> vector<256x256xf32>
    %72 = arith.addf %67, %71 : vector<256x256xf32>
    %c56 = arith.constant 56 : index
    %c0_39 = arith.constant 0 : index
    %73 = vector.load %arg5[%c56, %c0_39] : memref<72x256xf32, #tpu.memory_space<vmem>>, vector<1x256xf32>
    %74 = vector.broadcast %73 : vector<1x256xf32> to vector<256x256xf32>
    %75 = arith.addf %72, %74 : vector<256x256xf32>
    %cst_40 = arith.constant 0.000000e+00 : f32
    %76 = vector.broadcast %cst_40 : f32 to vector<256x256xf32>
    %77 = arith.maximumf %75, %76 : vector<256x256xf32>
    %78 = arith.truncf %77 : vector<256x256xf32> to vector<256x256xbf16>
    %c1536 = arith.constant 1536 : index
    %c0_41 = arith.constant 0 : index
    %79 = vector.load %arg4[%c1536, %c0_41] : memref<1792x256xbf16, #tpu.memory_space<vmem>>, vector<256x128xbf16>
    %cst_42 = arith.constant dense<0.000000e+00> : vector<256x128xf32>
    %80 = tpu.matmul %78, %79, %cst_42 {dimension_numbers = #tpu.dot_dimension_numbers<[1], [0], [0], [1], [0, 0, 1, 1], [], []>} : vector<256x256xbf16>, vector<256x128xbf16>, vector<256x128xf32> -> vector<256x128xf32>
    %c64 = arith.constant 64 : index
    %c0_43 = arith.constant 0 : index
    %81 = vector.load %arg5[%c64, %c0_43] : memref<72x256xf32, #tpu.memory_space<vmem>>, vector<1x128xf32>
    %82 = vector.broadcast %81 : vector<1x128xf32> to vector<256x128xf32>
    %83 = arith.addf %80, %82 : vector<256x128xf32>
    %c0_44 = arith.constant 0 : index
    %c0_45 = arith.constant 0 : index
    %84 = vector.load %arg6[%c0_44, %c0_45] : memref<256x512xf32, #tpu.memory_space<vmem>>, vector<256x128xf32>
    tpu.vector_store %arg6[%c0_44, %c0_45], %83 {strides = array<i32>} : memref<256x512xf32, #tpu.memory_space<vmem>>, vector<256x128xf32>,
    %c0_46 = arith.constant 0 : index
    %c128_47 = arith.constant 128 : index
    %85 = vector.load %arg6[%c0_46, %c128_47] : memref<256x512xf32, #tpu.memory_space<vmem>>, vector<256x128xf32>
    tpu.vector_store %arg6[%c0_46, %c128_47], %57 {strides = array<i32>} : memref<256x512xf32, #tpu.memory_space<vmem>>, vector<256x128xf32>,
    %c0_48 = arith.constant 0 : index
    %c256_49 = arith.constant 256 : index
    %86 = vector.load %arg6[%c0_48, %c256_49] : memref<256x512xf32, #tpu.memory_space<vmem>>, vector<256x128xf32>
    tpu.vector_store %arg6[%c0_48, %c256_49], %58 {strides = array<i32>} : memref<256x512xf32, #tpu.memory_space<vmem>>, vector<256x128xf32>,
    %c0_50 = arith.constant 0 : index
    %c384_51 = arith.constant 384 : index
    %87 = vector.load %arg6[%c0_50, %c384_51] : memref<256x512xf32, #tpu.memory_space<vmem>>, vector<256x128xf32>
    tpu.vector_store %arg6[%c0_50, %c384_51], %30 {strides = array<i32>} : memref<256x512xf32, #tpu.memory_space<vmem>>, vector<256x128xf32>,
    return
  }
  func.func @transform_0(%arg0: i32) -> (i32, i32) {
    %c0_i32 = arith.constant 0 : i32
    %c0_i32_0 = arith.constant 0 : i32
    return %arg0, %c0_i32 : i32, i32
  }
  func.func @transform_1(%arg0: i32) -> (i32, i32) {
    %c0_i32 = arith.constant 0 : i32
    %c0_i32_0 = arith.constant 0 : i32
    return %arg0, %c0_i32 : i32, i32
  }
  func.func @transform_2(%arg0: i32) -> (i32, i32) {
    %c0_i32 = arith.constant 0 : i32
    %c0_i32_0 = arith.constant 0 : i32
    return %arg0, %c0_i32 : i32, i32
  }
  func.func @transform_3(%arg0: i32) -> (i32, i32) {
    %c0_i32 = arith.constant 0 : i32
    %c0_i32_0 = arith.constant 0 : i32
    %c0_i32_1 = arith.constant 0 : i32
    return %c0_i32, %c0_i32_0 : i32, i32
  }
  func.func @transform_4(%arg0: i32) -> (i32, i32) {
    %c0_i32 = arith.constant 0 : i32
    %c0_i32_0 = arith.constant 0 : i32
    %c0_i32_1 = arith.constant 0 : i32
    return %c0_i32, %c0_i32_0 : i32, i32
  }
  func.func @transform_5(%arg0: i32) -> (i32, i32) {
    %c0_i32 = arith.constant 0 : i32
    %c0_i32_0 = arith.constant 0 : i32
    return %arg0, %c0_i32 : i32, i32
  }
}

</mosaic_0001>

<llo_original>
// kernel: tpu_custom_call.1
$region0: #{tpu_custom_call.1}
  #allocation0 [shape = 'u32[]', space=smem, size = 0x4, offset = 0x4, fixed_abs, tag = 'smem constant byte address 0x4 - core index']
  #allocation1 [shape = 'u32[72,128]{1,0:T(1,128)}', space=vmem, size = 0x9000, scoped, tag = 'internal scratch']
  %s0 = inlined_call_operand.hbm [shape: f32[512,128], index: 0, kind: input, shape index: {}]
  %s1 = inlined_call_operand.hbm [shape: f32[512,128], index: 1, kind: input, shape index: {}]
  %s2 = inlined_call_operand.hbm [shape: f32[512,128], index: 2, kind: input, shape index: {}]
  %s3 = inlined_call_operand.hbm [shape: bf16[1792,256], index: 3, kind: input, shape index: {}]
  %s4 = inlined_call_operand.hbm [shape: f32[72,256], index: 4, kind: input, shape index: {}]
  %s5 = inlined_call_operand.hbm [shape: f32[512,512], index: 5, kind: output, shape index: {}]
  %s6 = sld [smem:[#allocation0]]
  $region73: #{tpu_custom_call.1} parent=0
    _
  %s8 = ssub.s32 1, %s6
  %s9 = scalar_select 0, %s8, %s6
  $region1: #{tpu_custom_call.1} parent=0
    #allocation2 [shape = 'u8[262144]{0}', space=vmem, size = 0x40000, scoped, tag = 'input window, operand 0']
    #allocation3 [shape = 's32[2]{0}', space=sflag, size = 0x8, scoped, tag = 'scoped memory for tpu_custom_call.1']
    #allocation4 [shape = 's32[2]{0}', space=sflag, size = 0x8, scoped, tag = 'scoped memory for tpu_custom_call.1']
    #allocation5 [shape = 'u8[262144]{0}', space=vmem, size = 0x40000, scoped, tag = 'input window, operand 1']
    #allocation6 [shape = 's32[2]{0}', space=sflag, size = 0x8, scoped, tag = 'scoped memory for tpu_custom_call.1']
    #allocation7 [shape = 'u8[262144]{0}', space=vmem, size = 0x40000, scoped, tag = 'input window, operand 2']
    #allocation8 [shape = 'u8[917504]{0}', space=vmem, size = 0xe0000, scoped, tag = 'input window, operand 3, single buffered']
    #allocation9 [shape = 's32[1]{0}', space=sflag, size = 0x4, scoped, tag = 'scoped memory for tpu_custom_call.1']
    #allocation10 [shape = 'u8[73728]{0}', space=vmem, size = 0x12000, scoped, tag = 'input window, operand 4, single buffered']
    #allocation11 [shape = 'u8[1048576]{0}', space=vmem, size = 0x100000, scoped, tag = 'output window, operand 0']
    %10 = vsyncpa [#allocation3], 0
    %s11 = scalar_lea.sflag [#allocation3], 1
    %12 = vsyncpa %s11, 0
    %13 = vsyncpa [#allocation6], 0
    %s14 = scalar_lea.sflag [#allocation6], 1
    %15 = vsyncpa %s14, 0
    %16 = vsyncpa [#allocation9], 0
    %17 = vsyncpa [#allocation4], 0
    %s18 = scalar_lea.sflag [#allocation4], 1
    %19 = vsyncpa %s18, 0
    loop: start=0, step=1, limit=4
    $region2: #{tpu_custom_call.1} parent=1 // loop_pre_header
      _
    $region3: #{tpu_custom_call.1} parent=1 // loop_header
      %s21 = sphi 0, %s25
      %p22 = scmp.ge.s32.totalorder %s21, 4
      %s31 = sphi 0, %s33
      %s34 = sphi 0, %s31
      %s35 = sphi 0, %s34
      %s51 = sphi 0, %s35
      %s57 = sphi 0, %s59
      %s60 = sphi 0, %s57
      %s61 = sphi 0, %s60
      %s77 = sphi 0, %s61
      %s83 = sphi 0, %s85
      %s86 = sphi 0, %s83
      %s87 = sphi 0, %s86
      %s103 = sphi 0, %s87
      %s107 = sphi 0, %s107
      %s109 = sphi 0, %s107
      %s110 = sphi 0, %s109
      %s124 = sphi 0, %s110
      %s128 = sphi 0, %s128
      %s130 = sphi 0, %s128
      %s131 = sphi 0, %s130
      %s145 = sphi 0, %s131
      %s151 = sphi 0, %s153
      %s154 = sphi 0, %s151
      %s155 = sphi 0, %s154
      %s171 = sphi 0, %s155
    $region4: #{tpu_custom_call.1} parent=1 // loop_header_branch
      %24 = sbr.rel (%p22) target = $region8
    $region5: #{tpu_custom_call.1} parent=1 // loop_body
      %s26 = ssub.s32 %s21, 1
      %s27 = ssub.s32 %s21, 2
      %s28 = sadd.s32 %s21, 1
      %s29 = ssub.s32 %s21, %s28
      %p30 = scmp.eq.s32.totalorder %s29, 0
      %s32 = sadd.s32 %s31, 1
      %s33 = scalar_select %p30, %s31, %s32
      %p36 = pneg %p30
      %p37 = scmp.eq.s32.totalorder %s21, 1
      %p38 = por %p36, %p37
      %p39 = scmp.ne.s32.totalorder %s31, %s34
      %p40 = scmp.eq.s32.totalorder %s21, 0
      %p41 = por %p39, %p40
      %p42 = scmp.ne.s32.totalorder %s31, %s34
      %p43 = scmp.eq.s32.totalorder %s26, 1
      %p44 = por %p42, %p43
      %p45 = scmp.ne.s32.totalorder %s34, %s35
      %p46 = scmp.eq.s32.totalorder %s26, 0
      %p47 = por %p45, %p46
      %p48 = scmp.ne.s32.totalorder %s34, %s35
      %p49 = scmp.eq.s32.totalorder %s27, 1
      %p50 = por %p48, %p49
      %p52 = scmp.ne.s32.totalorder %s35, %s51
      %p53 = scmp.eq.s32.totalorder %s27, 0
      %p54 = por %p52, %p53
      %s55 = ssub.s32 %s21, %s28
      %p56 = scmp.eq.s32.totalorder %s55, 0
      %s58 = sadd.s32 %s57, 1
      %s59 = scalar_select %p56, %s57, %s58
      %p62 = pneg %p56
      %p63 = scmp.eq.s32.totalorder %s21, 1
      %p64 = por %p62, %p63
      %p65 = scmp.ne.s32.totalorder %s57, %s60
      %p66 = scmp.eq.s32.totalorder %s21, 0
      %p67 = por %p65, %p66
      %p68 = scmp.ne.s32.totalorder %s57, %s60
      %p69 = scmp.eq.s32.totalorder %s26, 1
      %p70 = por %p68, %p69
      %p71 = scmp.ne.s32.totalorder %s60, %s61
      %p72 = scmp.eq.s32.totalorder %s26, 0
      %p73 = por %p71, %p72
      %p74 = scmp.ne.s32.totalorder %s60, %s61
      %p75 = scmp.eq.s32.totalorder %s27, 1
      %p76 = por %p74, %p75
      %p78 = scmp.ne.s32.totalorder %s61, %s77
      %p79 = scmp.eq.s32.totalorder %s27, 0
      %p80 = por %p78, %p79
      %s81 = ssub.s32 %s21, %s28
      %p82 = scmp.eq.s32.totalorder %s81, 0
      %s84 = sadd.s32 %s83, 1
      %s85 = scalar_select %p82, %s83, %s84
      %p88 = pneg %p82
      %p89 = scmp.eq.s32.totalorder %s21, 1
      %p90 = por %p88, %p89
      %p91 = scmp.ne.s32.totalorder %s83, %s86
      %p92 = scmp.eq.s32.totalorder %s21, 0
      %p93 = por %p91, %p92
      %p94 = scmp.ne.s32.totalorder %s83, %s86
      %p95 = scmp.eq.s32.totalorder %s26, 1
      %p96 = por %p94, %p95
      %p97 = scmp.ne.s32.totalorder %s86, %s87
      %p98 = scmp.eq.s32.totalorder %s26, 0
      %p99 = por %p97, %p98
      %p100 = scmp.ne.s32.totalorder %s86, %s87
      %p101 = scmp.eq.s32.totalorder %s27, 1
      %p102 = por %p100, %p101
      %p104 = scmp.ne.s32.totalorder %s87, %s103
      %p105 = scmp.eq.s32.totalorder %s27, 0
      %p106 = por %p104, %p105
      %s108 = sadd.s32 %s107, 1
      %p111 = scmp.eq.s32.totalorder %s21, 1
      %p112 = scmp.ne.s32.totalorder %s107, %s109
      %p113 = scmp.eq.s32.totalorder %s21, 0
      %p114 = por %p112, %p113
      %p115 = scmp.ne.s32.totalorder %s107, %s109
      %p116 = scmp.eq.s32.totalorder %s26, 1
      %p117 = por %p115, %p116
      %p118 = scmp.ne.s32.totalorder %s109, %s110
      %p119 = scmp.eq.s32.totalorder %s26, 0
      %p120 = por %p118, %p119
      %p121 = scmp.ne.s32.totalorder %s109, %s110
      %p122 = scmp.eq.s32.totalorder %s27, 1
      %p123 = por %p121, %p122
      %p125 = scmp.ne.s32.totalorder %s110, %s124
      %p126 = scmp.eq.s32.totalorder %s27, 0
      %p127 = por %p125, %p126
      %s129 = sadd.s32 %s128, 1
      %p132 = scmp.eq.s32.totalorder %s21, 1
      %p133 = scmp.ne.s32.totalorder %s128, %s130
      %p134 = scmp.eq.s32.totalorder %s21, 0
      %p135 = por %p133, %p134
      %p136 = scmp.ne.s32.totalorder %s128, %s130
      %p137 = scmp.eq.s32.totalorder %s26, 1
      %p138 = por %p136, %p137
      %p139 = scmp.ne.s32.totalorder %s130, %s131
      %p140 = scmp.eq.s32.totalorder %s26, 0
      %p141 = por %p139, %p140
      %p142 = scmp.ne.s32.totalorder %s130, %s131
      %p143 = scmp.eq.s32.totalorder %s27, 1
      %p144 = por %p142, %p143
      %p146 = scmp.ne.s32.totalorder %s131, %s145
      %p147 = scmp.eq.s32.totalorder %s27, 0
      %p148 = por %p146, %p147
      %s149 = ssub.s32 %s21, %s28
      %p150 = scmp.eq.s32.totalorder %s149, 0
      %s152 = sadd.s32 %s151, 1
      %s153 = scalar_select %p150, %s151, %s152
      %p156 = pneg %p150
      %p157 = scmp.eq.s32.totalorder %s21, 1
      %p158 = por %p156, %p157
      %p159 = scmp.ne.s32.totalorder %s151, %s154
      %p160 = scmp.eq.s32.totalorder %s21, 0
      %p161 = por %p159, %p160
      %p162 = scmp.ne.s32.totalorder %s151, %s154
      %p163 = scmp.eq.s32.totalorder %s26, 1
      %p164 = por %p162, %p163
      %p165 = scmp.ne.s32.totalorder %s154, %s155
      %p166 = scmp.eq.s32.totalorder %s26, 0
      %p167 = por %p165, %p166
      %p168 = scmp.ne.s32.totalorder %s154, %s155
      %p169 = scmp.eq.s32.totalorder %s27, 1
      %p170 = por %p168, %p169
      %p172 = scmp.ne.s32.totalorder %s155, %s171
      %p173 = scmp.eq.s32.totalorder %s27, 0
      %p174 = por %p172, %p173
      %p175 = scmp.le.s32.totalorder 1, %s21
      %p176 = scmp.lt.s32.totalorder %s21, 3
      %p177 = pnand %p175, %p176
      %p178 = pneg %p177
      // Predicated region
      $region9: #{tpu_custom_call.1} parent=5 // pred_check
        _
      $region10: #{tpu_custom_call.1} parent=5 // pred_check_branch
        %180 = sbr.rel (%p177) target = $region12
      $region11: #{tpu_custom_call.1} parent=5 // pred_region
        %s181 = ssub.s32 %s21, 1
        // Predicated region
        $region13: #{tpu_custom_call.1} parent=11 // pred_check
          %p182 = pneg %p120
        $region14: #{tpu_custom_call.1} parent=11 // pred_check_branch
          %184 = sbr.rel (%p182) target = $region16
        $region15: #{tpu_custom_call.1} parent=11 // pred_region
          %186 = vsyncadd [#allocation9], 0
          %s187 = sshll.u32 %s3, 4
          %s188 = int_to_ptr.hbm [resolvable:$true] %s187
          %s189 = sshll.u32 [#allocation8], 4
          %s190 = int_to_ptr.vmem [resolvable:$true] %s189
          %195 = dma.hbm_to_vmem [thread:$0]  %s188, 28672, %s190, [#allocation9], 128, 128, 8
        $region16: #{tpu_custom_call.1} parent=11 // pred_fallthru
          _
        // Predicated region
        $region17: #{tpu_custom_call.1} parent=11 // pred_check
          %p196 = pneg %p141
        $region18: #{tpu_custom_call.1} parent=11 // pred_check_branch
          %198 = sbr.rel (%p196) target = $region20
        $region19: #{tpu_custom_call.1} parent=11 // pred_region
          %200 = vsyncadd [#allocation9], 0
          %s201 = sshll.u32 %s4, 4
          %s202 = int_to_ptr.hbm [resolvable:$true] %s201
          %s203 = sshll.u32 [#allocation10], 4
          %s204 = int_to_ptr.vmem [resolvable:$true] %s203
          %209 = dma.hbm_to_vmem [thread:$0]  %s202, 2304, %s204, [#allocation9], 256, 256, 16
        $region20: #{tpu_custom_call.1} parent=11 // pred_fallthru
          _
      $region12: #{tpu_custom_call.1} parent=5 // pred_fallthru
        _
      %p210 = scmp.lt.s32.totalorder %s21, 2
      // Predicated region
      $region21: #{tpu_custom_call.1} parent=5 // pred_check
        %p211 = pneg %p210
      $region22: #{tpu_custom_call.1} parent=5 // pred_check_branch
        %213 = sbr.rel (%p211) target = $region24
      $region23: #{tpu_custom_call.1} parent=5 // pred_region
        // Predicated region
        $region25: #{tpu_custom_call.1} parent=23 // pred_check
          %p214 = pneg %p41
        $region26: #{tpu_custom_call.1} parent=23 // pred_check_branch
          %216 = sbr.rel (%p214) target = $region28
        $region27: #{tpu_custom_call.1} parent=23 // pred_region
          %s217 = sand.u32 %s31, 1
          %s218 = scalar_lea.sflag [#allocation3], %s217
          %s219 = sand.u32 %s31, 1
          %s220 = smul.addr %s219, 256
          %s221 = scalar_lea.vmem [#allocation2], %s220
          %s222 = smul.u32 32, %s21
          %224 = vsyncadd %s218, 0
          %s225 = smul.addr %s222, 8
          %s226 = scalar_lea.hbm %s0, %s225
          %s227 = sshll.u32 %s226, 4
          %s228 = int_to_ptr.hbm [resolvable:$true] %s227
          %s229 = sshll.u32 %s221, 4
          %s230 = int_to_ptr.vmem [resolvable:$true] %s229
          %235 = dma.hbm_to_vmem [thread:$0]  %s228, 4096, %s230, %s218, 128, 128, 8
        $region28: #{tpu_custom_call.1} parent=23 // pred_fallthru
          _
        // Predicated region
        $region29: #{tpu_custom_call.1} parent=23 // pred_check
          %p236 = pneg %p67
        $region30: #{tpu_custom_call.1} parent=23 // pred_check_branch
          %238 = sbr.rel (%p236) target = $region32
        $region31: #{tpu_custom_call.1} parent=23 // pred_region
          %s239 = sand.u32 %s21, 1
          %s240 = scalar_lea.sflag [#allocation6], %s239
          %s241 = sand.u32 %s57, 1
          %s242 = smul.addr %s241, 256
          %s243 = scalar_lea.vmem [#allocation5], %s242
          %s244 = smul.u32 32, %s21
          %246 = vsyncadd %s240, 0
          %s247 = smul.addr %s244, 8
          %s248 = scalar_lea.hbm %s1, %s247
          %s249 = sshll.u32 %s248, 4
          %s250 = int_to_ptr.hbm [resolvable:$true] %s249
          %s251 = sshll.u32 %s243, 4
          %s252 = int_to_ptr.vmem [resolvable:$true] %s251
          %257 = dma.hbm_to_vmem [thread:$0]  %s250, 4096, %s252, %s240, 128, 128, 8
        $region32: #{tpu_custom_call.1} parent=23 // pred_fallthru
          _
        // Predicated region
        $region33: #{tpu_custom_call.1} parent=23 // pred_check
          %p258 = pneg %p93
        $region34: #{tpu_custom_call.1} parent=23 // pred_check_branch
          %260 = sbr.rel (%p258) target = $region36
        $region35: #{tpu_custom_call.1} parent=23 // pred_region
          %s261 = sand.u32 %s21, 1
          %s262 = scalar_lea.sflag [#allocation6], %s261
          %s263 = sand.u32 %s83, 1
          %s264 = smul.addr %s263, 256
          %s265 = scalar_lea.vmem [#allocation7], %s264
          %s266 = smul.u32 32, %s21
          %268 = vsyncadd %s262, 0
          %s269 = smul.addr %s266, 8
          %s270 = scalar_lea.hbm %s2, %s269
          %s271 = sshll.u32 %s270, 4
          %s272 = int_to_ptr.hbm [resolvable:$true] %s271
          %s273 = sshll.u32 %s265, 4
          %s274 = int_to_ptr.vmem [resolvable:$true] %s273
          %279 = dma.hbm_to_vmem [thread:$0]  %s272, 4096, %s274, %s262, 128, 128, 8
        $region36: #{tpu_custom_call.1} parent=23 // pred_fallthru
          _
      $region24: #{tpu_custom_call.1} parent=5 // pred_fallthru
        _
      %p280 = scmp.le.s32.totalorder 1, %s21
      %p281 = scmp.lt.s32.totalorder %s21, 3
      %p282 = pnand %p280, %p281
      %p283 = pneg %p282
      // Predicated region
      $region37: #{tpu_custom_call.1} parent=5 // pred_check
        _
      $region38: #{tpu_custom_call.1} parent=5 // pred_check_branch
        %285 = sbr.rel (%p282) target = $region40
      $region39: #{tpu_custom_call.1} parent=5 // pred_region
        %s286 = ssub.s32 %s21, 1
        %s287 = sand.u32 %s34, 1
        %s288 = scalar_lea.sflag [#allocation3], %s287
        %s289 = sand.u32 %s34, 1
        %s290 = smul.addr %s289, 256
        %s291 = scalar_lea.vmem [#allocation2], %s290
        // Predicated region
        $region41: #{tpu_custom_call.1} parent=39 // pred_check
          %p292 = pneg %p47
        $region42: #{tpu_custom_call.1} parent=39 // pred_check_branch
          %294 = sbr.rel (%p292) target = $region44
        $region43: #{tpu_custom_call.1} parent=39 // pred_region
          %296 = dma.done %s288, 4096
        $region44: #{tpu_custom_call.1} parent=39 // pred_fallthru
          _
        %s297 = sand.u32 %s26, 1
        %s298 = scalar_lea.sflag [#allocation6], %s297
        %s299 = sand.u32 %s60, 1
        %s300 = smul.addr %s299, 256
        %s301 = scalar_lea.vmem [#allocation5], %s300
        // Predicated region
        $region45: #{tpu_custom_call.1} parent=39 // pred_check
          %p302 = pneg %p73
        $region46: #{tpu_custom_call.1} parent=39 // pred_check_branch
          %304 = sbr.rel (%p302) target = $region48
        $region47: #{tpu_custom_call.1} parent=39 // pred_region
          %306 = dma.done %s298, 4096
        $region48: #{tpu_custom_call.1} parent=39 // pred_fallthru
          _
        %s307 = sand.u32 %s26, 1
        %s308 = scalar_lea.sflag [#allocation6], %s307
        %s309 = sand.u32 %s86, 1
        %s310 = smul.addr %s309, 256
        %s311 = scalar_lea.vmem [#allocation7], %s310
        // Predicated region
        $region49: #{tpu_custom_call.1} parent=39 // pred_check
          %p312 = pneg %p99
        $region50: #{tpu_custom_call.1} parent=39 // pred_check_branch
          %314 = sbr.rel (%p312) target = $region52
        $region51: #{tpu_custom_call.1} parent=39 // pred_region
          %316 = dma.done %s308, 4096
        $region52: #{tpu_custom_call.1} parent=39 // pred_fallthru
          _
        // Predicated region
        $region53: #{tpu_custom_call.1} parent=39 // pred_check
          %p317 = pneg %p120
        $region54: #{tpu_custom_call.1} parent=39 // pred_check_branch
          %319 = sbr.rel (%p317) target = $region56
        $region55: #{tpu_custom_call.1} parent=39 // pred_region
          %321 = dma.done [#allocation9], 28672
        $region56: #{tpu_custom_call.1} parent=39 // pred_fallthru
          _
        // Predicated region
        $region57: #{tpu_custom_call.1} parent=39 // pred_check
          %p322 = pneg %p141
        $region58: #{tpu_custom_call.1} parent=39 // pred_check_branch
          %324 = sbr.rel (%p322) target = $region60
        $region59: #{tpu_custom_call.1} parent=39 // pred_region
          %326 = dma.done [#allocation9], 2304
        $region60: #{tpu_custom_call.1} parent=39 // pred_fallthru
          _
        %s327 = sand.u32 %s34, 1
        %s328 = scalar_lea.sflag [#allocation3], %s327
        %s329 = sand.u32 %s34, 1
        %s330 = smul.addr %s329, 256
        %s331 = scalar_lea.vmem [#allocation2], %s330
        %p332 = pneg %p47
        %p333 = pneg %p44
        %s334 = sand.u32 %s26, 1
        %s335 = scalar_lea.sflag [#allocation6], %s334
        %s336 = sand.u32 %s60, 1
        %s337 = smul.addr %s336, 256
        %s338 = scalar_lea.vmem [#allocation5], %s337
        %p339 = pneg %p73
        %p340 = pneg %p70
        %s341 = sand.u32 %s26, 1
        %s342 = scalar_lea.sflag [#allocation6], %s341
        %s343 = sand.u32 %s86, 1
        %s344 = smul.addr %s343, 256
        %s345 = scalar_lea.vmem [#allocation7], %s344
        %p346 = pneg %p99
        %p347 = pneg %p96
        %p348 = pneg %p120
        %p349 = pneg %p117
        %p350 = pneg %p141
        %p351 = pneg %p138
        %p352 = pneg %p167
        %p353 = pneg %p164
        %s354 = sand.u32 %s154, 1
        %s355 = scalar_lea.sflag [#allocation4], %s354
        %s356 = sand.u32 %s154, 1
        %s357 = smul.addr %s356, 1024
        %s358 = scalar_lea.vmem [#allocation11], %s357
        %s359 = smul.u32 32, %s26
        %s360 = smul.u32 32, %s26
        %s361 = smul.u32 32, %s26
        %s362 = smul.u32 32, %s26
        %v363 = vld [vmem:[%s291] sm:$0xff]
        %v364 = vld [vmem:[%s291 + $0x8] sm:$0xff]
        %v365 = vld [vmem:[%s291 + $0x10] sm:$0xff]
        %v366 = vld [vmem:[%s291 + $0x18] sm:$0xff]
        %v367 = vld [vmem:[%s291 + $0x20] sm:$0xff]
        %v368 = vld [vmem:[%s291 + $0x28] sm:$0xff]
        %v369 = vld [vmem:[%s291 + $0x30] sm:$0xff]
        %v370 = vld [vmem:[%s291 + $0x38] sm:$0xff]
        %v371 = vld [vmem:[%s291 + $0x40] sm:$0xff]
        %v372 = vld [vmem:[%s291 + $0x48] sm:$0xff]
        %v373 = vld [vmem:[%s291 + $0x50] sm:$0xff]
        %v374 = vld [vmem:[%s291 + $0x58] sm:$0xff]
        %v375 = vld [vmem:[%s291 + $0x60] sm:$0xff]
        %v376 = vld [vmem:[%s291 + $0x68] sm:$0xff]
        %v377 = vld [vmem:[%s291 + $0x70] sm:$0xff]
        %v378 = vld [vmem:[%s291 + $0x78] sm:$0xff]
        %v379 = vld [vmem:[%s291 + $0x80] sm:$0xff]
        %v380 = vld [vmem:[%s291 + $0x88] sm:$0xff]
        %v381 = vld [vmem:[%s291 + $0x90] sm:$0xff]
        %v382 = vld [vmem:[%s291 + $0x98] sm:$0xff]
        %v383 = vld [vmem:[%s291 + $0xa0] sm:$0xff]
        %v384 = vld [vmem:[%s291 + $0xa8] sm:$0xff]
        %v385 = vld [vmem:[%s291 + $0xb0] sm:$0xff]
        %v386 = vld [vmem:[%s291 + $0xb8] sm:$0xff]
        %v387 = vld [vmem:[%s291 + $0xc0] sm:$0xff]
        %v388 = vld [vmem:[%s291 + $0xc8] sm:$0xff]
        %v389 = vld [vmem:[%s291 + $0xd0] sm:$0xff]
        %v390 = vld [vmem:[%s291 + $0xd8] sm:$0xff]
        %v391 = vld [vmem:[%s291 + $0xe0] sm:$0xff]
        %v392 = vld [vmem:[%s291 + $0xe8] sm:$0xff]
        %v393 = vld [vmem:[%s291 + $0xf0] sm:$0xff]
        %v394 = vld [vmem:[%s291 + $0xf8] sm:$0xff]
        %v395 = vpack.c.bf16 %v364, %v363
        %v396 = vpack.c.bf16 %v366, %v365
        %v397 = vpack.c.bf16 %v368, %v367
        %v398 = vpack.c.bf16 %v370, %v369
        %v399 = vpack.c.bf16 %v372, %v371
        %v400 = vpack.c.bf16 %v374, %v373
        %v401 = vpack.c.bf16 %v376, %v375
        %v402 = vpack.c.bf16 %v378, %v377
        %v403 = vpack.c.bf16 %v380, %v379
        %v404 = vpack.c.bf16 %v382, %v381
        %v405 = vpack.c.bf16 %v384, %v383
        %v406 = vpack.c.bf16 %v386, %v385
        %v407 = vpack.c.bf16 %v388, %v387
        %v408 = vpack.c.bf16 %v390, %v389
        %v409 = vpack.c.bf16 %v392, %v391
        %v410 = vpack.c.bf16 %v394, %v393
        %v411 = vld [vmem:[#allocation8] sm:$0xf]
        %v412 = vld [vmem:[#allocation8 + $0x8] sm:$0xf]
        %v413 = vld [vmem:[#allocation8 + $0x10] sm:$0xf]
        %v414 = vld [vmem:[#allocation8 + $0x18] sm:$0xf]
        %v415 = vld [vmem:[#allocation8 + $0x20] sm:$0xf]
        %v416 = vld [vmem:[#allocation8 + $0x28] sm:$0xf]
        %v417 = vld [vmem:[#allocation8 + $0x30] sm:$0xf]
        %v418 = vld [vmem:[#allocation8 + $0x38] sm:$0xf]
        %v419 = vld [vmem:[#allocation8 + $0x40] sm:$0xf]
        %v420 = vld [vmem:[#allocation8 + $0x48] sm:$0xf]
        %v421 = vld [vmem:[#allocation8 + $0x50] sm:$0xf]
        %v422 = vld [vmem:[#allocation8 + $0x58] sm:$0xf]
        %v423 = vld [vmem:[#allocation8 + $0x60] sm:$0xf]
        %v424 = vld [vmem:[#allocation8 + $0x68] sm:$0xf]
        %v425 = vld [vmem:[#allocation8 + $0x70] sm:$0xf]
        %v426 = vld [vmem:[#allocation8 + $0x78] sm:$0xf]
        %v427 = vld [vmem:[#allocation10] ss:$0 sm:$0xff]
        %v444 = vunpack.c.l.b16 %v411
        %v445 = vunpack.c.l.b16 %v412
        %v446 = vunpack.c.l.b16 %v413
        %v447 = vunpack.c.l.b16 %v414
        %v448 = vunpack.c.l.b16 %v415
        %v449 = vunpack.c.l.b16 %v416
        %v450 = vunpack.c.l.b16 %v417
        %v451 = vunpack.c.l.b16 %v418
        %v452 = vunpack.c.l.b16 %v419
        %v453 = vunpack.c.l.b16 %v420
        %v454 = vunpack.c.l.b16 %v421
        %v455 = vunpack.c.l.b16 %v422
        %v456 = vunpack.c.l.b16 %v423
        %v457 = vunpack.c.l.b16 %v424
        %v458 = vunpack.c.l.b16 %v425
        %v459 = vunpack.c.l.b16 %v426
        %v460 = vpack.c.b16 %v445, %v444
        %v461 = vpack.c.b16 %v447, %v446
        %v462 = vpack.c.b16 %v449, %v448
        %v463 = vpack.c.b16 %v451, %v450
        %v464 = vpack.c.b16 %v453, %v452
        %v465 = vpack.c.b16 %v455, %v454
        %v466 = vpack.c.b16 %v457, %v456
        %v467 = vpack.c.b16 %v459, %v458
        %476 = vmatpush.bf16.msra.mxu0 %v467
        %477 = vmatpush.bf16.msra.mxu0 %v466
        %478 = vmatpush.bf16.msra.mxu0 %v465
        %479 = vmatpush.bf16.msra.mxu0 %v464
        %480 = vmatpush.bf16.msra.mxu0 %v463
        %481 = vmatpush.bf16.msra.mxu0 %v462
        %482 = vmatpush.bf16.msra.mxu0 %v461
        %483 = vmatpush.bf16.msra.mxu0 %v460
        %484 = vmatmul.bf16.gmra.mxu0 %v395
        %v485 = vpop.f32.mrf.mxu0
        %v486 = vadd.f32 %v427, %v485
        %v487 = vpop.f32.mrf.mxu0
        %v488 = vadd.f32 %v427, %v487
        %489 = vmatmul.bf16.gmra.mxu0 %v396
        %v490 = vpop.f32.mrf.mxu0
        %v491 = vadd.f32 %v427, %v490
        %v492 = vpop.f32.mrf.mxu0
        %v493 = vadd.f32 %v427, %v492
        %494 = vmatmul.bf16.gmra.mxu0 %v397
        %v495 = vpop.f32.mrf.mxu0
        %v496 = vadd.f32 %v427, %v495
        %v497 = vpop.f32.mrf.mxu0
        %v498 = vadd.f32 %v427, %v497
        %499 = vmatmul.bf16.gmra.mxu0 %v398
        %v500 = vpop.f32.mrf.mxu0
        %v501 = vadd.f32 %v427, %v500
        %v502 = vpop.f32.mrf.mxu0
        %v503 = vadd.f32 %v427, %v502
        %504 = vmatmul.bf16.gmra.mxu0 %v399
        %v505 = vpop.f32.mrf.mxu0
        %v506 = vadd.f32 %v427, %v505
        %v507 = vpop.f32.mrf.mxu0
        %v508 = vadd.f32 %v427, %v507
        %509 = vmatmul.bf16.gmra.mxu0 %v400
        %v510 = vpop.f32.mrf.mxu0
        %v511 = vadd.f32 %v427, %v510
        %v512 = vpop.f32.mrf.mxu0
        %v513 = vadd.f32 %v427, %v512
        %514 = vmatmul.bf16.gmra.mxu0 %v401
        %v515 = vpop.f32.mrf.mxu0
        %v516 = vadd.f32 %v427, %v515
        %v517 = vpop.f32.mrf.mxu0
        %v518 = vadd.f32 %v427, %v517
        %519 = vmatmul.bf16.gmra.mxu0 %v402
        %v520 = vpop.f32.mrf.mxu0
        %v521 = vadd.f32 %v427, %v520
        %v522 = vpop.f32.mrf.mxu0
        %v523 = vadd.f32 %v427, %v522
        %524 = vmatmul.bf16.gmra.mxu0 %v403
        %v525 = vpop.f32.mrf.mxu0
        %v526 = vadd.f32 %v427, %v525
        %v527 = vpop.f32.mrf.mxu0
        %v528 = vadd.f32 %v427, %v527
        %529 = vmatmul.bf16.gmra.mxu0 %v404
        %v530 = vpop.f32.mrf.mxu0
        %v531 = vadd.f32 %v427, %v530
        %v532 = vpop.f32.mrf.mxu0
        %v533 = vadd.f32 %v427, %v532
        %534 = vmatmul.bf16.gmra.mxu0 %v405
        %v535 = vpop.f32.mrf.mxu0
        %v536 = vadd.f32 %v427, %v535
        %v537 = vpop.f32.mrf.mxu0
        %v538 = vadd.f32 %v427, %v537
        %539 = vmatmul.bf16.gmra.mxu0 %v406
        %v540 = vpop.f32.mrf.mxu0
        %v541 = vadd.f32 %v427, %v540
        %v542 = vpop.f32.mrf.mxu0
        %v543 = vadd.f32 %v427, %v542
        %544 = vmatmul.bf16.gmra.mxu0 %v407
        %v545 = vpop.f32.mrf.mxu0
        %v546 = vadd.f32 %v427, %v545
        %v547 = vpop.f32.mrf.mxu0
        %v548 = vadd.f32 %v427, %v547
        %549 = vmatmul.bf16.gmra.mxu0 %v408
        %v550 = vpop.f32.mrf.mxu0
        %v551 = vadd.f32 %v427, %v550
        %v552 = vpop.f32.mrf.mxu0
        %v553 = vadd.f32 %v427, %v552
        %554 = vmatmul.bf16.gmra.mxu0 %v409
        %v555 = vpop.f32.mrf.mxu0
        %v556 = vadd.f32 %v427, %v555
        %v557 = vpop.f32.mrf.mxu0
        %v558 = vadd.f32 %v427, %v557
        %559 = vmatmul.bf16.gmra.mxu0 %v410
        %v560 = vpop.f32.mrf.mxu0
        %v561 = vadd.f32 %v427, %v560
        %v562 = vpop.f32.mrf.mxu0
        %v563 = vadd.f32 %v427, %v562
        %564 = vdwg.mxu0
        %v565 = vmax.f32 %v486, 0.0
        %v566 = vmax.f32 %v488, 0.0
        %v567 = vmax.f32 %v491, 0.0
        %v568 = vmax.f32 %v493, 0.0
        %v569 = vmax.f32 %v496, 0.0
        %v570 = vmax.f32 %v498, 0.0
        %v571 = vmax.f32 %v501, 0.0
        %v572 = vmax.f32 %v503, 0.0
        %v573 = vmax.f32 %v506, 0.0
        %v574 = vmax.f32 %v508, 0.0
        %v575 = vmax.f32 %v511, 0.0
        %v576 = vmax.f32 %v513, 0.0
        %v577 = vmax.f32 %v516, 0.0
        %v578 = vmax.f32 %v518, 0.0
        %v579 = vmax.f32 %v521, 0.0
        %v580 = vmax.f32 %v523, 0.0
        %v581 = vmax.f32 %v526, 0.0
        %v582 = vmax.f32 %v528, 0.0
        %v583 = vmax.f32 %v531, 0.0
        %v584 = vmax.f32 %v533, 0.0
        %v585 = vmax.f32 %v536, 0.0
        %v586 = vmax.f32 %v538, 0.0
        %v587 = vmax.f32 %v541, 0.0
        %v588 = vmax.f32 %v543, 0.0
        %v589 = vmax.f32 %v546, 0.0
        %v590 = vmax.f32 %v548, 0.0
        %v591 = vmax.f32 %v551, 0.0
        %v592 = vmax.f32 %v553, 0.0
        %v593 = vmax.f32 %v556, 0.0
        %v594 = vmax.f32 %v558, 0.0
        %v595 = vmax.f32 %v561, 0.0
        %v596 = vmax.f32 %v563, 0.0
        %v597 = vpack.c.bf16 %v566, %v565
        %v598 = vpack.c.bf16 %v568, %v567
        %v599 = vpack.c.bf16 %v570, %v569
        %v600 = vpack.c.bf16 %v572, %v571
        %v601 = vpack.c.bf16 %v574, %v573
        %v602 = vpack.c.bf16 %v576, %v575
        %v603 = vpack.c.bf16 %v578, %v577
        %v604 = vpack.c.bf16 %v580, %v579
        %v605 = vpack.c.bf16 %v582, %v581
        %v606 = vpack.c.bf16 %v584, %v583
        %v607 = vpack.c.bf16 %v586, %v585
        %v608 = vpack.c.bf16 %v588, %v587
        %v609 = vpack.c.bf16 %v590, %v589
        %v610 = vpack.c.bf16 %v592, %v591
        %v611 = vpack.c.bf16 %v594, %v593
        %v612 = vpack.c.bf16 %v596, %v595
        %v613 = vld [vmem:[#allocation8 + $0x80] sm:$0xf]
        %v614 = vld [vmem:[#allocation8 + $0x88] sm:$0xf]
        %v615 = vld [vmem:[#allocation8 + $0x90] sm:$0xf]
        %v616 = vld [vmem:[#allocation8 + $0x98] sm:$0xf]
        %v617 = vld [vmem:[#allocation8 + $0xa0] sm:$0xf]
        %v618 = vld [vmem:[#allocation8 + $0xa8] sm:$0xf]
        %v619 = vld [vmem:[#allocation8 + $0xb0] sm:$0xf]
        %v620 = vld [vmem:[#allocation8 + $0xb8] sm:$0xf]
        %v621 = vld [vmem:[#allocation8 + $0xc0] sm:$0xf]
        %v622 = vld [vmem:[#allocation8 + $0xc8] sm:$0xf]
        %v623 = vld [vmem:[#allocation8 + $0xd0] sm:$0xf]
        %v624 = vld [vmem:[#allocation8 + $0xd8] sm:$0xf]
        %v625 = vld [vmem:[#allocation8 + $0xe0] sm:$0xf]
        %v626 = vld [vmem:[#allocation8 + $0xe8] sm:$0xf]
        %v627 = vld [vmem:[#allocation8 + $0xf0] sm:$0xf]
        %v628 = vld [vmem:[#allocation8 + $0xf8] sm:$0xf]
        %v629 = vld [vmem:[#allocation10 + $0x10] ss:$0 sm:$0xff]
        %v646 = vunpack.c.l.b16 %v613
        %v647 = vunpack.c.l.b16 %v614
        %v648 = vunpack.c.l.b16 %v615
        %v649 = vunpack.c.l.b16 %v616
        %v650 = vunpack.c.l.b16 %v617
        %v651 = vunpack.c.l.b16 %v618
        %v652 = vunpack.c.l.b16 %v619
        %v653 = vunpack.c.l.b16 %v620
        %v654 = vunpack.c.l.b16 %v621
        %v655 = vunpack.c.l.b16 %v622
        %v656 = vunpack.c.l.b16 %v623
        %v657 = vunpack.c.l.b16 %v624
        %v658 = vunpack.c.l.b16 %v625
        %v659 = vunpack.c.l.b16 %v626
        %v660 = vunpack.c.l.b16 %v627
        %v661 = vunpack.c.l.b16 %v628
        %v662 = vpack.c.b16 %v647, %v646
        %v663 = vpack.c.b16 %v649, %v648
        %v664 = vpack.c.b16 %v651, %v650
        %v665 = vpack.c.b16 %v653, %v652
        %v666 = vpack.c.b16 %v655, %v654
        %v667 = vpack.c.b16 %v657, %v656
        %v668 = vpack.c.b16 %v659, %v658
        %v669 = vpack.c.b16 %v661, %v660
        %678 = vmatpush.bf16.msra.mxu0 %v669
        %679 = vmatpush.bf16.msra.mxu0 %v668
        %680 = vmatpush.bf16.msra.mxu0 %v667
        %681 = vmatpush.bf16.msra.mxu0 %v666
        %682 = vmatpush.bf16.msra.mxu0 %v665
        %683 = vmatpush.bf16.msra.mxu0 %v664
        %684 = vmatpush.bf16.msra.mxu0 %v663
        %685 = vmatpush.bf16.msra.mxu0 %v662
        %686 = vmatmul.bf16.gmra.mxu0 %v597
        %v687 = vpop.f32.mrf.mxu0
        %v688 = vadd.f32 %v629, %v687
        %v689 = vpop.f32.mrf.mxu0
        %v690 = vadd.f32 %v629, %v689
        %691 = vmatmul.bf16.gmra.mxu0 %v598
        %v692 = vpop.f32.mrf.mxu0
        %v693 = vadd.f32 %v629, %v692
        %v694 = vpop.f32.mrf.mxu0
        %v695 = vadd.f32 %v629, %v694
        %696 = vmatmul.bf16.gmra.mxu0 %v599
        %v697 = vpop.f32.mrf.mxu0
        %v698 = vadd.f32 %v629, %v697
        %v699 = vpop.f32.mrf.mxu0
        %v700 = vadd.f32 %v629, %v699
        %701 = vmatmul.bf16.gmra.mxu0 %v600
        %v702 = vpop.f32.mrf.mxu0
        %v703 = vadd.f32 %v629, %v702
        %v704 = vpop.f32.mrf.mxu0
        %v705 = vadd.f32 %v629, %v704
        %706 = vmatmul.bf16.gmra.mxu0 %v601
        %v707 = vpop.f32.mrf.mxu0
        %v708 = vadd.f32 %v629, %v707
        %v709 = vpop.f32.mrf.mxu0
        %v710 = vadd.f32 %v629, %v709
        %711 = vmatmul.bf16.gmra.mxu0 %v602
        %v712 = vpop.f32.mrf.mxu0
        %v713 = vadd.f32 %v629, %v712
        %v714 = vpop.f32.mrf.mxu0
        %v715 = vadd.f32 %v629, %v714
        %716 = vmatmul.bf16.gmra.mxu0 %v603
        %v717 = vpop.f32.mrf.mxu0
        %v718 = vadd.f32 %v629, %v717
        %v719 = vpop.f32.mrf.mxu0
        %v720 = vadd.f32 %v629, %v719
        %721 = vmatmul.bf16.gmra.mxu0 %v604
        %v722 = vpop.f32.mrf.mxu0
        %v723 = vadd.f32 %v629, %v722
        %v724 = vpop.f32.mrf.mxu0
        %v725 = vadd.f32 %v629, %v724
        %726 = vmatmul.bf16.gmra.mxu0 %v605
        %v727 = vpop.f32.mrf.mxu0
        %v728 = vadd.f32 %v629, %v727
        %v729 = vpop.f32.mrf.mxu0
        %v730 = vadd.f32 %v629, %v729
        %731 = vmatmul.bf16.gmra.mxu0 %v606
        %v732 = vpop.f32.mrf.mxu0
        %v733 = vadd.f32 %v629, %v732
        %v734 = vpop.f32.mrf.mxu0
        %v735 = vadd.f32 %v629, %v734
        %736 = vmatmul.bf16.gmra.mxu0 %v607
        %v737 = vpop.f32.mrf.mxu0
        %v738 = vadd.f32 %v629, %v737
        %v739 = vpop.f32.mrf.mxu0
        %v740 = vadd.f32 %v629, %v739
        %741 = vmatmul.bf16.gmra.mxu0 %v608
        %v742 = vpop.f32.mrf.mxu0
        %v743 = vadd.f32 %v629, %v742
        %v744 = vpop.f32.mrf.mxu0
        %v745 = vadd.f32 %v629, %v744
        %746 = vmatmul.bf16.gmra.mxu0 %v609
        %v747 = vpop.f32.mrf.mxu0
        %v748 = vadd.f32 %v629, %v747
        %v749 = vpop.f32.mrf.mxu0
        %v750 = vadd.f32 %v629, %v749
        %751 = vmatmul.bf16.gmra.mxu0 %v610
        %v752 = vpop.f32.mrf.mxu0
        %v753 = vadd.f32 %v629, %v752
        %v754 = vpop.f32.mrf.mxu0
        %v755 = vadd.f32 %v629, %v754
        %756 = vmatmul.bf16.gmra.mxu0 %v611
        %v757 = vpop.f32.mrf.mxu0
        %v758 = vadd.f32 %v629, %v757
        %v759 = vpop.f32.mrf.mxu0
        %v760 = vadd.f32 %v629, %v759
        %761 = vmatmul.bf16.gmra.mxu0 %v612
        %v762 = vpop.f32.mrf.mxu0
        %v763 = vadd.f32 %v629, %v762
        %v764 = vpop.f32.mrf.mxu0
        %v765 = vadd.f32 %v629, %v764
        %766 = vdwg.mxu0
        %v767 = vmax.f32 %v688, 0.0
        %v768 = vmax.f32 %v690, 0.0
        %v769 = vmax.f32 %v693, 0.0
        %v770 = vmax.f32 %v695, 0.0
        %v771 = vmax.f32 %v698, 0.0
        %v772 = vmax.f32 %v700, 0.0
        %v773 = vmax.f32 %v703, 0.0
        %v774 = vmax.f32 %v705, 0.0
        %v775 = vmax.f32 %v708, 0.0
        %v776 = vmax.f32 %v710, 0.0
        %v777 = vmax.f32 %v713, 0.0
        %v778 = vmax.f32 %v715, 0.0
        %v779 = vmax.f32 %v718, 0.0
        %v780 = vmax.f32 %v720, 0.0
        %v781 = vmax.f32 %v723, 0.0
        %v782 = vmax.f32 %v725, 0.0
        %v783 = vmax.f32 %v728, 0.0
        %v784 = vmax.f32 %v730, 0.0
        %v785 = vmax.f32 %v733, 0.0
        %v786 = vmax.f32 %v735, 0.0
        %v787 = vmax.f32 %v738, 0.0
        %v788 = vmax.f32 %v740, 0.0
        %v789 = vmax.f32 %v743, 0.0
        %v790 = vmax.f32 %v745, 0.0
        %v791 = vmax.f32 %v748, 0.0
        %v792 = vmax.f32 %v750, 0.0
        %v793 = vmax.f32 %v753, 0.0
        %v794 = vmax.f32 %v755, 0.0
        %v795 = vmax.f32 %v758, 0.0
        %v796 = vmax.f32 %v760, 0.0
        %v797 = vmax.f32 %v763, 0.0
        %v798 = vmax.f32 %v765, 0.0
        %v799 = vpack.c.bf16 %v768, %v767
        %v800 = vpack.c.bf16 %v770, %v769
        %v801 = vpack.c.bf16 %v772, %v771
        %v802 = vpack.c.bf16 %v774, %v773
        %v803 = vpack.c.bf16 %v776, %v775
        %v804 = vpack.c.bf16 %v778, %v777
        %v805 = vpack.c.bf16 %v780, %v779
        %v806 = vpack.c.bf16 %v782, %v781
        %v807 = vpack.c.bf16 %v784, %v783
        %v808 = vpack.c.bf16 %v786, %v785
        %v809 = vpack.c.bf16 %v788, %v787
        %v810 = vpack.c.bf16 %v790, %v789
        %v811 = vpack.c.bf16 %v792, %v791
        %v812 = vpack.c.bf16 %v794, %v793
        %v813 = vpack.c.bf16 %v796, %v795
        %v814 = vpack.c.bf16 %v798, %v797
        %v815 = vld [vmem:[#allocation8 + $0x100] sm:$0xf]
        %v816 = vld [vmem:[#allocation8 + $0x108] sm:$0xf]
        %v817 = vld [vmem:[#allocation8 + $0x110] sm:$0xf]
        %v818 = vld [vmem:[#allocation8 + $0x118] sm:$0xf]
        %v819 = vld [vmem:[#allocation8 + $0x120] sm:$0xf]
        %v820 = vld [vmem:[#allocation8 + $0x128] sm:$0xf]
        %v821 = vld [vmem:[#allocation8 + $0x130] sm:$0xf]
        %v822 = vld [vmem:[#allocation8 + $0x138] sm:$0xf]
        %v823 = vld [vmem:[#allocation8 + $0x140] sm:$0xf]
        %v824 = vld [vmem:[#allocation8 + $0x148] sm:$0xf]
        %v825 = vld [vmem:[#allocation8 + $0x150] sm:$0xf]
        %v826 = vld [vmem:[#allocation8 + $0x158] sm:$0xf]
        %v827 = vld [vmem:[#allocation8 + $0x160] sm:$0xf]
        %v828 = vld [vmem:[#allocation8 + $0x168] sm:$0xf]
        %v829 = vld [vmem:[#allocation8 + $0x170] sm:$0xf]
        %v830 = vld [vmem:[#allocation8 + $0x178] sm:$0xf]
        %v831 = vld [vmem:[#allocation10 + $0x20] ss:$0 sm:$0xff]
        %v848 = vunpack.c.l.b16 %v815
        %v849 = vunpack.c.l.b16 %v816
        %v850 = vunpack.c.l.b16 %v817
        %v851 = vunpack.c.l.b16 %v818
        %v852 = vunpack.c.l.b16 %v819
        %v853 = vunpack.c.l.b16 %v820
        %v854 = vunpack.c.l.b16 %v821
        %v855 = vunpack.c.l.b16 %v822
        %v856 = vunpack.c.l.b16 %v823
        %v857 = vunpack.c.l.b16 %v824
        %v858 = vunpack.c.l.b16 %v825
        %v859 = vunpack.c.l.b16 %v826
        %v860 = vunpack.c.l.b16 %v827
        %v861 = vunpack.c.l.b16 %v828
        %v862 = vunpack.c.l.b16 %v829
        %v863 = vunpack.c.l.b16 %v830
        %v864 = vpack.c.b16 %v849, %v848
        %v865 = vpack.c.b16 %v851, %v850
        %v866 = vpack.c.b16 %v853, %v852
        %v867 = vpack.c.b16 %v855, %v854
        %v868 = vpack.c.b16 %v857, %v856
        %v869 = vpack.c.b16 %v859, %v858
        %v870 = vpack.c.b16 %v861, %v860
        %v871 = vpack.c.b16 %v863, %v862
        %880 = vmatpush.bf16.msra.mxu0 %v871
        %881 = vmatpush.bf16.msra.mxu0 %v870
        %882 = vmatpush.bf16.msra.mxu0 %v869
        %883 = vmatpush.bf16.msra.mxu0 %v868
        %884 = vmatpush.bf16.msra.mxu0 %v867
        %885 = vmatpush.bf16.msra.mxu0 %v866
        %886 = vmatpush.bf16.msra.mxu0 %v865
        %887 = vmatpush.bf16.msra.mxu0 %v864
        %888 = vmatmul.bf16.gmra.mxu0 %v799
        %v889 = vpop.f32.mrf.mxu0
        %v890 = vadd.f32 %v831, %v889
        %v891 = vpop.f32.mrf.mxu0
        %v892 = vadd.f32 %v831, %v891
        %893 = vmatmul.bf16.gmra.mxu0 %v800
        %v894 = vpop.f32.mrf.mxu0
        %v895 = vadd.f32 %v831, %v894
        %v896 = vpop.f32.mrf.mxu0
        %v897 = vadd.f32 %v831, %v896
        %898 = vmatmul.bf16.gmra.mxu0 %v801
        %v899 = vpop.f32.mrf.mxu0
        %v900 = vadd.f32 %v831, %v899
        %v901 = vpop.f32.mrf.mxu0
        %v902 = vadd.f32 %v831, %v901
        %903 = vmatmul.bf16.gmra.mxu0 %v802
        %v904 = vpop.f32.mrf.mxu0
        %v905 = vadd.f32 %v831, %v904
        %v906 = vpop.f32.mrf.mxu0
        %v907 = vadd.f32 %v831, %v906
        %908 = vmatmul.bf16.gmra.mxu0 %v803
        %v909 = vpop.f32.mrf.mxu0
        %v910 = vadd.f32 %v831, %v909
        %v911 = vpop.f32.mrf.mxu0
        %v912 = vadd.f32 %v831, %v911
        %913 = vmatmul.bf16.gmra.mxu0 %v804
        %v914 = vpop.f32.mrf.mxu0
        %v915 = vadd.f32 %v831, %v914
        %v916 = vpop.f32.mrf.mxu0
        %v917 = vadd.f32 %v831, %v916
        %918 = vmatmul.bf16.gmra.mxu0 %v805
        %v919 = vpop.f32.mrf.mxu0
        %v920 = vadd.f32 %v831, %v919
        %v921 = vpop.f32.mrf.mxu0
        %v922 = vadd.f32 %v831, %v921
        %923 = vmatmul.bf16.gmra.mxu0 %v806
        %v924 = vpop.f32.mrf.mxu0
        %v925 = vadd.f32 %v831, %v924
        %v926 = vpop.f32.mrf.mxu0
        %v927 = vadd.f32 %v831, %v926
        %928 = vmatmul.bf16.gmra.mxu0 %v807
        %v929 = vpop.f32.mrf.mxu0
        %v930 = vadd.f32 %v831, %v929
        %v931 = vpop.f32.mrf.mxu0
        %v932 = vadd.f32 %v831, %v931
        %933 = vmatmul.bf16.gmra.mxu0 %v808
        %v934 = vpop.f32.mrf.mxu0
        %v935 = vadd.f32 %v831, %v934
        %v936 = vpop.f32.mrf.mxu0
        %v937 = vadd.f32 %v831, %v936
        %938 = vmatmul.bf16.gmra.mxu0 %v809
        %v939 = vpop.f32.mrf.mxu0
        %v940 = vadd.f32 %v831, %v939
        %v941 = vpop.f32.mrf.mxu0
        %v942 = vadd.f32 %v831, %v941
        %943 = vmatmul.bf16.gmra.mxu0 %v810
        %v944 = vpop.f32.mrf.mxu0
        %v945 = vadd.f32 %v831, %v944
        %v946 = vpop.f32.mrf.mxu0
        %v947 = vadd.f32 %v831, %v946
        %948 = vmatmul.bf16.gmra.mxu0 %v811
        %v949 = vpop.f32.mrf.mxu0
        %v950 = vadd.f32 %v831, %v949
        %v951 = vpop.f32.mrf.mxu0
        %v952 = vadd.f32 %v831, %v951
        %953 = vmatmul.bf16.gmra.mxu0 %v812
        %v954 = vpop.f32.mrf.mxu0
        %v955 = vadd.f32 %v831, %v954
        %v956 = vpop.f32.mrf.mxu0
        %v957 = vadd.f32 %v831, %v956
        %958 = vmatmul.bf16.gmra.mxu0 %v813
        %v959 = vpop.f32.mrf.mxu0
        %v960 = vadd.f32 %v831, %v959
        %v961 = vpop.f32.mrf.mxu0
        %v962 = vadd.f32 %v831, %v961
        %963 = vmatmul.bf16.gmra.mxu0 %v814
        %v964 = vpop.f32.mrf.mxu0
        %v965 = vadd.f32 %v831, %v964
        %v966 = vpop.f32.mrf.mxu0
        %v967 = vadd.f32 %v831, %v966
        %968 = vdwg.mxu0
        %v969 = vmax.f32 %v890, 0.0
        %v970 = vmax.f32 %v892, 0.0
        %v971 = vmax.f32 %v895, 0.0
        %v972 = vmax.f32 %v897, 0.0
        %v973 = vmax.f32 %v900, 0.0
        %v974 = vmax.f32 %v902, 0.0
        %v975 = vmax.f32 %v905, 0.0
        %v976 = vmax.f32 %v907, 0.0
        %v977 = vmax.f32 %v910, 0.0
        %v978 = vmax.f32 %v912, 0.0
        %v979 = vmax.f32 %v915, 0.0
        %v980 = vmax.f32 %v917, 0.0
        %v981 = vmax.f32 %v920, 0.0
        %v982 = vmax.f32 %v922, 0.0
        %v983 = vmax.f32 %v925, 0.0
        %v984 = vmax.f32 %v927, 0.0
        %v985 = vmax.f32 %v930, 0.0
        %v986 = vmax.f32 %v932, 0.0
        %v987 = vmax.f32 %v935, 0.0
        %v988 = vmax.f32 %v937, 0.0
        %v989 = vmax.f32 %v940, 0.0
        %v990 = vmax.f32 %v942, 0.0
        %v991 = vmax.f32 %v945, 0.0
        %v992 = vmax.f32 %v947, 0.0
        %v993 = vmax.f32 %v950, 0.0
        %v994 = vmax.f32 %v952, 0.0
        %v995 = vmax.f32 %v955, 0.0
        %v996 = vmax.f32 %v957, 0.0
        %v997 = vmax.f32 %v960, 0.0
        %v998 = vmax.f32 %v962, 0.0
        %v999 = vmax.f32 %v965, 0.0
        %v1000 = vmax.f32 %v967, 0.0
        %v1001 = vpack.c.bf16 %v970, %v969
        %v1002 = vpack.c.bf16 %v972, %v971
        %v1003 = vpack.c.bf16 %v974, %v973
        %v1004 = vpack.c.bf16 %v976, %v975
        %v1005 = vpack.c.bf16 %v978, %v977
        %v1006 = vpack.c.bf16 %v980, %v979
        %v1007 = vpack.c.bf16 %v982, %v981
        %v1008 = vpack.c.bf16 %v984, %v983
        %v1009 = vpack.c.bf16 %v986, %v985
        %v1010 = vpack.c.bf16 %v988, %v987
        %v1011 = vpack.c.bf16 %v990, %v989
        %v1012 = vpack.c.bf16 %v992, %v991
        %v1013 = vpack.c.bf16 %v994, %v993
        %v1014 = vpack.c.bf16 %v996, %v995
        %v1015 = vpack.c.bf16 %v998, %v997
        %v1016 = vpack.c.bf16 %v1000, %v999
        %v1017 = vld [vmem:[#allocation8 + $0x180] sm:$0xf]
        %v1018 = vld [vmem:[#allocation8 + $0x188] sm:$0xf]
        %v1019 = vld [vmem:[#allocation8 + $0x190] sm:$0xf]
        %v1020 = vld [vmem:[#allocation8 + $0x198] sm:$0xf]
        %v1021 = vld [vmem:[#allocation8 + $0x1a0] sm:$0xf]
        %v1022 = vld [vmem:[#allocation8 + $0x1a8] sm:$0xf]
        %v1023 = vld [vmem:[#allocation8 + $0x1b0] sm:$0xf]
        %v1024 = vld [vmem:[#allocation8 + $0x1b8] sm:$0xf]
        %v1025 = vld [vmem:[#allocation8 + $0x1c0] sm:$0xf]
        %v1026 = vld [vmem:[#allocation8 + $0x1c8] sm:$0xf]
        %v1027 = vld [vmem:[#allocation8 + $0x1d0] sm:$0xf]
        %v1028 = vld [vmem:[#allocation8 + $0x1d8] sm:$0xf]
        %v1029 = vld [vmem:[#allocation8 + $0x1e0] sm:$0xf]
        %v1030 = vld [vmem:[#allocation8 + $0x1e8] sm:$0xf]
        %v1031 = vld [vmem:[#allocation8 + $0x1f0] sm:$0xf]
        %v1032 = vld [vmem:[#allocation8 + $0x1f8] sm:$0xf]
        %v1033 = vld [vmem:[#allocation10 + $0x30] ss:$0 sm:$0xff]
        %v1050 = vunpack.c.l.b16 %v1017
        %v1051 = vunpack.c.l.b16 %v1018
        %v1052 = vunpack.c.l.b16 %v1019
        %v1053 = vunpack.c.l.b16 %v1020
        %v1054 = vunpack.c.l.b16 %v1021
        %v1055 = vunpack.c.l.b16 %v1022
        %v1056 = vunpack.c.l.b16 %v1023
        %v1057 = vunpack.c.l.b16 %v1024
        %v1058 = vunpack.c.l.b16 %v1025
        %v1059 = vunpack.c.l.b16 %v1026
        %v1060 = vunpack.c.l.b16 %v1027
        %v1061 = vunpack.c.l.b16 %v1028
        %v1062 = vunpack.c.l.b16 %v1029
        %v1063 = vunpack.c.l.b16 %v1030
        %v1064 = vunpack.c.l.b16 %v1031
        %v1065 = vunpack.c.l.b16 %v1032
        %v1066 = vpack.c.b16 %v1051, %v1050
        %v1067 = vpack.c.b16 %v1053, %v1052
        %v1068 = vpack.c.b16 %v1055, %v1054
        %v1069 = vpack.c.b16 %v1057, %v1056
        %v1070 = vpack.c.b16 %v1059, %v1058
        %v1071 = vpack.c.b16 %v1061, %v1060
        %v1072 = vpack.c.b16 %v1063, %v1062
        %v1073 = vpack.c.b16 %v1065, %v1064
        %1082 = vmatpush.bf16.msra.mxu0 %v1073
        %1083 = vmatpush.bf16.msra.mxu0 %v1072
        %1084 = vmatpush.bf16.msra.mxu0 %v1071
        %1085 = vmatpush.bf16.msra.mxu0 %v1070
        %1086 = vmatpush.bf16.msra.mxu0 %v1069
        %1087 = vmatpush.bf16.msra.mxu0 %v1068
        %1088 = vmatpush.bf16.msra.mxu0 %v1067
        %1089 = vmatpush.bf16.msra.mxu0 %v1066
        %1090 = vmatmul.bf16.gmra.mxu0 %v1001
        %v1091 = vpop.f32.mrf.mxu0
        %v1092 = vadd.f32 %v1033, %v1091
        %v1093 = vpop.f32.mrf.mxu0
        %v1094 = vadd.f32 %v1033, %v1093
        %1095 = vmatmul.bf16.gmra.mxu0 %v1002
        %v1096 = vpop.f32.mrf.mxu0
        %v1097 = vadd.f32 %v1033, %v1096
        %v1098 = vpop.f32.mrf.mxu0
        %v1099 = vadd.f32 %v1033, %v1098
        %1100 = vmatmul.bf16.gmra.mxu0 %v1003
        %v1101 = vpop.f32.mrf.mxu0
        %v1102 = vadd.f32 %v1033, %v1101
        %v1103 = vpop.f32.mrf.mxu0
        %v1104 = vadd.f32 %v1033, %v1103
        %1105 = vmatmul.bf16.gmra.mxu0 %v1004
        %v1106 = vpop.f32.mrf.mxu0
        %v1107 = vadd.f32 %v1033, %v1106
        %v1108 = vpop.f32.mrf.mxu0
        %v1109 = vadd.f32 %v1033, %v1108
        %1110 = vmatmul.bf16.gmra.mxu0 %v1005
        %v1111 = vpop.f32.mrf.mxu0
        %v1112 = vadd.f32 %v1033, %v1111
        %v1113 = vpop.f32.mrf.mxu0
        %v1114 = vadd.f32 %v1033, %v1113
        %1115 = vmatmul.bf16.gmra.mxu0 %v1006
        %v1116 = vpop.f32.mrf.mxu0
        %v1117 = vadd.f32 %v1033, %v1116
        %v1118 = vpop.f32.mrf.mxu0
        %v1119 = vadd.f32 %v1033, %v1118
        %1120 = vmatmul.bf16.gmra.mxu0 %v1007
        %v1121 = vpop.f32.mrf.mxu0
        %v1122 = vadd.f32 %v1033, %v1121
        %v1123 = vpop.f32.mrf.mxu0
        %v1124 = vadd.f32 %v1033, %v1123
        %1125 = vmatmul.bf16.gmra.mxu0 %v1008
        %v1126 = vpop.f32.mrf.mxu0
        %v1127 = vadd.f32 %v1033, %v1126
        %v1128 = vpop.f32.mrf.mxu0
        %v1129 = vadd.f32 %v1033, %v1128
        %1130 = vmatmul.bf16.gmra.mxu0 %v1009
        %v1131 = vpop.f32.mrf.mxu0
        %v1132 = vadd.f32 %v1033, %v1131
        %v1133 = vpop.f32.mrf.mxu0
        %v1134 = vadd.f32 %v1033, %v1133
        %1135 = vmatmul.bf16.gmra.mxu0 %v1010
        %v1136 = vpop.f32.mrf.mxu0
        %v1137 = vadd.f32 %v1033, %v1136
        %v1138 = vpop.f32.mrf.mxu0
        %v1139 = vadd.f32 %v1033, %v1138
        %1140 = vmatmul.bf16.gmra.mxu0 %v1011
        %v1141 = vpop.f32.mrf.mxu0
        %v1142 = vadd.f32 %v1033, %v1141
        %v1143 = vpop.f32.mrf.mxu0
        %v1144 = vadd.f32 %v1033, %v1143
        %1145 = vmatmul.bf16.gmra.mxu0 %v1012
        %v1146 = vpop.f32.mrf.mxu0
        %v1147 = vadd.f32 %v1033, %v1146
        %v1148 = vpop.f32.mrf.mxu0
        %v1149 = vadd.f32 %v1033, %v1148
        %1150 = vmatmul.bf16.gmra.mxu0 %v1013
        %v1151 = vpop.f32.mrf.mxu0
        %v1152 = vadd.f32 %v1033, %v1151
        %v1153 = vpop.f32.mrf.mxu0
        %v1154 = vadd.f32 %v1033, %v1153
        %1155 = vmatmul.bf16.gmra.mxu0 %v1014
        %v1156 = vpop.f32.mrf.mxu0
        %v1157 = vadd.f32 %v1033, %v1156
        %v1158 = vpop.f32.mrf.mxu0
        %v1159 = vadd.f32 %v1033, %v1158
        %1160 = vmatmul.bf16.gmra.mxu0 %v1015
        %v1161 = vpop.f32.mrf.mxu0
        %v1162 = vadd.f32 %v1033, %v1161
        %v1163 = vpop.f32.mrf.mxu0
        %v1164 = vadd.f32 %v1033, %v1163
        %1165 = vmatmul.bf16.gmra.mxu0 %v1016
        %v1166 = vpop.f32.mrf.mxu0
        %v1167 = vadd.f32 %v1033, %v1166
        %v1168 = vpop.f32.mrf.mxu0
        %v1169 = vadd.f32 %v1033, %v1168
        %1170 = vdwg.mxu0
        %v1171 = vld [vmem:[#allocation8 + $0x200] sm:$0xff]
        %v1172 = vld [vmem:[#allocation8 + $0x208] sm:$0xff]
        %v1173 = vld [vmem:[#allocation8 + $0x210] sm:$0xff]
        %v1174 = vld [vmem:[#allocation8 + $0x218] sm:$0xff]
        %v1175 = vld [vmem:[#allocation8 + $0x220] sm:$0xff]
        %v1176 = vld [vmem:[#allocation8 + $0x228] sm:$0xff]
        %v1177 = vld [vmem:[#allocation8 + $0x230] sm:$0xff]
        %v1178 = vld [vmem:[#allocation8 + $0x238] sm:$0xff]
        %v1179 = vld [vmem:[#allocation8 + $0x240] sm:$0xff]
        %v1180 = vld [vmem:[#allocation8 + $0x248] sm:$0xff]
        %v1181 = vld [vmem:[#allocation8 + $0x250] sm:$0xff]
        %v1182 = vld [vmem:[#allocation8 + $0x258] sm:$0xff]
        %v1183 = vld [vmem:[#allocation8 + $0x260] sm:$0xff]
        %v1184 = vld [vmem:[#allocation8 + $0x268] sm:$0xff]
        %v1185 = vld [vmem:[#allocation8 + $0x270] sm:$0xff]
        %v1186 = vld [vmem:[#allocation8 + $0x278] sm:$0xff]
        %v1187 = vpack.c.bf16 %v1094, %v1092
        %v1188 = vpack.c.bf16 %v1099, %v1097
        %v1189 = vpack.c.bf16 %v1104, %v1102
        %v1190 = vpack.c.bf16 %v1109, %v1107
        %v1191 = vpack.c.bf16 %v1114, %v1112
        %v1192 = vpack.c.bf16 %v1119, %v1117
        %v1193 = vpack.c.bf16 %v1124, %v1122
        %v1194 = vpack.c.bf16 %v1129, %v1127
        %v1195 = vpack.c.bf16 %v1134, %v1132
        %v1196 = vpack.c.bf16 %v1139, %v1137
        %v1197 = vpack.c.bf16 %v1144, %v1142
        %v1198 = vpack.c.bf16 %v1149, %v1147
        %v1199 = vpack.c.bf16 %v1154, %v1152
        %v1200 = vpack.c.bf16 %v1159, %v1157
        %v1201 = vpack.c.bf16 %v1164, %v1162
        %v1202 = vpack.c.bf16 %v1169, %v1167
        %v1203 = vld [vmem:[#allocation8 + $0x280] sm:$0xff]
        %v1204 = vld [vmem:[#allocation8 + $0x288] sm:$0xff]
        %v1205 = vld [vmem:[#allocation8 + $0x290] sm:$0xff]
        %v1206 = vld [vmem:[#allocation8 + $0x298] sm:$0xff]
        %v1207 = vld [vmem:[#allocation8 + $0x2a0] sm:$0xff]
        %v1208 = vld [vmem:[#allocation8 + $0x2a8] sm:$0xff]
        %v1209 = vld [vmem:[#allocation8 + $0x2b0] sm:$0xff]
        %v1210 = vld [vmem:[#allocation8 + $0x2b8] sm:$0xff]
        %v1211 = vld [vmem:[#allocation8 + $0x2c0] sm:$0xff]
        %v1212 = vld [vmem:[#allocation8 + $0x2c8] sm:$0xff]
        %v1213 = vld [vmem:[#allocation8 + $0x2d0] sm:$0xff]
        %v1214 = vld [vmem:[#allocation8 + $0x2d8] sm:$0xff]
        %v1215 = vld [vmem:[#allocation8 + $0x2e0] sm:$0xff]
        %v1216 = vld [vmem:[#allocation8 + $0x2e8] sm:$0xff]
        %v1217 = vld [vmem:[#allocation8 + $0x2f0] sm:$0xff]
        %v1218 = vld [vmem:[#allocation8 + $0x2f8] sm:$0xff]
        %v1235 = vunpack.c.l.b16 %v1203
        %v1236 = vunpack.c.h.b16 %v1203
        %v1237 = vunpack.c.l.b16 %v1204
        %v1238 = vunpack.c.h.b16 %v1204
        %v1239 = vunpack.c.l.b16 %v1205
        %v1240 = vunpack.c.h.b16 %v1205
        %v1241 = vunpack.c.l.b16 %v1206
        %v1242 = vunpack.c.h.b16 %v1206
        %v1243 = vunpack.c.l.b16 %v1207
        %v1244 = vunpack.c.h.b16 %v1207
        %v1245 = vunpack.c.l.b16 %v1208
        %v1246 = vunpack.c.h.b16 %v1208
        %v1247 = vunpack.c.l.b16 %v1209
        %v1248 = vunpack.c.h.b16 %v1209
        %v1249 = vunpack.c.l.b16 %v1210
        %v1250 = vunpack.c.h.b16 %v1210
        %v1251 = vunpack.c.l.b16 %v1211
        %v1252 = vunpack.c.h.b16 %v1211
        %v1253 = vunpack.c.l.b16 %v1212
        %v1254 = vunpack.c.h.b16 %v1212
        %v1255 = vunpack.c.l.b16 %v1213
        %v1256 = vunpack.c.h.b16 %v1213
        %v1257 = vunpack.c.l.b16 %v1214
        %v1258 = vunpack.c.h.b16 %v1214
        %v1259 = vunpack.c.l.b16 %v1215
        %v1260 = vunpack.c.h.b16 %v1215
        %v1261 = vunpack.c.l.b16 %v1216
        %v1262 = vunpack.c.h.b16 %v1216
        %v1263 = vunpack.c.l.b16 %v1217
        %v1264 = vunpack.c.h.b16 %v1217
        %v1265 = vunpack.c.l.b16 %v1218
        %v1266 = vunpack.c.h.b16 %v1218
        %v1267 = vpack.c.b16 %v1237, %v1235
        %v1268 = vpack.c.b16 %v1238, %v1236
        %v1269 = vpack.c.b16 %v1241, %v1239
        %v1270 = vpack.c.b16 %v1242, %v1240
        %v1271 = vpack.c.b16 %v1245, %v1243
        %v1272 = vpack.c.b16 %v1246, %v1244
        %v1273 = vpack.c.b16 %v1249, %v1247
        %v1274 = vpack.c.b16 %v1250, %v1248
        %v1275 = vpack.c.b16 %v1253, %v1251
        %v1276 = vpack.c.b16 %v1254, %v1252
        %v1277 = vpack.c.b16 %v1257, %v1255
        %v1278 = vpack.c.b16 %v1258, %v1256
        %v1279 = vpack.c.b16 %v1261, %v1259
        %v1280 = vpack.c.b16 %v1262, %v1260
        %v1281 = vpack.c.b16 %v1265, %v1263
        %v1282 = vpack.c.b16 %v1266, %v1264
        %1299 = vmatpush.bf16.msra.mxu0 %v1281
        %1300 = vmatpush.bf16.msra.mxu0 %v1279
        %1301 = vmatpush.bf16.msra.mxu0 %v1277
        %1302 = vmatpush.bf16.msra.mxu0 %v1275
        %1303 = vmatpush.bf16.msra.mxu0 %v1273
        %1304 = vmatpush.bf16.msra.mxu0 %v1271
        %1305 = vmatpush.bf16.msra.mxu0 %v1269
        %1306 = vmatpush.bf16.msra.mxu0 %v1267
        %1307 = vmatmul.bf16.gmra.mxu0 %v1187
        %v1308 = vpop.f32.mrf.mxu0
        %v1309 = vadd.f32 0.0, %v1308
        %v1310 = vpop.f32.mrf.mxu0
        %v1311 = vadd.f32 0.0, %v1310
        %1312 = vmatmul.bf16.gmra.mxu0 %v1188
        %v1313 = vpop.f32.mrf.mxu0
        %v1314 = vadd.f32 0.0, %v1313
        %v1315 = vpop.f32.mrf.mxu0
        %v1316 = vadd.f32 0.0, %v1315
        %1317 = vmatmul.bf16.gmra.mxu0 %v1189
        %v1318 = vpop.f32.mrf.mxu0
        %v1319 = vadd.f32 0.0, %v1318
        %v1320 = vpop.f32.mrf.mxu0
        %v1321 = vadd.f32 0.0, %v1320
        %1322 = vmatmul.bf16.gmra.mxu0 %v1190
        %v1323 = vpop.f32.mrf.mxu0
        %v1324 = vadd.f32 0.0, %v1323
        %v1325 = vpop.f32.mrf.mxu0
        %v1326 = vadd.f32 0.0, %v1325
        %1327 = vmatmul.bf16.gmra.mxu0 %v1191
        %v1328 = vpop.f32.mrf.mxu0
        %v1329 = vadd.f32 0.0, %v1328
        %v1330 = vpop.f32.mrf.mxu0
        %v1331 = vadd.f32 0.0, %v1330
        %1332 = vmatmul.bf16.gmra.mxu0 %v1192
        %v1333 = vpop.f32.mrf.mxu0
        %v1334 = vadd.f32 0.0, %v1333
        %v1335 = vpop.f32.mrf.mxu0
        %v1336 = vadd.f32 0.0, %v1335
        %1337 = vmatmul.bf16.gmra.mxu0 %v1193
        %v1338 = vpop.f32.mrf.mxu0
        %v1339 = vadd.f32 0.0, %v1338
        %v1340 = vpop.f32.mrf.mxu0
        %v1341 = vadd.f32 0.0, %v1340
        %1342 = vmatmul.bf16.gmra.mxu0 %v1194
        %v1343 = vpop.f32.mrf.mxu0
        %v1344 = vadd.f32 0.0, %v1343
        %v1345 = vpop.f32.mrf.mxu0
        %v1346 = vadd.f32 0.0, %v1345
        %1347 = vmatmul.bf16.gmra.mxu0 %v1195
        %v1348 = vpop.f32.mrf.mxu0
        %v1349 = vadd.f32 0.0, %v1348
        %v1350 = vpop.f32.mrf.mxu0
        %v1351 = vadd.f32 0.0, %v1350
        %1352 = vmatmul.bf16.gmra.mxu0 %v1196
        %v1353 = vpop.f32.mrf.mxu0
        %v1354 = vadd.f32 0.0, %v1353
        %v1355 = vpop.f32.mrf.mxu0
        %v1356 = vadd.f32 0.0, %v1355
        %1357 = vmatmul.bf16.gmra.mxu0 %v1197
        %v1358 = vpop.f32.mrf.mxu0
        %v1359 = vadd.f32 0.0, %v1358
        %v1360 = vpop.f32.mrf.mxu0
        %v1361 = vadd.f32 0.0, %v1360
        %1362 = vmatmul.bf16.gmra.mxu0 %v1198
        %v1363 = vpop.f32.mrf.mxu0
        %v1364 = vadd.f32 0.0, %v1363
        %v1365 = vpop.f32.mrf.mxu0
        %v1366 = vadd.f32 0.0, %v1365
        %1367 = vmatmul.bf16.gmra.mxu0 %v1199
        %v1368 = vpop.f32.mrf.mxu0
        %v1369 = vadd.f32 0.0, %v1368
        %v1370 = vpop.f32.mrf.mxu0
        %v1371 = vadd.f32 0.0, %v1370
        %1372 = vmatmul.bf16.gmra.mxu0 %v1200
        %v1373 = vpop.f32.mrf.mxu0
        %v1374 = vadd.f32 0.0, %v1373
        %v1375 = vpop.f32.mrf.mxu0
        %v1376 = vadd.f32 0.0, %v1375
        %1377 = vmatmul.bf16.gmra.mxu0 %v1201
        %v1378 = vpop.f32.mrf.mxu0
        %v1379 = vadd.f32 0.0, %v1378
        %v1380 = vpop.f32.mrf.mxu0
        %v1381 = vadd.f32 0.0, %v1380
        %1382 = vmatmul.bf16.gmra.mxu0 %v1202
        %v1383 = vpop.f32.mrf.mxu0
        %v1384 = vadd.f32 0.0, %v1383
        %v1385 = vpop.f32.mrf.mxu0
        %v1386 = vadd.f32 0.0, %v1385
        %1387 = vdwg.mxu0
        %1388 = vmatpush.bf16.msra.mxu0 %v1282
        %1389 = vmatpush.bf16.msra.mxu0 %v1280
        %1390 = vmatpush.bf16.msra.mxu0 %v1278
        %1391 = vmatpush.bf16.msra.mxu0 %v1276
        %1392 = vmatpush.bf16.msra.mxu0 %v1274
        %1393 = vmatpush.bf16.msra.mxu0 %v1272
        %1394 = vmatpush.bf16.msra.mxu0 %v1270
        %1395 = vmatpush.bf16.msra.mxu0 %v1268
        %1396 = vmatmul.bf16.gmra.mxu0 %v1187
        %v1397 = vpop.f32.mrf.mxu0
        %v1398 = vadd.f32 0.0, %v1397
        %v1399 = vpop.f32.mrf.mxu0
        %v1400 = vadd.f32 0.0, %v1399
        %1401 = vmatmul.bf16.gmra.mxu0 %v1188
        %v1402 = vpop.f32.mrf.mxu0
        %v1403 = vadd.f32 0.0, %v1402
        %v1404 = vpop.f32.mrf.mxu0
        %v1405 = vadd.f32 0.0, %v1404
        %1406 = vmatmul.bf16.gmra.mxu0 %v1189
        %v1407 = vpop.f32.mrf.mxu0
        %v1408 = vadd.f32 0.0, %v1407
        %v1409 = vpop.f32.mrf.mxu0
        %v1410 = vadd.f32 0.0, %v1409
        %1411 = vmatmul.bf16.gmra.mxu0 %v1190
        %v1412 = vpop.f32.mrf.mxu0
        %v1413 = vadd.f32 0.0, %v1412
        %v1414 = vpop.f32.mrf.mxu0
        %v1415 = vadd.f32 0.0, %v1414
        %1416 = vmatmul.bf16.gmra.mxu0 %v1191
        %v1417 = vpop.f32.mrf.mxu0
        %v1418 = vadd.f32 0.0, %v1417
        %v1419 = vpop.f32.mrf.mxu0
        %v1420 = vadd.f32 0.0, %v1419
        %1421 = vmatmul.bf16.gmra.mxu0 %v1192
        %v1422 = vpop.f32.mrf.mxu0
        %v1423 = vadd.f32 0.0, %v1422
        %v1424 = vpop.f32.mrf.mxu0
        %v1425 = vadd.f32 0.0, %v1424
        %1426 = vmatmul.bf16.gmra.mxu0 %v1193
        %v1427 = vpop.f32.mrf.mxu0
        %v1428 = vadd.f32 0.0, %v1427
        %v1429 = vpop.f32.mrf.mxu0
        %v1430 = vadd.f32 0.0, %v1429
        %1431 = vmatmul.bf16.gmra.mxu0 %v1194
        %v1432 = vpop.f32.mrf.mxu0
        %v1433 = vadd.f32 0.0, %v1432
        %v1434 = vpop.f32.mrf.mxu0
        %v1435 = vadd.f32 0.0, %v1434
        %1436 = vmatmul.bf16.gmra.mxu0 %v1195
        %v1437 = vpop.f32.mrf.mxu0
        %v1438 = vadd.f32 0.0, %v1437
        %v1439 = vpop.f32.mrf.mxu0
        %v1440 = vadd.f32 0.0, %v1439
        %1441 = vmatmul.bf16.gmra.mxu0 %v1196
        %v1442 = vpop.f32.mrf.mxu0
        %v1443 = vadd.f32 0.0, %v1442
        %v1444 = vpop.f32.mrf.mxu0
        %v1445 = vadd.f32 0.0, %v1444
        %1446 = vmatmul.bf16.gmra.mxu0 %v1197
        %v1447 = vpop.f32.mrf.mxu0
        %v1448 = vadd.f32 0.0, %v1447
        %v1449 = vpop.f32.mrf.mxu0
        %v1450 = vadd.f32 0.0, %v1449
        %1451 = vmatmul.bf16.gmra.mxu0 %v1198
        %v1452 = vpop.f32.mrf.mxu0
        %v1453 = vadd.f32 0.0, %v1452
        %v1454 = vpop.f32.mrf.mxu0
        %v1455 = vadd.f32 0.0, %v1454
        %1456 = vmatmul.bf16.gmra.mxu0 %v1199
        %v1457 = vpop.f32.mrf.mxu0
        %v1458 = vadd.f32 0.0, %v1457
        %v1459 = vpop.f32.mrf.mxu0
        %v1460 = vadd.f32 0.0, %v1459
        %1461 = vmatmul.bf16.gmra.mxu0 %v1200
        %v1462 = vpop.f32.mrf.mxu0
        %v1463 = vadd.f32 0.0, %v1462
        %v1464 = vpop.f32.mrf.mxu0
        %v1465 = vadd.f32 0.0, %v1464
        %1466 = vmatmul.bf16.gmra.mxu0 %v1201
        %v1467 = vpop.f32.mrf.mxu0
        %v1468 = vadd.f32 0.0, %v1467
        %v1469 = vpop.f32.mrf.mxu0
        %v1470 = vadd.f32 0.0, %v1469
        %1471 = vmatmul.bf16.gmra.mxu0 %v1202
        %v1472 = vpop.f32.mrf.mxu0
        %v1473 = vadd.f32 0.0, %v1472
        %v1474 = vpop.f32.mrf.mxu0
        %v1475 = vadd.f32 0.0, %v1474
        %1476 = vdwg.mxu0
        %v1493 = vunpack.c.l.b16 %v1171
        %v1494 = vunpack.c.h.b16 %v1171
        %v1495 = vunpack.c.l.b16 %v1172
        %v1496 = vunpack.c.h.b16 %v1172
        %v1497 = vunpack.c.l.b16 %v1173
        %v1498 = vunpack.c.h.b16 %v1173
        %v1499 = vunpack.c.l.b16 %v1174
        %v1500 = vunpack.c.h.b16 %v1174
        %v1501 = vunpack.c.l.b16 %v1175
        %v1502 = vunpack.c.h.b16 %v1175
        %v1503 = vunpack.c.l.b16 %v1176
        %v1504 = vunpack.c.h.b16 %v1176
        %v1505 = vunpack.c.l.b16 %v1177
        %v1506 = vunpack.c.h.b16 %v1177
        %v1507 = vunpack.c.l.b16 %v1178
        %v1508 = vunpack.c.h.b16 %v1178
        %v1509 = vunpack.c.l.b16 %v1179
        %v1510 = vunpack.c.h.b16 %v1179
        %v1511 = vunpack.c.l.b16 %v1180
        %v1512 = vunpack.c.h.b16 %v1180
        %v1513 = vunpack.c.l.b16 %v1181
        %v1514 = vunpack.c.h.b16 %v1181
        %v1515 = vunpack.c.l.b16 %v1182
        %v1516 = vunpack.c.h.b16 %v1182
        %v1517 = vunpack.c.l.b16 %v1183
        %v1518 = vunpack.c.h.b16 %v1183
        %v1519 = vunpack.c.l.b16 %v1184
        %v1520 = vunpack.c.h.b16 %v1184
        %v1521 = vunpack.c.l.b16 %v1185
        %v1522 = vunpack.c.h.b16 %v1185
        %v1523 = vunpack.c.l.b16 %v1186
        %v1524 = vunpack.c.h.b16 %v1186
        %v1525 = vpack.c.b16 %v1495, %v1493
        %v1526 = vpack.c.b16 %v1496, %v1494
        %v1527 = vpack.c.b16 %v1499, %v1497
        %v1528 = vpack.c.b16 %v1500, %v1498
        %v1529 = vpack.c.b16 %v1503, %v1501
        %v1530 = vpack.c.b16 %v1504, %v1502
        %v1531 = vpack.c.b16 %v1507, %v1505
        %v1532 = vpack.c.b16 %v1508, %v1506
        %v1533 = vpack.c.b16 %v1511, %v1509
        %v1534 = vpack.c.b16 %v1512, %v1510
        %v1535 = vpack.c.b16 %v1515, %v1513
        %v1536 = vpack.c.b16 %v1516, %v1514
        %v1537 = vpack.c.b16 %v1519, %v1517
        %v1538 = vpack.c.b16 %v1520, %v1518
        %v1539 = vpack.c.b16 %v1523, %v1521
        %v1540 = vpack.c.b16 %v1524, %v1522
        %1557 = vmatpush.bf16.msra.mxu0 %v1539
        %1558 = vmatpush.bf16.msra.mxu0 %v1537
        %1559 = vmatpush.bf16.msra.mxu0 %v1535
        %1560 = vmatpush.bf16.msra.mxu0 %v1533
        %1561 = vmatpush.bf16.msra.mxu0 %v1531
        %1562 = vmatpush.bf16.msra.mxu0 %v1529
        %1563 = vmatpush.bf16.msra.mxu0 %v1527
        %1564 = vmatpush.bf16.msra.mxu0 %v1525
        %1565 = vmatmul.bf16.gmra.mxu0 %v395
        %v1566 = vpop.f32.mrf.mxu0
        %v1567 = vadd.f32 %v1309, %v1566
        %v1568 = vpop.f32.mrf.mxu0
        %v1569 = vadd.f32 %v1311, %v1568
        %1570 = vmatmul.bf16.gmra.mxu0 %v396
        %v1571 = vpop.f32.mrf.mxu0
        %v1572 = vadd.f32 %v1314, %v1571
        %v1573 = vpop.f32.mrf.mxu0
        %v1574 = vadd.f32 %v1316, %v1573
        %1575 = vmatmul.bf16.gmra.mxu0 %v397
        %v1576 = vpop.f32.mrf.mxu0
        %v1577 = vadd.f32 %v1319, %v1576
        %v1578 = vpop.f32.mrf.mxu0
        %v1579 = vadd.f32 %v1321, %v1578
        %1580 = vmatmul.bf16.gmra.mxu0 %v398
        %v1581 = vpop.f32.mrf.mxu0
        %v1582 = vadd.f32 %v1324, %v1581
        %v1583 = vpop.f32.mrf.mxu0
        %v1584 = vadd.f32 %v1326, %v1583
        %1585 = vmatmul.bf16.gmra.mxu0 %v399
        %v1586 = vpop.f32.mrf.mxu0
        %v1587 = vadd.f32 %v1329, %v1586
        %v1588 = vpop.f32.mrf.mxu0
        %v1589 = vadd.f32 %v1331, %v1588
        %1590 = vmatmul.bf16.gmra.mxu0 %v400
        %v1591 = vpop.f32.mrf.mxu0
        %v1592 = vadd.f32 %v1334, %v1591
        %v1593 = vpop.f32.mrf.mxu0
        %v1594 = vadd.f32 %v1336, %v1593
        %1595 = vmatmul.bf16.gmra.mxu0 %v401
        %v1596 = vpop.f32.mrf.mxu0
        %v1597 = vadd.f32 %v1339, %v1596
        %v1598 = vpop.f32.mrf.mxu0
        %v1599 = vadd.f32 %v1341, %v1598
        %1600 = vmatmul.bf16.gmra.mxu0 %v402
        %v1601 = vpop.f32.mrf.mxu0
        %v1602 = vadd.f32 %v1344, %v1601
        %v1603 = vpop.f32.mrf.mxu0
        %v1604 = vadd.f32 %v1346, %v1603
        %1605 = vmatmul.bf16.gmra.mxu0 %v403
        %v1606 = vpop.f32.mrf.mxu0
        %v1607 = vadd.f32 %v1349, %v1606
        %v1608 = vpop.f32.mrf.mxu0
        %v1609 = vadd.f32 %v1351, %v1608
        %1610 = vmatmul.bf16.gmra.mxu0 %v404
        %v1611 = vpop.f32.mrf.mxu0
        %v1612 = vadd.f32 %v1354, %v1611
        %v1613 = vpop.f32.mrf.mxu0
        %v1614 = vadd.f32 %v1356, %v1613
        %1615 = vmatmul.bf16.gmra.mxu0 %v405
        %v1616 = vpop.f32.mrf.mxu0
        %v1617 = vadd.f32 %v1359, %v1616
        %v1618 = vpop.f32.mrf.mxu0
        %v1619 = vadd.f32 %v1361, %v1618
        %1620 = vmatmul.bf16.gmra.mxu0 %v406
        %v1621 = vpop.f32.mrf.mxu0
        %v1622 = vadd.f32 %v1364, %v1621
        %v1623 = vpop.f32.mrf.mxu0
        %v1624 = vadd.f32 %v1366, %v1623
        %1625 = vmatmul.bf16.gmra.mxu0 %v407
        %v1626 = vpop.f32.mrf.mxu0
        %v1627 = vadd.f32 %v1369, %v1626
        %v1628 = vpop.f32.mrf.mxu0
        %v1629 = vadd.f32 %v1371, %v1628
        %1630 = vmatmul.bf16.gmra.mxu0 %v408
        %v1631 = vpop.f32.mrf.mxu0
        %v1632 = vadd.f32 %v1374, %v1631
        %v1633 = vpop.f32.mrf.mxu0
        %v1634 = vadd.f32 %v1376, %v1633
        %1635 = vmatmul.bf16.gmra.mxu0 %v409
        %v1636 = vpop.f32.mrf.mxu0
        %v1637 = vadd.f32 %v1379, %v1636
        %v1638 = vpop.f32.mrf.mxu0
        %v1639 = vadd.f32 %v1381, %v1638
        %1640 = vmatmul.bf16.gmra.mxu0 %v410
        %v1641 = vpop.f32.mrf.mxu0
        %v1642 = vadd.f32 %v1384, %v1641
        %v1643 = vpop.f32.mrf.mxu0
        %v1644 = vadd.f32 %v1386, %v1643
        %1645 = vdwg.mxu0
        %1646 = vmatpush.bf16.msra.mxu0 %v1540
        %1647 = vmatpush.bf16.msra.mxu0 %v1538
        %1648 = vmatpush.bf16.msra.mxu0 %v1536
        %1649 = vmatpush.bf16.msra.mxu0 %v1534
        %1650 = vmatpush.bf16.msra.mxu0 %v1532
        %1651 = vmatpush.bf16.msra.mxu0 %v1530
        %1652 = vmatpush.bf16.msra.mxu0 %v1528
        %1653 = vmatpush.bf16.msra.mxu0 %v1526
        %1654 = vmatmul.bf16.gmra.mxu0 %v395
        %v1655 = vpop.f32.mrf.mxu0
        %v1656 = vadd.f32 %v1398, %v1655
        %v1657 = vpop.f32.mrf.mxu0
        %v1658 = vadd.f32 %v1400, %v1657
        %1659 = vmatmul.bf16.gmra.mxu0 %v396
        %v1660 = vpop.f32.mrf.mxu0
        %v1661 = vadd.f32 %v1403, %v1660
        %v1662 = vpop.f32.mrf.mxu0
        %v1663 = vadd.f32 %v1405, %v1662
        %1664 = vmatmul.bf16.gmra.mxu0 %v397
        %v1665 = vpop.f32.mrf.mxu0
        %v1666 = vadd.f32 %v1408, %v1665
        %v1667 = vpop.f32.mrf.mxu0
        %v1668 = vadd.f32 %v1410, %v1667
        %1669 = vmatmul.bf16.gmra.mxu0 %v398
        %v1670 = vpop.f32.mrf.mxu0
        %v1671 = vadd.f32 %v1413, %v1670
        %v1672 = vpop.f32.mrf.mxu0
        %v1673 = vadd.f32 %v1415, %v1672
        %1674 = vmatmul.bf16.gmra.mxu0 %v399
        %v1675 = vpop.f32.mrf.mxu0
        %v1676 = vadd.f32 %v1418, %v1675
        %v1677 = vpop.f32.mrf.mxu0
        %v1678 = vadd.f32 %v1420, %v1677
        %1679 = vmatmul.bf16.gmra.mxu0 %v400
        %v1680 = vpop.f32.mrf.mxu0
        %v1681 = vadd.f32 %v1423, %v1680
        %v1682 = vpop.f32.mrf.mxu0
        %v1683 = vadd.f32 %v1425, %v1682
        %1684 = vmatmul.bf16.gmra.mxu0 %v401
        %v1685 = vpop.f32.mrf.mxu0
        %v1686 = vadd.f32 %v1428, %v1685
        %v1687 = vpop.f32.mrf.mxu0
        %v1688 = vadd.f32 %v1430, %v1687
        %1689 = vmatmul.bf16.gmra.mxu0 %v402
        %v1690 = vpop.f32.mrf.mxu0
        %v1691 = vadd.f32 %v1433, %v1690
        %v1692 = vpop.f32.mrf.mxu0
        %v1693 = vadd.f32 %v1435, %v1692
        %1694 = vmatmul.bf16.gmra.mxu0 %v403
        %v1695 = vpop.f32.mrf.mxu0
        %v1696 = vadd.f32 %v1438, %v1695
        %v1697 = vpop.f32.mrf.mxu0
        %v1698 = vadd.f32 %v1440, %v1697
        %1699 = vmatmul.bf16.gmra.mxu0 %v404
        %v1700 = vpop.f32.mrf.mxu0
        %v1701 = vadd.f32 %v1443, %v1700
        %v1702 = vpop.f32.mrf.mxu0
        %v1703 = vadd.f32 %v1445, %v1702
        %1704 = vmatmul.bf16.gmra.mxu0 %v405
        %v1705 = vpop.f32.mrf.mxu0
        %v1706 = vadd.f32 %v1448, %v1705
        %v1707 = vpop.f32.mrf.mxu0
        %v1708 = vadd.f32 %v1450, %v1707
        %1709 = vmatmul.bf16.gmra.mxu0 %v406
        %v1710 = vpop.f32.mrf.mxu0
        %v1711 = vadd.f32 %v1453, %v1710
        %v1712 = vpop.f32.mrf.mxu0
        %v1713 = vadd.f32 %v1455, %v1712
        %1714 = vmatmul.bf16.gmra.mxu0 %v407
        %v1715 = vpop.f32.mrf.mxu0
        %v1716 = vadd.f32 %v1458, %v1715
        %v1717 = vpop.f32.mrf.mxu0
        %v1718 = vadd.f32 %v1460, %v1717
        %1719 = vmatmul.bf16.gmra.mxu0 %v408
        %v1720 = vpop.f32.mrf.mxu0
        %v1721 = vadd.f32 %v1463, %v1720
        %v1722 = vpop.f32.mrf.mxu0
        %v1723 = vadd.f32 %v1465, %v1722
        %1724 = vmatmul.bf16.gmra.mxu0 %v409
        %v1725 = vpop.f32.mrf.mxu0
        %v1726 = vadd.f32 %v1468, %v1725
        %v1727 = vpop.f32.mrf.mxu0
        %v1728 = vadd.f32 %v1470, %v1727
        %1729 = vmatmul.bf16.gmra.mxu0 %v410
        %v1730 = vpop.f32.mrf.mxu0
        %v1731 = vadd.f32 %v1473, %v1730
        %v1732 = vpop.f32.mrf.mxu0
        %v1733 = vadd.f32 %v1475, %v1732
        %1734 = vdwg.mxu0
        %s1735 = scalar_lea.vmem [#allocation10], 64
        %v1736 = vld [vmem:[%s1735] ss:$8 sm:$0x3]
        %v1738 = vperm.slane %v1736, 0
        %v1739 = vperm.slane %v1736, 1
        %v1742 = vadd.f32 %v1567, %v1738
        %v1743 = vadd.f32 %v1656, %v1739
        %v1744 = vadd.f32 %v1569, %v1738
        %v1745 = vadd.f32 %v1658, %v1739
        %v1746 = vadd.f32 %v1572, %v1738
        %v1747 = vadd.f32 %v1661, %v1739
        %v1748 = vadd.f32 %v1574, %v1738
        %v1749 = vadd.f32 %v1663, %v1739
        %v1750 = vadd.f32 %v1577, %v1738
        %v1751 = vadd.f32 %v1666, %v1739
        %v1752 = vadd.f32 %v1579, %v1738
        %v1753 = vadd.f32 %v1668, %v1739
        %v1754 = vadd.f32 %v1582, %v1738
        %v1755 = vadd.f32 %v1671, %v1739
        %v1756 = vadd.f32 %v1584, %v1738
        %v1757 = vadd.f32 %v1673, %v1739
        %v1758 = vadd.f32 %v1587, %v1738
        %v1759 = vadd.f32 %v1676, %v1739
        %v1760 = vadd.f32 %v1589, %v1738
        %v1761 = vadd.f32 %v1678, %v1739
        %v1762 = vadd.f32 %v1592, %v1738
        %v1763 = vadd.f32 %v1681, %v1739
        %v1764 = vadd.f32 %v1594, %v1738
        %v1765 = vadd.f32 %v1683, %v1739
        %v1766 = vadd.f32 %v1597, %v1738
        %v1767 = vadd.f32 %v1686, %v1739
        %v1768 = vadd.f32 %v1599, %v1738
        %v1769 = vadd.f32 %v1688, %v1739
        %v1770 = vadd.f32 %v1602, %v1738
        %v1771 = vadd.f32 %v1691, %v1739
        %v1772 = vadd.f32 %v1604, %v1738
        %v1773 = vadd.f32 %v1693, %v1739
        %v1774 = vadd.f32 %v1607, %v1738
        %v1775 = vadd.f32 %v1696, %v1739
        %v1776 = vadd.f32 %v1609, %v1738
        %v1777 = vadd.f32 %v1698, %v1739
        %v1778 = vadd.f32 %v1612, %v1738
        %v1779 = vadd.f32 %v1701, %v1739
        %v1780 = vadd.f32 %v1614, %v1738
        %v1781 = vadd.f32 %v1703, %v1739
        %v1782 = vadd.f32 %v1617, %v1738
        %v1783 = vadd.f32 %v1706, %v1739
        %v1784 = vadd.f32 %v1619, %v1738
        %v1785 = vadd.f32 %v1708, %v1739
        %v1786 = vadd.f32 %v1622, %v1738
        %v1787 = vadd.f32 %v1711, %v1739
        %v1788 = vadd.f32 %v1624, %v1738
        %v1789 = vadd.f32 %v1713, %v1739
        %v1790 = vadd.f32 %v1627, %v1738
        %v1791 = vadd.f32 %v1716, %v1739
        %v1792 = vadd.f32 %v1629, %v1738
        %v1793 = vadd.f32 %v1718, %v1739
        %v1794 = vadd.f32 %v1632, %v1738
        %v1795 = vadd.f32 %v1721, %v1739
        %v1796 = vadd.f32 %v1634, %v1738
        %v1797 = vadd.f32 %v1723, %v1739
        %v1798 = vadd.f32 %v1637, %v1738
        %v1799 = vadd.f32 %v1726, %v1739
        %v1800 = vadd.f32 %v1639, %v1738
        %v1801 = vadd.f32 %v1728, %v1739
        %v1802 = vadd.f32 %v1642, %v1738
        %v1803 = vadd.f32 %v1731, %v1739
        %v1804 = vadd.f32 %v1644, %v1738
        %v1805 = vadd.f32 %v1733, %v1739
        %v1806 = vmax.f32 %v1742, 0.0
        %v1807 = vmax.f32 %v1743, 0.0
        %v1808 = vmax.f32 %v1744, 0.0
        %v1809 = vmax.f32 %v1745, 0.0
        %v1810 = vmax.f32 %v1746, 0.0
        %v1811 = vmax.f32 %v1747, 0.0
        %v1812 = vmax.f32 %v1748, 0.0
        %v1813 = vmax.f32 %v1749, 0.0
        %v1814 = vmax.f32 %v1750, 0.0
        %v1815 = vmax.f32 %v1751, 0.0
        %v1816 = vmax.f32 %v1752, 0.0
        %v1817 = vmax.f32 %v1753, 0.0
        %v1818 = vmax.f32 %v1754, 0.0
        %v1819 = vmax.f32 %v1755, 0.0
        %v1820 = vmax.f32 %v1756, 0.0
        %v1821 = vmax.f32 %v1757, 0.0
        %v1822 = vmax.f32 %v1758, 0.0
        %v1823 = vmax.f32 %v1759, 0.0
        %v1824 = vmax.f32 %v1760, 0.0
        %v1825 = vmax.f32 %v1761, 0.0
        %v1826 = vmax.f32 %v1762, 0.0
        %v1827 = vmax.f32 %v1763, 0.0
        %v1828 = vmax.f32 %v1764, 0.0
        %v1829 = vmax.f32 %v1765, 0.0
        %v1830 = vmax.f32 %v1766, 0.0
        %v1831 = vmax.f32 %v1767, 0.0
        %v1832 = vmax.f32 %v1768, 0.0
        %v1833 = vmax.f32 %v1769, 0.0
        %v1834 = vmax.f32 %v1770, 0.0
        %v1835 = vmax.f32 %v1771, 0.0
        %v1836 = vmax.f32 %v1772, 0.0
        %v1837 = vmax.f32 %v1773, 0.0
        %v1838 = vmax.f32 %v1774, 0.0
        %v1839 = vmax.f32 %v1775, 0.0
        %v1840 = vmax.f32 %v1776, 0.0
        %v1841 = vmax.f32 %v1777, 0.0
        %v1842 = vmax.f32 %v1778, 0.0
        %v1843 = vmax.f32 %v1779, 0.0
        %v1844 = vmax.f32 %v1780, 0.0
        %v1845 = vmax.f32 %v1781, 0.0
        %v1846 = vmax.f32 %v1782, 0.0
        %v1847 = vmax.f32 %v1783, 0.0
        %v1848 = vmax.f32 %v1784, 0.0
        %v1849 = vmax.f32 %v1785, 0.0
        %v1850 = vmax.f32 %v1786, 0.0
        %v1851 = vmax.f32 %v1787, 0.0
        %v1852 = vmax.f32 %v1788, 0.0
        %v1853 = vmax.f32 %v1789, 0.0
        %v1854 = vmax.f32 %v1790, 0.0
        %v1855 = vmax.f32 %v1791, 0.0
        %v1856 = vmax.f32 %v1792, 0.0
        %v1857 = vmax.f32 %v1793, 0.0
        %v1858 = vmax.f32 %v1794, 0.0
        %v1859 = vmax.f32 %v1795, 0.0
        %v1860 = vmax.f32 %v1796, 0.0
        %v1861 = vmax.f32 %v1797, 0.0
        %v1862 = vmax.f32 %v1798, 0.0
        %v1863 = vmax.f32 %v1799, 0.0
        %v1864 = vmax.f32 %v1800, 0.0
        %v1865 = vmax.f32 %v1801, 0.0
        %v1866 = vmax.f32 %v1802, 0.0
        %v1867 = vmax.f32 %v1803, 0.0
        %v1868 = vmax.f32 %v1804, 0.0
        %v1869 = vmax.f32 %v1805, 0.0
        %v1870 = vpack.c.bf16 %v1808, %v1806
        %v1871 = vpack.c.bf16 %v1809, %v1807
        %v1872 = vpack.c.bf16 %v1812, %v1810
        %v1873 = vpack.c.bf16 %v1813, %v1811
        %v1874 = vpack.c.bf16 %v1816, %v1814
        %v1875 = vpack.c.bf16 %v1817, %v1815
        %v1876 = vpack.c.bf16 %v1820, %v1818
        %v1877 = vpack.c.bf16 %v1821, %v1819
        %v1878 = vpack.c.bf16 %v1824, %v1822
        %v1879 = vpack.c.bf16 %v1825, %v1823
        %v1880 = vpack.c.bf16 %v1828, %v1826
        %v1881 = vpack.c.bf16 %v1829, %v1827
        %v1882 = vpack.c.bf16 %v1832, %v1830
        %v1883 = vpack.c.bf16 %v1833, %v1831
        %v1884 = vpack.c.bf16 %v1836, %v1834
        %v1885 = vpack.c.bf16 %v1837, %v1835
        %v1886 = vpack.c.bf16 %v1840, %v1838
        %v1887 = vpack.c.bf16 %v1841, %v1839
        %v1888 = vpack.c.bf16 %v1844, %v1842
        %v1889 = vpack.c.bf16 %v1845, %v1843
        %v1890 = vpack.c.bf16 %v1848, %v1846
        %v1891 = vpack.c.bf16 %v1849, %v1847
        %v1892 = vpack.c.bf16 %v1852, %v1850
        %v1893 = vpack.c.bf16 %v1853, %v1851
        %v1894 = vpack.c.bf16 %v1856, %v1854
        %v1895 = vpack.c.bf16 %v1857, %v1855
        %v1896 = vpack.c.bf16 %v1860, %v1858
        %v1897 = vpack.c.bf16 %v1861, %v1859
        %v1898 = vpack.c.bf16 %v1864, %v1862
        %v1899 = vpack.c.bf16 %v1865, %v1863
        %v1900 = vpack.c.bf16 %v1868, %v1866
        %v1901 = vpack.c.bf16 %v1869, %v1867
        %v1902 = vld [vmem:[#allocation8 + $0x300] sm:$0xff]
        %v1903 = vld [vmem:[#allocation8 + $0x308] sm:$0xff]
        %v1904 = vld [vmem:[#allocation8 + $0x310] sm:$0xff]
        %v1905 = vld [vmem:[#allocation8 + $0x318] sm:$0xff]
        %v1906 = vld [vmem:[#allocation8 + $0x320] sm:$0xff]
        %v1907 = vld [vmem:[#allocation8 + $0x328] sm:$0xff]
        %v1908 = vld [vmem:[#allocation8 + $0x330] sm:$0xff]
        %v1909 = vld [vmem:[#allocation8 + $0x338] sm:$0xff]
        %v1910 = vld [vmem:[#allocation8 + $0x340] sm:$0xff]
        %v1911 = vld [vmem:[#allocation8 + $0x348] sm:$0xff]
        %v1912 = vld [vmem:[#allocation8 + $0x350] sm:$0xff]
        %v1913 = vld [vmem:[#allocation8 + $0x358] sm:$0xff]
        %v1914 = vld [vmem:[#allocation8 + $0x360] sm:$0xff]
        %v1915 = vld [vmem:[#allocation8 + $0x368] sm:$0xff]
        %v1916 = vld [vmem:[#allocation8 + $0x370] sm:$0xff]
        %v1917 = vld [vmem:[#allocation8 + $0x378] sm:$0xff]
        %v1918 = vld [vmem:[#allocation8 + $0x380] sm:$0xff]
        %v1919 = vld [vmem:[#allocation8 + $0x388] sm:$0xff]
        %v1920 = vld [vmem:[#allocation8 + $0x390] sm:$0xff]
        %v1921 = vld [vmem:[#allocation8 + $0x398] sm:$0xff]
        %v1922 = vld [vmem:[#allocation8 + $0x3a0] sm:$0xff]
        %v1923 = vld [vmem:[#allocation8 + $0x3a8] sm:$0xff]
        %v1924 = vld [vmem:[#allocation8 + $0x3b0] sm:$0xff]
        %v1925 = vld [vmem:[#allocation8 + $0x3b8] sm:$0xff]
        %v1926 = vld [vmem:[#allocation8 + $0x3c0] sm:$0xff]
        %v1927 = vld [vmem:[#allocation8 + $0x3c8] sm:$0xff]
        %v1928 = vld [vmem:[#allocation8 + $0x3d0] sm:$0xff]
        %v1929 = vld [vmem:[#allocation8 + $0x3d8] sm:$0xff]
        %v1930 = vld [vmem:[#allocation8 + $0x3e0] sm:$0xff]
        %v1931 = vld [vmem:[#allocation8 + $0x3e8] sm:$0xff]
        %v1932 = vld [vmem:[#allocation8 + $0x3f0] sm:$0xff]
        %v1933 = vld [vmem:[#allocation8 + $0x3f8] sm:$0xff]
        %s1934 = scalar_lea.vmem [#allocation10], 80
        %v1935 = vld [vmem:[%s1934] ss:$8 sm:$0x3]
        %v1937 = vperm.slane %v1935, 0
        %v1938 = vperm.slane %v1935, 1
        %v1973 = vunpack.c.l.b16 %v1902
        %v1974 = vunpack.c.h.b16 %v1902
        %v1975 = vunpack.c.l.b16 %v1903
        %v1976 = vunpack.c.h.b16 %v1903
        %v1977 = vunpack.c.l.b16 %v1904
        %v1978 = vunpack.c.h.b16 %v1904
        %v1979 = vunpack.c.l.b16 %v1905
        %v1980 = vunpack.c.h.b16 %v1905
        %v1981 = vunpack.c.l.b16 %v1906
        %v1982 = vunpack.c.h.b16 %v1906
        %v1983 = vunpack.c.l.b16 %v1907
        %v1984 = vunpack.c.h.b16 %v1907
        %v1985 = vunpack.c.l.b16 %v1908
        %v1986 = vunpack.c.h.b16 %v1908
        %v1987 = vunpack.c.l.b16 %v1909
        %v1988 = vunpack.c.h.b16 %v1909
        %v1989 = vunpack.c.l.b16 %v1910
        %v1990 = vunpack.c.h.b16 %v1910
        %v1991 = vunpack.c.l.b16 %v1911
        %v1992 = vunpack.c.h.b16 %v1911
        %v1993 = vunpack.c.l.b16 %v1912
        %v1994 = vunpack.c.h.b16 %v1912
        %v1995 = vunpack.c.l.b16 %v1913
        %v1996 = vunpack.c.h.b16 %v1913
        %v1997 = vunpack.c.l.b16 %v1914
        %v1998 = vunpack.c.h.b16 %v1914
        %v1999 = vunpack.c.l.b16 %v1915
        %v2000 = vunpack.c.h.b16 %v1915
        %v2001 = vunpack.c.l.b16 %v1916
        %v2002 = vunpack.c.h.b16 %v1916
        %v2003 = vunpack.c.l.b16 %v1917
        %v2004 = vunpack.c.h.b16 %v1917
        %v2005 = vunpack.c.l.b16 %v1918
        %v2006 = vunpack.c.h.b16 %v1918
        %v2007 = vunpack.c.l.b16 %v1919
        %v2008 = vunpack.c.h.b16 %v1919
        %v2009 = vunpack.c.l.b16 %v1920
        %v2010 = vunpack.c.h.b16 %v1920
        %v2011 = vunpack.c.l.b16 %v1921
        %v2012 = vunpack.c.h.b16 %v1921
        %v2013 = vunpack.c.l.b16 %v1922
        %v2014 = vunpack.c.h.b16 %v1922
        %v2015 = vunpack.c.l.b16 %v1923
        %v2016 = vunpack.c.h.b16 %v1923
        %v2017 = vunpack.c.l.b16 %v1924
        %v2018 = vunpack.c.h.b16 %v1924
        %v2019 = vunpack.c.l.b16 %v1925
        %v2020 = vunpack.c.h.b16 %v1925
        %v2021 = vunpack.c.l.b16 %v1926
        %v2022 = vunpack.c.h.b16 %v1926
        %v2023 = vunpack.c.l.b16 %v1927
        %v2024 = vunpack.c.h.b16 %v1927
        %v2025 = vunpack.c.l.b16 %v1928
        %v2026 = vunpack.c.h.b16 %v1928
        %v2027 = vunpack.c.l.b16 %v1929
        %v2028 = vunpack.c.h.b16 %v1929
        %v2029 = vunpack.c.l.b16 %v1930
        %v2030 = vunpack.c.h.b16 %v1930
        %v2031 = vunpack.c.l.b16 %v1931
        %v2032 = vunpack.c.h.b16 %v1931
        %v2033 = vunpack.c.l.b16 %v1932
        %v2034 = vunpack.c.h.b16 %v1932
        %v2035 = vunpack.c.l.b16 %v1933
        %v2036 = vunpack.c.h.b16 %v1933
        %v2037 = vpack.c.b16 %v1975, %v1973
        %v2038 = vpack.c.b16 %v1976, %v1974
        %v2039 = vpack.c.b16 %v1979, %v1977
        %v2040 = vpack.c.b16 %v1980, %v1978
        %v2041 = vpack.c.b16 %v1983, %v1981
        %v2042 = vpack.c.b16 %v1984, %v1982
        %v2043 = vpack.c.b16 %v1987, %v1985
        %v2044 = vpack.c.b16 %v1988, %v1986
        %v2045 = vpack.c.b16 %v1991, %v1989
        %v2046 = vpack.c.b16 %v1992, %v1990
        %v2047 = vpack.c.b16 %v1995, %v1993
        %v2048 = vpack.c.b16 %v1996, %v1994
        %v2049 = vpack.c.b16 %v1999, %v1997
        %v2050 = vpack.c.b16 %v2000, %v1998
        %v2051 = vpack.c.b16 %v2003, %v2001
        %v2052 = vpack.c.b16 %v2004, %v2002
        %v2053 = vpack.c.b16 %v2007, %v2005
        %v2054 = vpack.c.b16 %v2008, %v2006
        %v2055 = vpack.c.b16 %v2011, %v2009
        %v2056 = vpack.c.b16 %v2012, %v2010
        %v2057 = vpack.c.b16 %v2015, %v2013
        %v2058 = vpack.c.b16 %v2016, %v2014
        %v2059 = vpack.c.b16 %v2019, %v2017
        %v2060 = vpack.c.b16 %v2020, %v2018
        %v2061 = vpack.c.b16 %v2023, %v2021
        %v2062 = vpack.c.b16 %v2024, %v2022
        %v2063 = vpack.c.b16 %v2027, %v2025
        %v2064 = vpack.c.b16 %v2028, %v2026
        %v2065 = vpack.c.b16 %v2031, %v2029
        %v2066 = vpack.c.b16 %v2032, %v2030
        %v2067 = vpack.c.b16 %v2035, %v2033
        %v2068 = vpack.c.b16 %v2036, %v2034
        %2101 = vmatpush.bf16.msra.mxu0 %v2051
        %2102 = vmatpush.bf16.msra.mxu0 %v2049
        %2103 = vmatpush.bf16.msra.mxu0 %v2047
        %2104 = vmatpush.bf16.msra.mxu0 %v2045
        %2105 = vmatpush.bf16.msra.mxu0 %v2043
        %2106 = vmatpush.bf16.msra.mxu0 %v2041
        %2107 = vmatpush.bf16.msra.mxu0 %v2039
        %2108 = vmatpush.bf16.msra.mxu0 %v2037
        %2109 = vmatmul.bf16.gmra.mxu0 %v1870
        %v2110 = vpop.f32.mrf.mxu0
        %v2111 = vadd.f32 %v1937, %v2110
        %v2112 = vpop.f32.mrf.mxu0
        %v2113 = vadd.f32 %v1937, %v2112
        %2114 = vmatmul.bf16.gmra.mxu0 %v1872
        %v2115 = vpop.f32.mrf.mxu0
        %v2116 = vadd.f32 %v1937, %v2115
        %v2117 = vpop.f32.mrf.mxu0
        %v2118 = vadd.f32 %v1937, %v2117
        %2119 = vmatmul.bf16.gmra.mxu0 %v1874
        %v2120 = vpop.f32.mrf.mxu0
        %v2121 = vadd.f32 %v1937, %v2120
        %v2122 = vpop.f32.mrf.mxu0
        %v2123 = vadd.f32 %v1937, %v2122
        %2124 = vmatmul.bf16.gmra.mxu0 %v1876
        %v2125 = vpop.f32.mrf.mxu0
        %v2126 = vadd.f32 %v1937, %v2125
        %v2127 = vpop.f32.mrf.mxu0
        %v2128 = vadd.f32 %v1937, %v2127
        %2129 = vmatmul.bf16.gmra.mxu0 %v1878
        %v2130 = vpop.f32.mrf.mxu0
        %v2131 = vadd.f32 %v1937, %v2130
        %v2132 = vpop.f32.mrf.mxu0
        %v2133 = vadd.f32 %v1937, %v2132
        %2134 = vmatmul.bf16.gmra.mxu0 %v1880
        %v2135 = vpop.f32.mrf.mxu0
        %v2136 = vadd.f32 %v1937, %v2135
        %v2137 = vpop.f32.mrf.mxu0
        %v2138 = vadd.f32 %v1937, %v2137
        %2139 = vmatmul.bf16.gmra.mxu0 %v1882
        %v2140 = vpop.f32.mrf.mxu0
        %v2141 = vadd.f32 %v1937, %v2140
        %v2142 = vpop.f32.mrf.mxu0
        %v2143 = vadd.f32 %v1937, %v2142
        %2144 = vmatmul.bf16.gmra.mxu0 %v1884
        %v2145 = vpop.f32.mrf.mxu0
        %v2146 = vadd.f32 %v1937, %v2145
        %v2147 = vpop.f32.mrf.mxu0
        %v2148 = vadd.f32 %v1937, %v2147
        %2149 = vmatmul.bf16.gmra.mxu0 %v1886
        %v2150 = vpop.f32.mrf.mxu0
        %v2151 = vadd.f32 %v1937, %v2150
        %v2152 = vpop.f32.mrf.mxu0
        %v2153 = vadd.f32 %v1937, %v2152
        %2154 = vmatmul.bf16.gmra.mxu0 %v1888
        %v2155 = vpop.f32.mrf.mxu0
        %v2156 = vadd.f32 %v1937, %v2155
        %v2157 = vpop.f32.mrf.mxu0
        %v2158 = vadd.f32 %v1937, %v2157
        %2159 = vmatmul.bf16.gmra.mxu0 %v1890
        %v2160 = vpop.f32.mrf.mxu0
        %v2161 = vadd.f32 %v1937, %v2160
        %v2162 = vpop.f32.mrf.mxu0
        %v2163 = vadd.f32 %v1937, %v2162
        %2164 = vmatmul.bf16.gmra.mxu0 %v1892
        %v2165 = vpop.f32.mrf.mxu0
        %v2166 = vadd.f32 %v1937, %v2165
        %v2167 = vpop.f32.mrf.mxu0
        %v2168 = vadd.f32 %v1937, %v2167
        %2169 = vmatmul.bf16.gmra.mxu0 %v1894
        %v2170 = vpop.f32.mrf.mxu0
        %v2171 = vadd.f32 %v1937, %v2170
        %v2172 = vpop.f32.mrf.mxu0
        %v2173 = vadd.f32 %v1937, %v2172
        %2174 = vmatmul.bf16.gmra.mxu0 %v1896
        %v2175 = vpop.f32.mrf.mxu0
        %v2176 = vadd.f32 %v1937, %v2175
        %v2177 = vpop.f32.mrf.mxu0
        %v2178 = vadd.f32 %v1937, %v2177
        %2179 = vmatmul.bf16.gmra.mxu0 %v1898
        %v2180 = vpop.f32.mrf.mxu0
        %v2181 = vadd.f32 %v1937, %v2180
        %v2182 = vpop.f32.mrf.mxu0
        %v2183 = vadd.f32 %v1937, %v2182
        %2184 = vmatmul.bf16.gmra.mxu0 %v1900
        %v2185 = vpop.f32.mrf.mxu0
        %v2186 = vadd.f32 %v1937, %v2185
        %v2187 = vpop.f32.mrf.mxu0
        %v2188 = vadd.f32 %v1937, %v2187
        %2189 = vdwg.mxu0
        %2190 = vmatpush.bf16.msra.mxu0 %v2067
        %2191 = vmatpush.bf16.msra.mxu0 %v2065
        %2192 = vmatpush.bf16.msra.mxu0 %v2063
        %2193 = vmatpush.bf16.msra.mxu0 %v2061
        %2194 = vmatpush.bf16.msra.mxu0 %v2059
        %2195 = vmatpush.bf16.msra.mxu0 %v2057
        %2196 = vmatpush.bf16.msra.mxu0 %v2055
        %2197 = vmatpush.bf16.msra.mxu0 %v2053
        %2198 = vmatmul.bf16.gmra.mxu0 %v1871
        %v2199 = vpop.f32.mrf.mxu0
        %v2200 = vadd.f32 %v2111, %v2199
        %v2201 = vpop.f32.mrf.mxu0
        %v2202 = vadd.f32 %v2113, %v2201
        %2203 = vmatmul.bf16.gmra.mxu0 %v1873
        %v2204 = vpop.f32.mrf.mxu0
        %v2205 = vadd.f32 %v2116, %v2204
        %v2206 = vpop.f32.mrf.mxu0
        %v2207 = vadd.f32 %v2118, %v2206
        %2208 = vmatmul.bf16.gmra.mxu0 %v1875
        %v2209 = vpop.f32.mrf.mxu0
        %v2210 = vadd.f32 %v2121, %v2209
        %v2211 = vpop.f32.mrf.mxu0
        %v2212 = vadd.f32 %v2123, %v2211
        %2213 = vmatmul.bf16.gmra.mxu0 %v1877
        %v2214 = vpop.f32.mrf.mxu0
        %v2215 = vadd.f32 %v2126, %v2214
        %v2216 = vpop.f32.mrf.mxu0
        %v2217 = vadd.f32 %v2128, %v2216
        %2218 = vmatmul.bf16.gmra.mxu0 %v1879
        %v2219 = vpop.f32.mrf.mxu0
        %v2220 = vadd.f32 %v2131, %v2219
        %v2221 = vpop.f32.mrf.mxu0
        %v2222 = vadd.f32 %v2133, %v2221
        %2223 = vmatmul.bf16.gmra.mxu0 %v1881
        %v2224 = vpop.f32.mrf.mxu0
        %v2225 = vadd.f32 %v2136, %v2224
        %v2226 = vpop.f32.mrf.mxu0
        %v2227 = vadd.f32 %v2138, %v2226
        %2228 = vmatmul.bf16.gmra.mxu0 %v1883
        %v2229 = vpop.f32.mrf.mxu0
        %v2230 = vadd.f32 %v2141, %v2229
        %v2231 = vpop.f32.mrf.mxu0
        %v2232 = vadd.f32 %v2143, %v2231
        %2233 = vmatmul.bf16.gmra.mxu0 %v1885
        %v2234 = vpop.f32.mrf.mxu0
        %v2235 = vadd.f32 %v2146, %v2234
        %v2236 = vpop.f32.mrf.mxu0
        %v2237 = vadd.f32 %v2148, %v2236
        %2238 = vmatmul.bf16.gmra.mxu0 %v1887
        %v2239 = vpop.f32.mrf.mxu0
        %v2240 = vadd.f32 %v2151, %v2239
        %v2241 = vpop.f32.mrf.mxu0
        %v2242 = vadd.f32 %v2153, %v2241
        %2243 = vmatmul.bf16.gmra.mxu0 %v1889
        %v2244 = vpop.f32.mrf.mxu0
        %v2245 = vadd.f32 %v2156, %v2244
        %v2246 = vpop.f32.mrf.mxu0
        %v2247 = vadd.f32 %v2158, %v2246
        %2248 = vmatmul.bf16.gmra.mxu0 %v1891
        %v2249 = vpop.f32.mrf.mxu0
        %v2250 = vadd.f32 %v2161, %v2249
        %v2251 = vpop.f32.mrf.mxu0
        %v2252 = vadd.f32 %v2163, %v2251
        %2253 = vmatmul.bf16.gmra.mxu0 %v1893
        %v2254 = vpop.f32.mrf.mxu0
        %v2255 = vadd.f32 %v2166, %v2254
        %v2256 = vpop.f32.mrf.mxu0
        %v2257 = vadd.f32 %v2168, %v2256
        %2258 = vmatmul.bf16.gmra.mxu0 %v1895
        %v2259 = vpop.f32.mrf.mxu0
        %v2260 = vadd.f32 %v2171, %v2259
        %v2261 = vpop.f32.mrf.mxu0
        %v2262 = vadd.f32 %v2173, %v2261
        %2263 = vmatmul.bf16.gmra.mxu0 %v1897
        %v2264 = vpop.f32.mrf.mxu0
        %v2265 = vadd.f32 %v2176, %v2264
        %v2266 = vpop.f32.mrf.mxu0
        %v2267 = vadd.f32 %v2178, %v2266
        %2268 = vmatmul.bf16.gmra.mxu0 %v1899
        %v2269 = vpop.f32.mrf.mxu0
        %v2270 = vadd.f32 %v2181, %v2269
        %v2271 = vpop.f32.mrf.mxu0
        %v2272 = vadd.f32 %v2183, %v2271
        %2273 = vmatmul.bf16.gmra.mxu0 %v1901
        %v2274 = vpop.f32.mrf.mxu0
        %v2275 = vadd.f32 %v2186, %v2274
        %v2276 = vpop.f32.mrf.mxu0
        %v2277 = vadd.f32 %v2188, %v2276
        %2278 = vdwg.mxu0
        %2279 = vmatpush.bf16.msra.mxu0 %v2052
        %2280 = vmatpush.bf16.msra.mxu0 %v2050
        %2281 = vmatpush.bf16.msra.mxu0 %v2048
        %2282 = vmatpush.bf16.msra.mxu0 %v2046
        %2283 = vmatpush.bf16.msra.mxu0 %v2044
        %2284 = vmatpush.bf16.msra.mxu0 %v2042
        %2285 = vmatpush.bf16.msra.mxu0 %v2040
        %2286 = vmatpush.bf16.msra.mxu0 %v2038
        %2287 = vmatmul.bf16.gmra.mxu0 %v1870
        %v2288 = vpop.f32.mrf.mxu0
        %v2289 = vadd.f32 %v1938, %v2288
        %v2290 = vpop.f32.mrf.mxu0
        %v2291 = vadd.f32 %v1938, %v2290
        %2292 = vmatmul.bf16.gmra.mxu0 %v1872
        %v2293 = vpop.f32.mrf.mxu0
        %v2294 = vadd.f32 %v1938, %v2293
        %v2295 = vpop.f32.mrf.mxu0
        %v2296 = vadd.f32 %v1938, %v2295
        %2297 = vmatmul.bf16.gmra.mxu0 %v1874
        %v2298 = vpop.f32.mrf.mxu0
        %v2299 = vadd.f32 %v1938, %v2298
        %v2300 = vpop.f32.mrf.mxu0
        %v2301 = vadd.f32 %v1938, %v2300
        %2302 = vmatmul.bf16.gmra.mxu0 %v1876
        %v2303 = vpop.f32.mrf.mxu0
        %v2304 = vadd.f32 %v1938, %v2303
        %v2305 = vpop.f32.mrf.mxu0
        %v2306 = vadd.f32 %v1938, %v2305
        %2307 = vmatmul.bf16.gmra.mxu0 %v1878
        %v2308 = vpop.f32.mrf.mxu0
        %v2309 = vadd.f32 %v1938, %v2308
        %v2310 = vpop.f32.mrf.mxu0
        %v2311 = vadd.f32 %v1938, %v2310
        %2312 = vmatmul.bf16.gmra.mxu0 %v1880
        %v2313 = vpop.f32.mrf.mxu0
        %v2314 = vadd.f32 %v1938, %v2313
        %v2315 = vpop.f32.mrf.mxu0
        %v2316 = vadd.f32 %v1938, %v2315
        %2317 = vmatmul.bf16.gmra.mxu0 %v1882
        %v2318 = vpop.f32.mrf.mxu0
        %v2319 = vadd.f32 %v1938, %v2318
        %v2320 = vpop.f32.mrf.mxu0
        %v2321 = vadd.f32 %v1938, %v2320
        %2322 = vmatmul.bf16.gmra.mxu0 %v1884
        %v2323 = vpop.f32.mrf.mxu0
        %v2324 = vadd.f32 %v1938, %v2323
        %v2325 = vpop.f32.mrf.mxu0
        %v2326 = vadd.f32 %v1938, %v2325
        %2327 = vmatmul.bf16.gmra.mxu0 %v1886
        %v2328 = vpop.f32.mrf.mxu0
        %v2329 = vadd.f32 %v1938, %v2328
        %v2330 = vpop.f32.mrf.mxu0
        %v2331 = vadd.f32 %v1938, %v2330
        %2332 = vmatmul.bf16.gmra.mxu0 %v1888
        %v2333 = vpop.f32.mrf.mxu0
        %v2334 = vadd.f32 %v1938, %v2333
        %v2335 = vpop.f32.mrf.mxu0
        %v2336 = vadd.f32 %v1938, %v2335
        %2337 = vmatmul.bf16.gmra.mxu0 %v1890
        %v2338 = vpop.f32.mrf.mxu0
        %v2339 = vadd.f32 %v1938, %v2338
        %v2340 = vpop.f32.mrf.mxu0
        %v2341 = vadd.f32 %v1938, %v2340
        %2342 = vmatmul.bf16.gmra.mxu0 %v1892
        %v2343 = vpop.f32.mrf.mxu0
        %v2344 = vadd.f32 %v1938, %v2343
        %v2345 = vpop.f32.mrf.mxu0
        %v2346 = vadd.f32 %v1938, %v2345
        %2347 = vmatmul.bf16.gmra.mxu0 %v1894
        %v2348 = vpop.f32.mrf.mxu0
        %v2349 = vadd.f32 %v1938, %v2348
        %v2350 = vpop.f32.mrf.mxu0
        %v2351 = vadd.f32 %v1938, %v2350
        %2352 = vmatmul.bf16.gmra.mxu0 %v1896
        %v2353 = vpop.f32.mrf.mxu0
        %v2354 = vadd.f32 %v1938, %v2353
        %v2355 = vpop.f32.mrf.mxu0
        %v2356 = vadd.f32 %v1938, %v2355
        %2357 = vmatmul.bf16.gmra.mxu0 %v1898
        %v2358 = vpop.f32.mrf.mxu0
        %v2359 = vadd.f32 %v1938, %v2358
        %v2360 = vpop.f32.mrf.mxu0
        %v2361 = vadd.f32 %v1938, %v2360
        %2362 = vmatmul.bf16.gmra.mxu0 %v1900
        %v2363 = vpop.f32.mrf.mxu0
        %v2364 = vadd.f32 %v1938, %v2363
        %v2365 = vpop.f32.mrf.mxu0
        %v2366 = vadd.f32 %v1938, %v2365
        %2367 = vdwg.mxu0
        %2368 = vmatpush.bf16.msra.mxu0 %v2068
        %2369 = vmatpush.bf16.msra.mxu0 %v2066
        %2370 = vmatpush.bf16.msra.mxu0 %v2064
        %2371 = vmatpush.bf16.msra.mxu0 %v2062
        %2372 = vmatpush.bf16.msra.mxu0 %v2060
        %2373 = vmatpush.bf16.msra.mxu0 %v2058
        %2374 = vmatpush.bf16.msra.mxu0 %v2056
        %2375 = vmatpush.bf16.msra.mxu0 %v2054
        %2376 = vmatmul.bf16.gmra.mxu0 %v1871
        %v2377 = vpop.f32.mrf.mxu0
        %v2378 = vadd.f32 %v2289, %v2377
        %v2379 = vpop.f32.mrf.mxu0
        %v2380 = vadd.f32 %v2291, %v2379
        %2381 = vmatmul.bf16.gmra.mxu0 %v1873
        %v2382 = vpop.f32.mrf.mxu0
        %v2383 = vadd.f32 %v2294, %v2382
        %v2384 = vpop.f32.mrf.mxu0
        %v2385 = vadd.f32 %v2296, %v2384
        %2386 = vmatmul.bf16.gmra.mxu0 %v1875
        %v2387 = vpop.f32.mrf.mxu0
        %v2388 = vadd.f32 %v2299, %v2387
        %v2389 = vpop.f32.mrf.mxu0
        %v2390 = vadd.f32 %v2301, %v2389
        %2391 = vmatmul.bf16.gmra.mxu0 %v1877
        %v2392 = vpop.f32.mrf.mxu0
        %v2393 = vadd.f32 %v2304, %v2392
        %v2394 = vpop.f32.mrf.mxu0
        %v2395 = vadd.f32 %v2306, %v2394
        %2396 = vmatmul.bf16.gmra.mxu0 %v1879
        %v2397 = vpop.f32.mrf.mxu0
        %v2398 = vadd.f32 %v2309, %v2397
        %v2399 = vpop.f32.mrf.mxu0
        %v2400 = vadd.f32 %v2311, %v2399
        %2401 = vmatmul.bf16.gmra.mxu0 %v1881
        %v2402 = vpop.f32.mrf.mxu0
        %v2403 = vadd.f32 %v2314, %v2402
        %v2404 = vpop.f32.mrf.mxu0
        %v2405 = vadd.f32 %v2316, %v2404
        %2406 = vmatmul.bf16.gmra.mxu0 %v1883
        %v2407 = vpop.f32.mrf.mxu0
        %v2408 = vadd.f32 %v2319, %v2407
        %v2409 = vpop.f32.mrf.mxu0
        %v2410 = vadd.f32 %v2321, %v2409
        %2411 = vmatmul.bf16.gmra.mxu0 %v1885
        %v2412 = vpop.f32.mrf.mxu0
        %v2413 = vadd.f32 %v2324, %v2412
        %v2414 = vpop.f32.mrf.mxu0
        %v2415 = vadd.f32 %v2326, %v2414
        %2416 = vmatmul.bf16.gmra.mxu0 %v1887
        %v2417 = vpop.f32.mrf.mxu0
        %v2418 = vadd.f32 %v2329, %v2417
        %v2419 = vpop.f32.mrf.mxu0
        %v2420 = vadd.f32 %v2331, %v2419
        %2421 = vmatmul.bf16.gmra.mxu0 %v1889
        %v2422 = vpop.f32.mrf.mxu0
        %v2423 = vadd.f32 %v2334, %v2422
        %v2424 = vpop.f32.mrf.mxu0
        %v2425 = vadd.f32 %v2336, %v2424
        %2426 = vmatmul.bf16.gmra.mxu0 %v1891
        %v2427 = vpop.f32.mrf.mxu0
        %v2428 = vadd.f32 %v2339, %v2427
        %v2429 = vpop.f32.mrf.mxu0
        %v2430 = vadd.f32 %v2341, %v2429
        %2431 = vmatmul.bf16.gmra.mxu0 %v1893
        %v2432 = vpop.f32.mrf.mxu0
        %v2433 = vadd.f32 %v2344, %v2432
        %v2434 = vpop.f32.mrf.mxu0
        %v2435 = vadd.f32 %v2346, %v2434
        %2436 = vmatmul.bf16.gmra.mxu0 %v1895
        %v2437 = vpop.f32.mrf.mxu0
        %v2438 = vadd.f32 %v2349, %v2437
        %v2439 = vpop.f32.mrf.mxu0
        %v2440 = vadd.f32 %v2351, %v2439
        %2441 = vmatmul.bf16.gmra.mxu0 %v1897
        %v2442 = vpop.f32.mrf.mxu0
        %v2443 = vadd.f32 %v2354, %v2442
        %v2444 = vpop.f32.mrf.mxu0
        %v2445 = vadd.f32 %v2356, %v2444
        %2446 = vmatmul.bf16.gmra.mxu0 %v1899
        %v2447 = vpop.f32.mrf.mxu0
        %v2448 = vadd.f32 %v2359, %v2447
        %v2449 = vpop.f32.mrf.mxu0
        %v2450 = vadd.f32 %v2361, %v2449
        %2451 = vmatmul.bf16.gmra.mxu0 %v1901
        %v2452 = vpop.f32.mrf.mxu0
        %v2453 = vadd.f32 %v2364, %v2452
        %v2454 = vpop.f32.mrf.mxu0
        %v2455 = vadd.f32 %v2366, %v2454
        %2456 = vdwg.mxu0
        %v2457 = vmax.f32 %v2200, 0.0
        %v2458 = vmax.f32 %v2378, 0.0
        %v2459 = vmax.f32 %v2202, 0.0
        %v2460 = vmax.f32 %v2380, 0.0
        %v2461 = vmax.f32 %v2205, 0.0
        %v2462 = vmax.f32 %v2383, 0.0
        %v2463 = vmax.f32 %v2207, 0.0
        %v2464 = vmax.f32 %v2385, 0.0
        %v2465 = vmax.f32 %v2210, 0.0
        %v2466 = vmax.f32 %v2388, 0.0
        %v2467 = vmax.f32 %v2212, 0.0
        %v2468 = vmax.f32 %v2390, 0.0
        %v2469 = vmax.f32 %v2215, 0.0
        %v2470 = vmax.f32 %v2393, 0.0
        %v2471 = vmax.f32 %v2217, 0.0
        %v2472 = vmax.f32 %v2395, 0.0
        %v2473 = vmax.f32 %v2220, 0.0
        %v2474 = vmax.f32 %v2398, 0.0
        %v2475 = vmax.f32 %v2222, 0.0
        %v2476 = vmax.f32 %v2400, 0.0
        %v2477 = vmax.f32 %v2225, 0.0
        %v2478 = vmax.f32 %v2403, 0.0
        %v2479 = vmax.f32 %v2227, 0.0
        %v2480 = vmax.f32 %v2405, 0.0
        %v2481 = vmax.f32 %v2230, 0.0
        %v2482 = vmax.f32 %v2408, 0.0
        %v2483 = vmax.f32 %v2232, 0.0
        %v2484 = vmax.f32 %v2410, 0.0
        %v2485 = vmax.f32 %v2235, 0.0
        %v2486 = vmax.f32 %v2413, 0.0
        %v2487 = vmax.f32 %v2237, 0.0
        %v2488 = vmax.f32 %v2415, 0.0
        %v2489 = vmax.f32 %v2240, 0.0
        %v2490 = vmax.f32 %v2418, 0.0
        %v2491 = vmax.f32 %v2242, 0.0
        %v2492 = vmax.f32 %v2420, 0.0
        %v2493 = vmax.f32 %v2245, 0.0
        %v2494 = vmax.f32 %v2423, 0.0
        %v2495 = vmax.f32 %v2247, 0.0
        %v2496 = vmax.f32 %v2425, 0.0
        %v2497 = vmax.f32 %v2250, 0.0
        %v2498 = vmax.f32 %v2428, 0.0
        %v2499 = vmax.f32 %v2252, 0.0
        %v2500 = vmax.f32 %v2430, 0.0
        %v2501 = vmax.f32 %v2255, 0.0
        %v2502 = vmax.f32 %v2433, 0.0
        %v2503 = vmax.f32 %v2257, 0.0
        %v2504 = vmax.f32 %v2435, 0.0
        %v2505 = vmax.f32 %v2260, 0.0
        %v2506 = vmax.f32 %v2438, 0.0
        %v2507 = vmax.f32 %v2262, 0.0
        %v2508 = vmax.f32 %v2440, 0.0
        %v2509 = vmax.f32 %v2265, 0.0
        %v2510 = vmax.f32 %v2443, 0.0
        %v2511 = vmax.f32 %v2267, 0.0
        %v2512 = vmax.f32 %v2445, 0.0
        %v2513 = vmax.f32 %v2270, 0.0
        %v2514 = vmax.f32 %v2448, 0.0
        %v2515 = vmax.f32 %v2272, 0.0
        %v2516 = vmax.f32 %v2450, 0.0
        %v2517 = vmax.f32 %v2275, 0.0
        %v2518 = vmax.f32 %v2453, 0.0
        %v2519 = vmax.f32 %v2277, 0.0
        %v2520 = vmax.f32 %v2455, 0.0
        %v2521 = vpack.c.bf16 %v2459, %v2457
        %v2522 = vpack.c.bf16 %v2460, %v2458
        %v2523 = vpack.c.bf16 %v2463, %v2461
        %v2524 = vpack.c.bf16 %v2464, %v2462
        %v2525 = vpack.c.bf16 %v2467, %v2465
        %v2526 = vpack.c.bf16 %v2468, %v2466
        %v2527 = vpack.c.bf16 %v2471, %v2469
        %v2528 = vpack.c.bf16 %v2472, %v2470
        %v2529 = vpack.c.bf16 %v2475, %v2473
        %v2530 = vpack.c.bf16 %v2476, %v2474
        %v2531 = vpack.c.bf16 %v2479, %v2477
        %v2532 = vpack.c.bf16 %v2480, %v2478
        %v2533 = vpack.c.bf16 %v2483, %v2481
        %v2534 = vpack.c.bf16 %v2484, %v2482
        %v2535 = vpack.c.bf16 %v2487, %v2485
        %v2536 = vpack.c.bf16 %v2488, %v2486
        %v2537 = vpack.c.bf16 %v2491, %v2489
        %v2538 = vpack.c.bf16 %v2492, %v2490
        %v2539 = vpack.c.bf16 %v2495, %v2493
        %v2540 = vpack.c.bf16 %v2496, %v2494
        %v2541 = vpack.c.bf16 %v2499, %v2497
        %v2542 = vpack.c.bf16 %v2500, %v2498
        %v2543 = vpack.c.bf16 %v2503, %v2501
        %v2544 = vpack.c.bf16 %v2504, %v2502
        %v2545 = vpack.c.bf16 %v2507, %v2505
        %v2546 = vpack.c.bf16 %v2508, %v2506
        %v2547 = vpack.c.bf16 %v2511, %v2509
        %v2548 = vpack.c.bf16 %v2512, %v2510
        %v2549 = vpack.c.bf16 %v2515, %v2513
        %v2550 = vpack.c.bf16 %v2516, %v2514
        %v2551 = vpack.c.bf16 %v2519, %v2517
        %v2552 = vpack.c.bf16 %v2520, %v2518
        %v2553 = vld [vmem:[#allocation8 + $0x400] sm:$0xff]
        %v2554 = vld [vmem:[#allocation8 + $0x408] sm:$0xff]
        %v2555 = vld [vmem:[#allocation8 + $0x410] sm:$0xff]
        %v2556 = vld [vmem:[#allocation8 + $0x418] sm:$0xff]
        %v2557 = vld [vmem:[#allocation8 + $0x420] sm:$0xff]
        %v2558 = vld [vmem:[#allocation8 + $0x428] sm:$0xff]
        %v2559 = vld [vmem:[#allocation8 + $0x430] sm:$0xff]
        %v2560 = vld [vmem:[#allocation8 + $0x438] sm:$0xff]
        %v2561 = vld [vmem:[#allocation8 + $0x440] sm:$0xff]
        %v2562 = vld [vmem:[#allocation8 + $0x448] sm:$0xff]
        %v2563 = vld [vmem:[#allocation8 + $0x450] sm:$0xff]
        %v2564 = vld [vmem:[#allocation8 + $0x458] sm:$0xff]
        %v2565 = vld [vmem:[#allocation8 + $0x460] sm:$0xff]
        %v2566 = vld [vmem:[#allocation8 + $0x468] sm:$0xff]
        %v2567 = vld [vmem:[#allocation8 + $0x470] sm:$0xff]
        %v2568 = vld [vmem:[#allocation8 + $0x478] sm:$0xff]
        %v2569 = vld [vmem:[#allocation8 + $0x480] sm:$0xff]
        %v2570 = vld [vmem:[#allocation8 + $0x488] sm:$0xff]
        %v2571 = vld [vmem:[#allocation8 + $0x490] sm:$0xff]
        %v2572 = vld [vmem:[#allocation8 + $0x498] sm:$0xff]
        %v2573 = vld [vmem:[#allocation8 + $0x4a0] sm:$0xff]
        %v2574 = vld [vmem:[#allocation8 + $0x4a8] sm:$0xff]
        %v2575 = vld [vmem:[#allocation8 + $0x4b0] sm:$0xff]
        %v2576 = vld [vmem:[#allocation8 + $0x4b8] sm:$0xff]
        %v2577 = vld [vmem:[#allocation8 + $0x4c0] sm:$0xff]
        %v2578 = vld [vmem:[#allocation8 + $0x4c8] sm:$0xff]
        %v2579 = vld [vmem:[#allocation8 + $0x4d0] sm:$0xff]
        %v2580 = vld [vmem:[#allocation8 + $0x4d8] sm:$0xff]
        %v2581 = vld [vmem:[#allocation8 + $0x4e0] sm:$0xff]
        %v2582 = vld [vmem:[#allocation8 + $0x4e8] sm:$0xff]
        %v2583 = vld [vmem:[#allocation8 + $0x4f0] sm:$0xff]
        %v2584 = vld [vmem:[#allocation8 + $0x4f8] sm:$0xff]
        %s2585 = scalar_lea.vmem [#allocation10], 96
        %v2586 = vld [vmem:[%s2585] ss:$8 sm:$0x3]
        %v2588 = vperm.slane %v2586, 0
        %v2589 = vperm.slane %v2586, 1
        %v2624 = vunpack.c.l.b16 %v2553
        %v2625 = vunpack.c.h.b16 %v2553
        %v2626 = vunpack.c.l.b16 %v2554
        %v2627 = vunpack.c.h.b16 %v2554
        %v2628 = vunpack.c.l.b16 %v2555
        %v2629 = vunpack.c.h.b16 %v2555
        %v2630 = vunpack.c.l.b16 %v2556
        %v2631 = vunpack.c.h.b16 %v2556
        %v2632 = vunpack.c.l.b16 %v2557
        %v2633 = vunpack.c.h.b16 %v2557
        %v2634 = vunpack.c.l.b16 %v2558
        %v2635 = vunpack.c.h.b16 %v2558
        %v2636 = vunpack.c.l.b16 %v2559
        %v2637 = vunpack.c.h.b16 %v2559
        %v2638 = vunpack.c.l.b16 %v2560
        %v2639 = vunpack.c.h.b16 %v2560
        %v2640 = vunpack.c.l.b16 %v2561
        %v2641 = vunpack.c.h.b16 %v2561
        %v2642 = vunpack.c.l.b16 %v2562
        %v2643 = vunpack.c.h.b16 %v2562
        %v2644 = vunpack.c.l.b16 %v2563
        %v2645 = vunpack.c.h.b16 %v2563
        %v2646 = vunpack.c.l.b16 %v2564
        %v2647 = vunpack.c.h.b16 %v2564
        %v2648 = vunpack.c.l.b16 %v2565
        %v2649 = vunpack.c.h.b16 %v2565
        %v2650 = vunpack.c.l.b16 %v2566
        %v2651 = vunpack.c.h.b16 %v2566
        %v2652 = vunpack.c.l.b16 %v2567
        %v2653 = vunpack.c.h.b16 %v2567
        %v2654 = vunpack.c.l.b16 %v2568
        %v2655 = vunpack.c.h.b16 %v2568
        %v2656 = vunpack.c.l.b16 %v2569
        %v2657 = vunpack.c.h.b16 %v2569
        %v2658 = vunpack.c.l.b16 %v2570
        %v2659 = vunpack.c.h.b16 %v2570
        %v2660 = vunpack.c.l.b16 %v2571
        %v2661 = vunpack.c.h.b16 %v2571
        %v2662 = vunpack.c.l.b16 %v2572
        %v2663 = vunpack.c.h.b16 %v2572
        %v2664 = vunpack.c.l.b16 %v2573
        %v2665 = vunpack.c.h.b16 %v2573
        %v2666 = vunpack.c.l.b16 %v2574
        %v2667 = vunpack.c.h.b16 %v2574
        %v2668 = vunpack.c.l.b16 %v2575
        %v2669 = vunpack.c.h.b16 %v2575
        %v2670 = vunpack.c.l.b16 %v2576
        %v2671 = vunpack.c.h.b16 %v2576
        %v2672 = vunpack.c.l.b16 %v2577
        %v2673 = vunpack.c.h.b16 %v2577
        %v2674 = vunpack.c.l.b16 %v2578
        %v2675 = vunpack.c.h.b16 %v2578
        %v2676 = vunpack.c.l.b16 %v2579
        %v2677 = vunpack.c.h.b16 %v2579
        %v2678 = vunpack.c.l.b16 %v2580
        %v2679 = vunpack.c.h.b16 %v2580
        %v2680 = vunpack.c.l.b16 %v2581
        %v2681 = vunpack.c.h.b16 %v2581
        %v2682 = vunpack.c.l.b16 %v2582
        %v2683 = vunpack.c.h.b16 %v2582
        %v2684 = vunpack.c.l.b16 %v2583
        %v2685 = vunpack.c.h.b16 %v2583
        %v2686 = vunpack.c.l.b16 %v2584
        %v2687 = vunpack.c.h.b16 %v2584
        %v2688 = vpack.c.b16 %v2626, %v2624
        %v2689 = vpack.c.b16 %v2627, %v2625
        %v2690 = vpack.c.b16 %v2630, %v2628
        %v2691 = vpack.c.b16 %v2631, %v2629
        %v2692 = vpack.c.b16 %v2634, %v2632
        %v2693 = vpack.c.b16 %v2635, %v2633
        %v2694 = vpack.c.b16 %v2638, %v2636
        %v2695 = vpack.c.b16 %v2639, %v2637
        %v2696 = vpack.c.b16 %v2642, %v2640
        %v2697 = vpack.c.b16 %v2643, %v2641
        %v2698 = vpack.c.b16 %v2646, %v2644
        %v2699 = vpack.c.b16 %v2647, %v2645
        %v2700 = vpack.c.b16 %v2650, %v2648
        %v2701 = vpack.c.b16 %v2651, %v2649
        %v2702 = vpack.c.b16 %v2654, %v2652
        %v2703 = vpack.c.b16 %v2655, %v2653
        %v2704 = vpack.c.b16 %v2658, %v2656
        %v2705 = vpack.c.b16 %v2659, %v2657
        %v2706 = vpack.c.b16 %v2662, %v2660
        %v2707 = vpack.c.b16 %v2663, %v2661
        %v2708 = vpack.c.b16 %v2666, %v2664
        %v2709 = vpack.c.b16 %v2667, %v2665
        %v2710 = vpack.c.b16 %v2670, %v2668
        %v2711 = vpack.c.b16 %v2671, %v2669
        %v2712 = vpack.c.b16 %v2674, %v2672
        %v2713 = vpack.c.b16 %v2675, %v2673
        %v2714 = vpack.c.b16 %v2678, %v2676
        %v2715 = vpack.c.b16 %v2679, %v2677
        %v2716 = vpack.c.b16 %v2682, %v2680
        %v2717 = vpack.c.b16 %v2683, %v2681
        %v2718 = vpack.c.b16 %v2686, %v2684
        %v2719 = vpack.c.b16 %v2687, %v2685
        %2752 = vmatpush.bf16.msra.mxu0 %v2702
        %2753 = vmatpush.bf16.msra.mxu0 %v2700
        %2754 = vmatpush.bf16.msra.mxu0 %v2698
        %2755 = vmatpush.bf16.msra.mxu0 %v2696
        %2756 = vmatpush.bf16.msra.mxu0 %v2694
        %2757 = vmatpush.bf16.msra.mxu0 %v2692
        %2758 = vmatpush.bf16.msra.mxu0 %v2690
        %2759 = vmatpush.bf16.msra.mxu0 %v2688
        %2760 = vmatmul.bf16.gmra.mxu0 %v2521
        %v2761 = vpop.f32.mrf.mxu0
        %v2762 = vadd.f32 %v2588, %v2761
        %v2763 = vpop.f32.mrf.mxu0
        %v2764 = vadd.f32 %v2588, %v2763
        %2765 = vmatmul.bf16.gmra.mxu0 %v2523
        %v2766 = vpop.f32.mrf.mxu0
        %v2767 = vadd.f32 %v2588, %v2766
        %v2768 = vpop.f32.mrf.mxu0
        %v2769 = vadd.f32 %v2588, %v2768
        %2770 = vmatmul.bf16.gmra.mxu0 %v2525
        %v2771 = vpop.f32.mrf.mxu0
        %v2772 = vadd.f32 %v2588, %v2771
        %v2773 = vpop.f32.mrf.mxu0
        %v2774 = vadd.f32 %v2588, %v2773
        %2775 = vmatmul.bf16.gmra.mxu0 %v2527
        %v2776 = vpop.f32.mrf.mxu0
        %v2777 = vadd.f32 %v2588, %v2776
        %v2778 = vpop.f32.mrf.mxu0
        %v2779 = vadd.f32 %v2588, %v2778
        %2780 = vmatmul.bf16.gmra.mxu0 %v2529
        %v2781 = vpop.f32.mrf.mxu0
        %v2782 = vadd.f32 %v2588, %v2781
        %v2783 = vpop.f32.mrf.mxu0
        %v2784 = vadd.f32 %v2588, %v2783
        %2785 = vmatmul.bf16.gmra.mxu0 %v2531
        %v2786 = vpop.f32.mrf.mxu0
        %v2787 = vadd.f32 %v2588, %v2786
        %v2788 = vpop.f32.mrf.mxu0
        %v2789 = vadd.f32 %v2588, %v2788
        %2790 = vmatmul.bf16.gmra.mxu0 %v2533
        %v2791 = vpop.f32.mrf.mxu0
        %v2792 = vadd.f32 %v2588, %v2791
        %v2793 = vpop.f32.mrf.mxu0
        %v2794 = vadd.f32 %v2588, %v2793
        %2795 = vmatmul.bf16.gmra.mxu0 %v2535
        %v2796 = vpop.f32.mrf.mxu0
        %v2797 = vadd.f32 %v2588, %v2796
        %v2798 = vpop.f32.mrf.mxu0
        %v2799 = vadd.f32 %v2588, %v2798
        %2800 = vmatmul.bf16.gmra.mxu0 %v2537
        %v2801 = vpop.f32.mrf.mxu0
        %v2802 = vadd.f32 %v2588, %v2801
        %v2803 = vpop.f32.mrf.mxu0
        %v2804 = vadd.f32 %v2588, %v2803
        %2805 = vmatmul.bf16.gmra.mxu0 %v2539
        %v2806 = vpop.f32.mrf.mxu0
        %v2807 = vadd.f32 %v2588, %v2806
        %v2808 = vpop.f32.mrf.mxu0
        %v2809 = vadd.f32 %v2588, %v2808
        %2810 = vmatmul.bf16.gmra.mxu0 %v2541
        %v2811 = vpop.f32.mrf.mxu0
        %v2812 = vadd.f32 %v2588, %v2811
        %v2813 = vpop.f32.mrf.mxu0
        %v2814 = vadd.f32 %v2588, %v2813
        %2815 = vmatmul.bf16.gmra.mxu0 %v2543
        %v2816 = vpop.f32.mrf.mxu0
        %v2817 = vadd.f32 %v2588, %v2816
        %v2818 = vpop.f32.mrf.mxu0
        %v2819 = vadd.f32 %v2588, %v2818
        %2820 = vmatmul.bf16.gmra.mxu0 %v2545
        %v2821 = vpop.f32.mrf.mxu0
        %v2822 = vadd.f32 %v2588, %v2821
        %v2823 = vpop.f32.mrf.mxu0
        %v2824 = vadd.f32 %v2588, %v2823
        %2825 = vmatmul.bf16.gmra.mxu0 %v2547
        %v2826 = vpop.f32.mrf.mxu0
        %v2827 = vadd.f32 %v2588, %v2826
        %v2828 = vpop.f32.mrf.mxu0
        %v2829 = vadd.f32 %v2588, %v2828
        %2830 = vmatmul.bf16.gmra.mxu0 %v2549
        %v2831 = vpop.f32.mrf.mxu0
        %v2832 = vadd.f32 %v2588, %v2831
        %v2833 = vpop.f32.mrf.mxu0
        %v2834 = vadd.f32 %v2588, %v2833
        %2835 = vmatmul.bf16.gmra.mxu0 %v2551
        %v2836 = vpop.f32.mrf.mxu0
        %v2837 = vadd.f32 %v2588, %v2836
        %v2838 = vpop.f32.mrf.mxu0
        %v2839 = vadd.f32 %v2588, %v2838
        %2840 = vdwg.mxu0
        %2841 = vmatpush.bf16.msra.mxu0 %v2718
        %2842 = vmatpush.bf16.msra.mxu0 %v2716
        %2843 = vmatpush.bf16.msra.mxu0 %v2714
        %2844 = vmatpush.bf16.msra.mxu0 %v2712
        %2845 = vmatpush.bf16.msra.mxu0 %v2710
        %2846 = vmatpush.bf16.msra.mxu0 %v2708
        %2847 = vmatpush.bf16.msra.mxu0 %v2706
        %2848 = vmatpush.bf16.msra.mxu0 %v2704
        %2849 = vmatmul.bf16.gmra.mxu0 %v2522
        %v2850 = vpop.f32.mrf.mxu0
        %v2851 = vadd.f32 %v2762, %v2850
        %v2852 = vpop.f32.mrf.mxu0
        %v2853 = vadd.f32 %v2764, %v2852
        %2854 = vmatmul.bf16.gmra.mxu0 %v2524
        %v2855 = vpop.f32.mrf.mxu0
        %v2856 = vadd.f32 %v2767, %v2855
        %v2857 = vpop.f32.mrf.mxu0
        %v2858 = vadd.f32 %v2769, %v2857
        %2859 = vmatmul.bf16.gmra.mxu0 %v2526
        %v2860 = vpop.f32.mrf.mxu0
        %v2861 = vadd.f32 %v2772, %v2860
        %v2862 = vpop.f32.mrf.mxu0
        %v2863 = vadd.f32 %v2774, %v2862
        %2864 = vmatmul.bf16.gmra.mxu0 %v2528
        %v2865 = vpop.f32.mrf.mxu0
        %v2866 = vadd.f32 %v2777, %v2865
        %v2867 = vpop.f32.mrf.mxu0
        %v2868 = vadd.f32 %v2779, %v2867
        %2869 = vmatmul.bf16.gmra.mxu0 %v2530
        %v2870 = vpop.f32.mrf.mxu0
        %v2871 = vadd.f32 %v2782, %v2870
        %v2872 = vpop.f32.mrf.mxu0
        %v2873 = vadd.f32 %v2784, %v2872
        %2874 = vmatmul.bf16.gmra.mxu0 %v2532
        %v2875 = vpop.f32.mrf.mxu0
        %v2876 = vadd.f32 %v2787, %v2875
        %v2877 = vpop.f32.mrf.mxu0
        %v2878 = vadd.f32 %v2789, %v2877
        %2879 = vmatmul.bf16.gmra.mxu0 %v2534
        %v2880 = vpop.f32.mrf.mxu0
        %v2881 = vadd.f32 %v2792, %v2880
        %v2882 = vpop.f32.mrf.mxu0
        %v2883 = vadd.f32 %v2794, %v2882
        %2884 = vmatmul.bf16.gmra.mxu0 %v2536
        %v2885 = vpop.f32.mrf.mxu0
        %v2886 = vadd.f32 %v2797, %v2885
        %v2887 = vpop.f32.mrf.mxu0
        %v2888 = vadd.f32 %v2799, %v2887
        %2889 = vmatmul.bf16.gmra.mxu0 %v2538
        %v2890 = vpop.f32.mrf.mxu0
        %v2891 = vadd.f32 %v2802, %v2890
        %v2892 = vpop.f32.mrf.mxu0
        %v2893 = vadd.f32 %v2804, %v2892
        %2894 = vmatmul.bf16.gmra.mxu0 %v2540
        %v2895 = vpop.f32.mrf.mxu0
        %v2896 = vadd.f32 %v2807, %v2895
        %v2897 = vpop.f32.mrf.mxu0
        %v2898 = vadd.f32 %v2809, %v2897
        %2899 = vmatmul.bf16.gmra.mxu0 %v2542
        %v2900 = vpop.f32.mrf.mxu0
        %v2901 = vadd.f32 %v2812, %v2900
        %v2902 = vpop.f32.mrf.mxu0
        %v2903 = vadd.f32 %v2814, %v2902
        %2904 = vmatmul.bf16.gmra.mxu0 %v2544
        %v2905 = vpop.f32.mrf.mxu0
        %v2906 = vadd.f32 %v2817, %v2905
        %v2907 = vpop.f32.mrf.mxu0
        %v2908 = vadd.f32 %v2819, %v2907
        %2909 = vmatmul.bf16.gmra.mxu0 %v2546
        %v2910 = vpop.f32.mrf.mxu0
        %v2911 = vadd.f32 %v2822, %v2910
        %v2912 = vpop.f32.mrf.mxu0
        %v2913 = vadd.f32 %v2824, %v2912
        %2914 = vmatmul.bf16.gmra.mxu0 %v2548
        %v2915 = vpop.f32.mrf.mxu0
        %v2916 = vadd.f32 %v2827, %v2915
        %v2917 = vpop.f32.mrf.mxu0
        %v2918 = vadd.f32 %v2829, %v2917
        %2919 = vmatmul.bf16.gmra.mxu0 %v2550
        %v2920 = vpop.f32.mrf.mxu0
        %v2921 = vadd.f32 %v2832, %v2920
        %v2922 = vpop.f32.mrf.mxu0
        %v2923 = vadd.f32 %v2834, %v2922
        %2924 = vmatmul.bf16.gmra.mxu0 %v2552
        %v2925 = vpop.f32.mrf.mxu0
        %v2926 = vadd.f32 %v2837, %v2925
        %v2927 = vpop.f32.mrf.mxu0
        %v2928 = vadd.f32 %v2839, %v2927
        %2929 = vdwg.mxu0
        %2930 = vmatpush.bf16.msra.mxu0 %v2703
        %2931 = vmatpush.bf16.msra.mxu0 %v2701
        %2932 = vmatpush.bf16.msra.mxu0 %v2699
        %2933 = vmatpush.bf16.msra.mxu0 %v2697
        %2934 = vmatpush.bf16.msra.mxu0 %v2695
        %2935 = vmatpush.bf16.msra.mxu0 %v2693
        %2936 = vmatpush.bf16.msra.mxu0 %v2691
        %2937 = vmatpush.bf16.msra.mxu0 %v2689
        %2938 = vmatmul.bf16.gmra.mxu0 %v2521
        %v2939 = vpop.f32.mrf.mxu0
        %v2940 = vadd.f32 %v2589, %v2939
        %v2941 = vpop.f32.mrf.mxu0
        %v2942 = vadd.f32 %v2589, %v2941
        %2943 = vmatmul.bf16.gmra.mxu0 %v2523
        %v2944 = vpop.f32.mrf.mxu0
        %v2945 = vadd.f32 %v2589, %v2944
        %v2946 = vpop.f32.mrf.mxu0
        %v2947 = vadd.f32 %v2589, %v2946
        %2948 = vmatmul.bf16.gmra.mxu0 %v2525
        %v2949 = vpop.f32.mrf.mxu0
        %v2950 = vadd.f32 %v2589, %v2949
        %v2951 = vpop.f32.mrf.mxu0
        %v2952 = vadd.f32 %v2589, %v2951
        %2953 = vmatmul.bf16.gmra.mxu0 %v2527
        %v2954 = vpop.f32.mrf.mxu0
        %v2955 = vadd.f32 %v2589, %v2954
        %v2956 = vpop.f32.mrf.mxu0
        %v2957 = vadd.f32 %v2589, %v2956
        %2958 = vmatmul.bf16.gmra.mxu0 %v2529
        %v2959 = vpop.f32.mrf.mxu0
        %v2960 = vadd.f32 %v2589, %v2959
        %v2961 = vpop.f32.mrf.mxu0
        %v2962 = vadd.f32 %v2589, %v2961
        %2963 = vmatmul.bf16.gmra.mxu0 %v2531
        %v2964 = vpop.f32.mrf.mxu0
        %v2965 = vadd.f32 %v2589, %v2964
        %v2966 = vpop.f32.mrf.mxu0
        %v2967 = vadd.f32 %v2589, %v2966
        %2968 = vmatmul.bf16.gmra.mxu0 %v2533
        %v2969 = vpop.f32.mrf.mxu0
        %v2970 = vadd.f32 %v2589, %v2969
        %v2971 = vpop.f32.mrf.mxu0
        %v2972 = vadd.f32 %v2589, %v2971
        %2973 = vmatmul.bf16.gmra.mxu0 %v2535
        %v2974 = vpop.f32.mrf.mxu0
        %v2975 = vadd.f32 %v2589, %v2974
        %v2976 = vpop.f32.mrf.mxu0
        %v2977 = vadd.f32 %v2589, %v2976
        %2978 = vmatmul.bf16.gmra.mxu0 %v2537
        %v2979 = vpop.f32.mrf.mxu0
        %v2980 = vadd.f32 %v2589, %v2979
        %v2981 = vpop.f32.mrf.mxu0
        %v2982 = vadd.f32 %v2589, %v2981
        %2983 = vmatmul.bf16.gmra.mxu0 %v2539
        %v2984 = vpop.f32.mrf.mxu0
        %v2985 = vadd.f32 %v2589, %v2984
        %v2986 = vpop.f32.mrf.mxu0
        %v2987 = vadd.f32 %v2589, %v2986
        %2988 = vmatmul.bf16.gmra.mxu0 %v2541
        %v2989 = vpop.f32.mrf.mxu0
        %v2990 = vadd.f32 %v2589, %v2989
        %v2991 = vpop.f32.mrf.mxu0
        %v2992 = vadd.f32 %v2589, %v2991
        %2993 = vmatmul.bf16.gmra.mxu0 %v2543
        %v2994 = vpop.f32.mrf.mxu0
        %v2995 = vadd.f32 %v2589, %v2994
        %v2996 = vpop.f32.mrf.mxu0
        %v2997 = vadd.f32 %v2589, %v2996
        %2998 = vmatmul.bf16.gmra.mxu0 %v2545
        %v2999 = vpop.f32.mrf.mxu0
        %v3000 = vadd.f32 %v2589, %v2999
        %v3001 = vpop.f32.mrf.mxu0
        %v3002 = vadd.f32 %v2589, %v3001
        %3003 = vmatmul.bf16.gmra.mxu0 %v2547
        %v3004 = vpop.f32.mrf.mxu0
        %v3005 = vadd.f32 %v2589, %v3004
        %v3006 = vpop.f32.mrf.mxu0
        %v3007 = vadd.f32 %v2589, %v3006
        %3008 = vmatmul.bf16.gmra.mxu0 %v2549
        %v3009 = vpop.f32.mrf.mxu0
        %v3010 = vadd.f32 %v2589, %v3009
        %v3011 = vpop.f32.mrf.mxu0
        %v3012 = vadd.f32 %v2589, %v3011
        %3013 = vmatmul.bf16.gmra.mxu0 %v2551
        %v3014 = vpop.f32.mrf.mxu0
        %v3015 = vadd.f32 %v2589, %v3014
        %v3016 = vpop.f32.mrf.mxu0
        %v3017 = vadd.f32 %v2589, %v3016
        %3018 = vdwg.mxu0
        %3019 = vmatpush.bf16.msra.mxu0 %v2719
        %3020 = vmatpush.bf16.msra.mxu0 %v2717
        %3021 = vmatpush.bf16.msra.mxu0 %v2715
        %3022 = vmatpush.bf16.msra.mxu0 %v2713
        %3023 = vmatpush.bf16.msra.mxu0 %v2711
        %3024 = vmatpush.bf16.msra.mxu0 %v2709
        %3025 = vmatpush.bf16.msra.mxu0 %v2707
        %3026 = vmatpush.bf16.msra.mxu0 %v2705
        %3027 = vmatmul.bf16.gmra.mxu0 %v2522
        %v3028 = vpop.f32.mrf.mxu0
        %v3029 = vadd.f32 %v2940, %v3028
        %v3030 = vpop.f32.mrf.mxu0
        %v3031 = vadd.f32 %v2942, %v3030
        %3032 = vmatmul.bf16.gmra.mxu0 %v2524
        %v3033 = vpop.f32.mrf.mxu0
        %v3034 = vadd.f32 %v2945, %v3033
        %v3035 = vpop.f32.mrf.mxu0
        %v3036 = vadd.f32 %v2947, %v3035
        %3037 = vmatmul.bf16.gmra.mxu0 %v2526
        %v3038 = vpop.f32.mrf.mxu0
        %v3039 = vadd.f32 %v2950, %v3038
        %v3040 = vpop.f32.mrf.mxu0
        %v3041 = vadd.f32 %v2952, %v3040
        %3042 = vmatmul.bf16.gmra.mxu0 %v2528
        %v3043 = vpop.f32.mrf.mxu0
        %v3044 = vadd.f32 %v2955, %v3043
        %v3045 = vpop.f32.mrf.mxu0
        %v3046 = vadd.f32 %v2957, %v3045
        %3047 = vmatmul.bf16.gmra.mxu0 %v2530
        %v3048 = vpop.f32.mrf.mxu0
        %v3049 = vadd.f32 %v2960, %v3048
        %v3050 = vpop.f32.mrf.mxu0
        %v3051 = vadd.f32 %v2962, %v3050
        %3052 = vmatmul.bf16.gmra.mxu0 %v2532
        %v3053 = vpop.f32.mrf.mxu0
        %v3054 = vadd.f32 %v2965, %v3053
        %v3055 = vpop.f32.mrf.mxu0
        %v3056 = vadd.f32 %v2967, %v3055
        %3057 = vmatmul.bf16.gmra.mxu0 %v2534
        %v3058 = vpop.f32.mrf.mxu0
        %v3059 = vadd.f32 %v2970, %v3058
        %v3060 = vpop.f32.mrf.mxu0
        %v3061 = vadd.f32 %v2972, %v3060
        %3062 = vmatmul.bf16.gmra.mxu0 %v2536
        %v3063 = vpop.f32.mrf.mxu0
        %v3064 = vadd.f32 %v2975, %v3063
        %v3065 = vpop.f32.mrf.mxu0
        %v3066 = vadd.f32 %v2977, %v3065
        %3067 = vmatmul.bf16.gmra.mxu0 %v2538
        %v3068 = vpop.f32.mrf.mxu0
        %v3069 = vadd.f32 %v2980, %v3068
        %v3070 = vpop.f32.mrf.mxu0
        %v3071 = vadd.f32 %v2982, %v3070
        %3072 = vmatmul.bf16.gmra.mxu0 %v2540
        %v3073 = vpop.f32.mrf.mxu0
        %v3074 = vadd.f32 %v2985, %v3073
        %v3075 = vpop.f32.mrf.mxu0
        %v3076 = vadd.f32 %v2987, %v3075
        %3077 = vmatmul.bf16.gmra.mxu0 %v2542
        %v3078 = vpop.f32.mrf.mxu0
        %v3079 = vadd.f32 %v2990, %v3078
        %v3080 = vpop.f32.mrf.mxu0
        %v3081 = vadd.f32 %v2992, %v3080
        %3082 = vmatmul.bf16.gmra.mxu0 %v2544
        %v3083 = vpop.f32.mrf.mxu0
        %v3084 = vadd.f32 %v2995, %v3083
        %v3085 = vpop.f32.mrf.mxu0
        %v3086 = vadd.f32 %v2997, %v3085
        %3087 = vmatmul.bf16.gmra.mxu0 %v2546
        %v3088 = vpop.f32.mrf.mxu0
        %v3089 = vadd.f32 %v3000, %v3088
        %v3090 = vpop.f32.mrf.mxu0
        %v3091 = vadd.f32 %v3002, %v3090
        %3092 = vmatmul.bf16.gmra.mxu0 %v2548
        %v3093 = vpop.f32.mrf.mxu0
        %v3094 = vadd.f32 %v3005, %v3093
        %v3095 = vpop.f32.mrf.mxu0
        %v3096 = vadd.f32 %v3007, %v3095
        %3097 = vmatmul.bf16.gmra.mxu0 %v2550
        %v3098 = vpop.f32.mrf.mxu0
        %v3099 = vadd.f32 %v3010, %v3098
        %v3100 = vpop.f32.mrf.mxu0
        %v3101 = vadd.f32 %v3012, %v3100
        %3102 = vmatmul.bf16.gmra.mxu0 %v2552
        %v3103 = vpop.f32.mrf.mxu0
        %v3104 = vadd.f32 %v3015, %v3103
        %v3105 = vpop.f32.mrf.mxu0
        %v3106 = vadd.f32 %v3017, %v3105
        %3107 = vdwg.mxu0
        %v3108 = vld [vmem:[%s311] sm:$0xff]
        %v3109 = vld [vmem:[%s311 + $0x8] sm:$0xff]
        %v3110 = vld [vmem:[%s311 + $0x10] sm:$0xff]
        %v3111 = vld [vmem:[%s311 + $0x18] sm:$0xff]
        %v3112 = vld [vmem:[%s311 + $0x20] sm:$0xff]
        %v3113 = vld [vmem:[%s311 + $0x28] sm:$0xff]
        %v3114 = vld [vmem:[%s311 + $0x30] sm:$0xff]
        %v3115 = vld [vmem:[%s311 + $0x38] sm:$0xff]
        %v3116 = vld [vmem:[%s311 + $0x40] sm:$0xff]
        %v3117 = vld [vmem:[%s311 + $0x48] sm:$0xff]
        %v3118 = vld [vmem:[%s311 + $0x50] sm:$0xff]
        %v3119 = vld [vmem:[%s311 + $0x58] sm:$0xff]
        %v3120 = vld [vmem:[%s311 + $0x60] sm:$0xff]
        %v3121 = vld [vmem:[%s311 + $0x68] sm:$0xff]
        %v3122 = vld [vmem:[%s311 + $0x70] sm:$0xff]
        %v3123 = vld [vmem:[%s311 + $0x78] sm:$0xff]
        %v3124 = vld [vmem:[%s311 + $0x80] sm:$0xff]
        %v3125 = vld [vmem:[%s311 + $0x88] sm:$0xff]
        %v3126 = vld [vmem:[%s311 + $0x90] sm:$0xff]
        %v3127 = vld [vmem:[%s311 + $0x98] sm:$0xff]
        %v3128 = vld [vmem:[%s311 + $0xa0] sm:$0xff]
        %v3129 = vld [vmem:[%s311 + $0xa8] sm:$0xff]
        %v3130 = vld [vmem:[%s311 + $0xb0] sm:$0xff]
        %v3131 = vld [vmem:[%s311 + $0xb8] sm:$0xff]
        %v3132 = vld [vmem:[%s311 + $0xc0] sm:$0xff]
        %v3133 = vld [vmem:[%s311 + $0xc8] sm:$0xff]
        %v3134 = vld [vmem:[%s311 + $0xd0] sm:$0xff]
        %v3135 = vld [vmem:[%s311 + $0xd8] sm:$0xff]
        %v3136 = vld [vmem:[%s311 + $0xe0] sm:$0xff]
        %v3137 = vld [vmem:[%s311 + $0xe8] sm:$0xff]
        %v3138 = vld [vmem:[%s311 + $0xf0] sm:$0xff]
        %v3139 = vld [vmem:[%s311 + $0xf8] sm:$0xff]
        %v3140 = vmul.f32 %v3029, 0.5
        %v3141 = vmul.f32 %v3031, 0.5
        %v3142 = vmul.f32 %v3034, 0.5
        %v3143 = vmul.f32 %v3036, 0.5
        %v3144 = vmul.f32 %v3039, 0.5
        %v3145 = vmul.f32 %v3041, 0.5
        %v3146 = vmul.f32 %v3044, 0.5
        %v3147 = vmul.f32 %v3046, 0.5
        %v3148 = vmul.f32 %v3049, 0.5
        %v3149 = vmul.f32 %v3051, 0.5
        %v3150 = vmul.f32 %v3054, 0.5
        %v3151 = vmul.f32 %v3056, 0.5
        %v3152 = vmul.f32 %v3059, 0.5
        %v3153 = vmul.f32 %v3061, 0.5
        %v3154 = vmul.f32 %v3064, 0.5
        %v3155 = vmul.f32 %v3066, 0.5
        %v3156 = vmul.f32 %v3069, 0.5
        %v3157 = vmul.f32 %v3071, 0.5
        %v3158 = vmul.f32 %v3074, 0.5
        %v3159 = vmul.f32 %v3076, 0.5
        %v3160 = vmul.f32 %v3079, 0.5
        %v3161 = vmul.f32 %v3081, 0.5
        %v3162 = vmul.f32 %v3084, 0.5
        %v3163 = vmul.f32 %v3086, 0.5
        %v3164 = vmul.f32 %v3089, 0.5
        %v3165 = vmul.f32 %v3091, 0.5
        %v3166 = vmul.f32 %v3094, 0.5
        %v3167 = vmul.f32 %v3096, 0.5
        %v3168 = vmul.f32 %v3099, 0.5
        %v3169 = vmul.f32 %v3101, 0.5
        %v3170 = vmul.f32 %v3104, 0.5
        %v3171 = vmul.f32 %v3106, 0.5
        %v3172 = vmul.f32 %v3140, 1.442695
        %v3173 = vpow.pop %v3172
        %v3174 = vmul.f32 %v3141, 1.442695
        %v3175 = vpow.pop %v3174
        %v3176 = vmul.f32 %v3142, 1.442695
        %v3177 = vpow.pop %v3176
        %v3178 = vmul.f32 %v3143, 1.442695
        %v3179 = vpow.pop %v3178
        %v3180 = vmul.f32 %v3144, 1.442695
        %v3181 = vpow.pop %v3180
        %v3182 = vmul.f32 %v3145, 1.442695
        %v3183 = vpow.pop %v3182
        %v3184 = vmul.f32 %v3146, 1.442695
        %v3185 = vpow.pop %v3184
        %v3186 = vmul.f32 %v3147, 1.442695
        %v3187 = vpow.pop %v3186
        %v3188 = vmul.f32 %v3148, 1.442695
        %v3189 = vpow.pop %v3188
        %v3190 = vmul.f32 %v3149, 1.442695
        %v3191 = vpow.pop %v3190
        %v3192 = vmul.f32 %v3150, 1.442695
        %v3193 = vpow.pop %v3192
        %v3194 = vmul.f32 %v3151, 1.442695
        %v3195 = vpow.pop %v3194
        %v3196 = vmul.f32 %v3152, 1.442695
        %v3197 = vpow.pop %v3196
        %v3198 = vmul.f32 %v3153, 1.442695
        %v3199 = vpow.pop %v3198
        %v3200 = vmul.f32 %v3154, 1.442695
        %v3201 = vpow.pop %v3200
        %v3202 = vmul.f32 %v3155, 1.442695
        %v3203 = vpow.pop %v3202
        %v3204 = vmul.f32 %v3156, 1.442695
        %v3205 = vpow.pop %v3204
        %v3206 = vmul.f32 %v3157, 1.442695
        %v3207 = vpow.pop %v3206
        %v3208 = vmul.f32 %v3158, 1.442695
        %v3209 = vpow.pop %v3208
        %v3210 = vmul.f32 %v3159, 1.442695
        %v3211 = vpow.pop %v3210
        %v3212 = vmul.f32 %v3160, 1.442695
        %v3213 = vpow.pop %v3212
        %v3214 = vmul.f32 %v3161, 1.442695
        %v3215 = vpow.pop %v3214
        %v3216 = vmul.f32 %v3162, 1.442695
        %v3217 = vpow.pop %v3216
        %v3218 = vmul.f32 %v3163, 1.442695
        %v3219 = vpow.pop %v3218
        %v3220 = vmul.f32 %v3164, 1.442695
        %v3221 = vpow.pop %v3220
        %v3222 = vmul.f32 %v3165, 1.442695
        %v3223 = vpow.pop %v3222
        %v3224 = vmul.f32 %v3166, 1.442695
        %v3225 = vpow.pop %v3224
        %v3226 = vmul.f32 %v3167, 1.442695
        %v3227 = vpow.pop %v3226
        %v3228 = vmul.f32 %v3168, 1.442695
        %v3229 = vpow.pop %v3228
        %v3230 = vmul.f32 %v3169, 1.442695
        %v3231 = vpow.pop %v3230
        %v3232 = vmul.f32 %v3170, 1.442695
        %v3233 = vpow.pop %v3232
        %v3234 = vmul.f32 %v3171, 1.442695
        %v3235 = vpow.pop %v3234
        %v3236 = vmul.f32 %v3108, %v3173
        %v3237 = vmul.f32 %v3109, %v3175
        %v3238 = vmul.f32 %v3110, %v3177
        %v3239 = vmul.f32 %v3111, %v3179
        %v3240 = vmul.f32 %v3112, %v3181
        %v3241 = vmul.f32 %v3113, %v3183
        %v3242 = vmul.f32 %v3114, %v3185
        %v3243 = vmul.f32 %v3115, %v3187
        %v3244 = vmul.f32 %v3116, %v3189
        %v3245 = vmul.f32 %v3117, %v3191
        %v3246 = vmul.f32 %v3118, %v3193
        %v3247 = vmul.f32 %v3119, %v3195
        %v3248 = vmul.f32 %v3120, %v3197
        %v3249 = vmul.f32 %v3121, %v3199
        %v3250 = vmul.f32 %v3122, %v3201
        %v3251 = vmul.f32 %v3123, %v3203
        %v3252 = vmul.f32 %v3124, %v3205
        %v3253 = vmul.f32 %v3125, %v3207
        %v3254 = vmul.f32 %v3126, %v3209
        %v3255 = vmul.f32 %v3127, %v3211
        %v3256 = vmul.f32 %v3128, %v3213
        %v3257 = vmul.f32 %v3129, %v3215
        %v3258 = vmul.f32 %v3130, %v3217
        %v3259 = vmul.f32 %v3131, %v3219
        %v3260 = vmul.f32 %v3132, %v3221
        %v3261 = vmul.f32 %v3133, %v3223
        %v3262 = vmul.f32 %v3134, %v3225
        %v3263 = vmul.f32 %v3135, %v3227
        %v3264 = vmul.f32 %v3136, %v3229
        %v3265 = vmul.f32 %v3137, %v3231
        %v3266 = vmul.f32 %v3138, %v3233
        %v3267 = vmul.f32 %v3139, %v3235
        %v3268 = vadd.f32 %v2851, %v3236
        %v3269 = vadd.f32 %v2853, %v3237
        %v3270 = vadd.f32 %v2856, %v3238
        %v3271 = vadd.f32 %v2858, %v3239
        %v3272 = vadd.f32 %v2861, %v3240
        %v3273 = vadd.f32 %v2863, %v3241
        %v3274 = vadd.f32 %v2866, %v3242
        %v3275 = vadd.f32 %v2868, %v3243
        %v3276 = vadd.f32 %v2871, %v3244
        %v3277 = vadd.f32 %v2873, %v3245
        %v3278 = vadd.f32 %v2876, %v3246
        %v3279 = vadd.f32 %v2878, %v3247
        %v3280 = vadd.f32 %v2881, %v3248
        %v3281 = vadd.f32 %v2883, %v3249
        %v3282 = vadd.f32 %v2886, %v3250
        %v3283 = vadd.f32 %v2888, %v3251
        %v3284 = vadd.f32 %v2891, %v3252
        %v3285 = vadd.f32 %v2893, %v3253
        %v3286 = vadd.f32 %v2896, %v3254
        %v3287 = vadd.f32 %v2898, %v3255
        %v3288 = vadd.f32 %v2901, %v3256
        %v3289 = vadd.f32 %v2903, %v3257
        %v3290 = vadd.f32 %v2906, %v3258
        %v3291 = vadd.f32 %v2908, %v3259
        %v3292 = vadd.f32 %v2911, %v3260
        %v3293 = vadd.f32 %v2913, %v3261
        %v3294 = vadd.f32 %v2916, %v3262
        %v3295 = vadd.f32 %v2918, %v3263
        %v3296 = vadd.f32 %v2921, %v3264
        %v3297 = vadd.f32 %v2923, %v3265
        %v3298 = vadd.f32 %v2926, %v3266
        %v3299 = vadd.f32 %v2928, %v3267
        %v3300 = vpack.c.bf16 %v3269, %v3268
        %v3301 = vpack.c.bf16 %v3271, %v3270
        %v3302 = vpack.c.bf16 %v3273, %v3272
        %v3303 = vpack.c.bf16 %v3275, %v3274
        %v3304 = vpack.c.bf16 %v3277, %v3276
        %v3305 = vpack.c.bf16 %v3279, %v3278
        %v3306 = vpack.c.bf16 %v3281, %v3280
        %v3307 = vpack.c.bf16 %v3283, %v3282
        %v3308 = vpack.c.bf16 %v3285, %v3284
        %v3309 = vpack.c.bf16 %v3287, %v3286
        %v3310 = vpack.c.bf16 %v3289, %v3288
        %v3311 = vpack.c.bf16 %v3291, %v3290
        %v3312 = vpack.c.bf16 %v3293, %v3292
        %v3313 = vpack.c.bf16 %v3295, %v3294
        %v3314 = vpack.c.bf16 %v3297, %v3296
        %v3315 = vpack.c.bf16 %v3299, %v3298
        %v3316 = vld [vmem:[#allocation8 + $0x500] sm:$0xff]
        %v3317 = vld [vmem:[#allocation8 + $0x508] sm:$0xff]
        %v3318 = vld [vmem:[#allocation8 + $0x510] sm:$0xff]
        %v3319 = vld [vmem:[#allocation8 + $0x518] sm:$0xff]
        %v3320 = vld [vmem:[#allocation8 + $0x520] sm:$0xff]
        %v3321 = vld [vmem:[#allocation8 + $0x528] sm:$0xff]
        %v3322 = vld [vmem:[#allocation8 + $0x530] sm:$0xff]
        %v3323 = vld [vmem:[#allocation8 + $0x538] sm:$0xff]
        %v3324 = vld [vmem:[#allocation8 + $0x540] sm:$0xff]
        %v3325 = vld [vmem:[#allocation8 + $0x548] sm:$0xff]
        %v3326 = vld [vmem:[#allocation8 + $0x550] sm:$0xff]
        %v3327 = vld [vmem:[#allocation8 + $0x558] sm:$0xff]
        %v3328 = vld [vmem:[#allocation8 + $0x560] sm:$0xff]
        %v3329 = vld [vmem:[#allocation8 + $0x568] sm:$0xff]
        %v3330 = vld [vmem:[#allocation8 + $0x570] sm:$0xff]
        %v3331 = vld [vmem:[#allocation8 + $0x578] sm:$0xff]
        %v3332 = vld [vmem:[%s301] sm:$0xff]
        %v3333 = vld [vmem:[%s301 + $0x8] sm:$0xff]
        %v3334 = vld [vmem:[%s301 + $0x10] sm:$0xff]
        %v3335 = vld [vmem:[%s301 + $0x18] sm:$0xff]
        %v3336 = vld [vmem:[%s301 + $0x20] sm:$0xff]
        %v3337 = vld [vmem:[%s301 + $0x28] sm:$0xff]
        %v3338 = vld [vmem:[%s301 + $0x30] sm:$0xff]
        %v3339 = vld [vmem:[%s301 + $0x38] sm:$0xff]
        %v3340 = vld [vmem:[%s301 + $0x40] sm:$0xff]
        %v3341 = vld [vmem:[%s301 + $0x48] sm:$0xff]
        %v3342 = vld [vmem:[%s301 + $0x50] sm:$0xff]
        %v3343 = vld [vmem:[%s301 + $0x58] sm:$0xff]
        %v3344 = vld [vmem:[%s301 + $0x60] sm:$0xff]
        %v3345 = vld [vmem:[%s301 + $0x68] sm:$0xff]
        %v3346 = vld [vmem:[%s301 + $0x70] sm:$0xff]
        %v3347 = vld [vmem:[%s301 + $0x78] sm:$0xff]
        %v3348 = vld [vmem:[%s301 + $0x80] sm:$0xff]
        %v3349 = vld [vmem:[%s301 + $0x88] sm:$0xff]
        %v3350 = vld [vmem:[%s301 + $0x90] sm:$0xff]
        %v3351 = vld [vmem:[%s301 + $0x98] sm:$0xff]
        %v3352 = vld [vmem:[%s301 + $0xa0] sm:$0xff]
        %v3353 = vld [vmem:[%s301 + $0xa8] sm:$0xff]
        %v3354 = vld [vmem:[%s301 + $0xb0] sm:$0xff]
        %v3355 = vld [vmem:[%s301 + $0xb8] sm:$0xff]
        %v3356 = vld [vmem:[%s301 + $0xc0] sm:$0xff]
        %v3357 = vld [vmem:[%s301 + $0xc8] sm:$0xff]
        %v3358 = vld [vmem:[%s301 + $0xd0] sm:$0xff]
        %v3359 = vld [vmem:[%s301 + $0xd8] sm:$0xff]
        %v3360 = vld [vmem:[%s301 + $0xe0] sm:$0xff]
        %v3361 = vld [vmem:[%s301 + $0xe8] sm:$0xff]
        %v3362 = vld [vmem:[%s301 + $0xf0] sm:$0xff]
        %v3363 = vld [vmem:[%s301 + $0xf8] sm:$0xff]
        %v3364 = vpack.c.bf16 %v3333, %v3332
        %v3365 = vpack.c.bf16 %v3335, %v3334
        %v3366 = vpack.c.bf16 %v3337, %v3336
        %v3367 = vpack.c.bf16 %v3339, %v3338
        %v3368 = vpack.c.bf16 %v3341, %v3340
        %v3369 = vpack.c.bf16 %v3343, %v3342
        %v3370 = vpack.c.bf16 %v3345, %v3344
        %v3371 = vpack.c.bf16 %v3347, %v3346
        %v3372 = vpack.c.bf16 %v3349, %v3348
        %v3373 = vpack.c.bf16 %v3351, %v3350
        %v3374 = vpack.c.bf16 %v3353, %v3352
        %v3375 = vpack.c.bf16 %v3355, %v3354
        %v3376 = vpack.c.bf16 %v3357, %v3356
        %v3377 = vpack.c.bf16 %v3359, %v3358
        %v3378 = vpack.c.bf16 %v3361, %v3360
        %v3379 = vpack.c.bf16 %v3363, %v3362
        %v3380 = vld [vmem:[#allocation8 + $0x580] sm:$0xff]
        %v3381 = vld [vmem:[#allocation8 + $0x588] sm:$0xff]
        %v3382 = vld [vmem:[#allocation8 + $0x590] sm:$0xff]
        %v3383 = vld [vmem:[#allocation8 + $0x598] sm:$0xff]
        %v3384 = vld [vmem:[#allocation8 + $0x5a0] sm:$0xff]
        %v3385 = vld [vmem:[#allocation8 + $0x5a8] sm:$0xff]
        %v3386 = vld [vmem:[#allocation8 + $0x5b0] sm:$0xff]
        %v3387 = vld [vmem:[#allocation8 + $0x5b8] sm:$0xff]
        %v3388 = vld [vmem:[#allocation8 + $0x5c0] sm:$0xff]
        %v3389 = vld [vmem:[#allocation8 + $0x5c8] sm:$0xff]
        %v3390 = vld [vmem:[#allocation8 + $0x5d0] sm:$0xff]
        %v3391 = vld [vmem:[#allocation8 + $0x5d8] sm:$0xff]
        %v3392 = vld [vmem:[#allocation8 + $0x5e0] sm:$0xff]
        %v3393 = vld [vmem:[#allocation8 + $0x5e8] sm:$0xff]
        %v3394 = vld [vmem:[#allocation8 + $0x5f0] sm:$0xff]
        %v3395 = vld [vmem:[#allocation8 + $0x5f8] sm:$0xff]
        %v3412 = vunpack.c.l.b16 %v3380
        %v3413 = vunpack.c.h.b16 %v3380
        %v3414 = vunpack.c.l.b16 %v3381
        %v3415 = vunpack.c.h.b16 %v3381
        %v3416 = vunpack.c.l.b16 %v3382
        %v3417 = vunpack.c.h.b16 %v3382
        %v3418 = vunpack.c.l.b16 %v3383
        %v3419 = vunpack.c.h.b16 %v3383
        %v3420 = vunpack.c.l.b16 %v3384
        %v3421 = vunpack.c.h.b16 %v3384
        %v3422 = vunpack.c.l.b16 %v3385
        %v3423 = vunpack.c.h.b16 %v3385
        %v3424 = vunpack.c.l.b16 %v3386
        %v3425 = vunpack.c.h.b16 %v3386
        %v3426 = vunpack.c.l.b16 %v3387
        %v3427 = vunpack.c.h.b16 %v3387
        %v3428 = vunpack.c.l.b16 %v3388
        %v3429 = vunpack.c.h.b16 %v3388
        %v3430 = vunpack.c.l.b16 %v3389
        %v3431 = vunpack.c.h.b16 %v3389
        %v3432 = vunpack.c.l.b16 %v3390
        %v3433 = vunpack.c.h.b16 %v3390
        %v3434 = vunpack.c.l.b16 %v3391
        %v3435 = vunpack.c.h.b16 %v3391
        %v3436 = vunpack.c.l.b16 %v3392
        %v3437 = vunpack.c.h.b16 %v3392
        %v3438 = vunpack.c.l.b16 %v3393
        %v3439 = vunpack.c.h.b16 %v3393
        %v3440 = vunpack.c.l.b16 %v3394
        %v3441 = vunpack.c.h.b16 %v3394
        %v3442 = vunpack.c.l.b16 %v3395
        %v3443 = vunpack.c.h.b16 %v3395
        %v3444 = vpack.c.b16 %v3414, %v3412
        %v3445 = vpack.c.b16 %v3415, %v3413
        %v3446 = vpack.c.b16 %v3418, %v3416
        %v3447 = vpack.c.b16 %v3419, %v3417
        %v3448 = vpack.c.b16 %v3422, %v3420
        %v3449 = vpack.c.b16 %v3423, %v3421
        %v3450 = vpack.c.b16 %v3426, %v3424
        %v3451 = vpack.c.b16 %v3427, %v3425
        %v3452 = vpack.c.b16 %v3430, %v3428
        %v3453 = vpack.c.b16 %v3431, %v3429
        %v3454 = vpack.c.b16 %v3434, %v3432
        %v3455 = vpack.c.b16 %v3435, %v3433
        %v3456 = vpack.c.b16 %v3438, %v3436
        %v3457 = vpack.c.b16 %v3439, %v3437
        %v3458 = vpack.c.b16 %v3442, %v3440
        %v3459 = vpack.c.b16 %v3443, %v3441
        %3476 = vmatpush.bf16.msra.mxu0 %v3458
        %3477 = vmatpush.bf16.msra.mxu0 %v3456
        %3478 = vmatpush.bf16.msra.mxu0 %v3454
        %3479 = vmatpush.bf16.msra.mxu0 %v3452
        %3480 = vmatpush.bf16.msra.mxu0 %v3450
        %3481 = vmatpush.bf16.msra.mxu0 %v3448
        %3482 = vmatpush.bf16.msra.mxu0 %v3446
        %3483 = vmatpush.bf16.msra.mxu0 %v3444
        %3484 = vmatmul.bf16.gmra.mxu0 %v3364
        %v3485 = vpop.f32.mrf.mxu0
        %v3486 = vadd.f32 0.0, %v3485
        %v3487 = vpop.f32.mrf.mxu0
        %v3488 = vadd.f32 0.0, %v3487
        %3489 = vmatmul.bf16.gmra.mxu0 %v3365
        %v3490 = vpop.f32.mrf.mxu0
        %v3491 = vadd.f32 0.0, %v3490
        %v3492 = vpop.f32.mrf.mxu0
        %v3493 = vadd.f32 0.0, %v3492
        %3494 = vmatmul.bf16.gmra.mxu0 %v3366
        %v3495 = vpop.f32.mrf.mxu0
        %v3496 = vadd.f32 0.0, %v3495
        %v3497 = vpop.f32.mrf.mxu0
        %v3498 = vadd.f32 0.0, %v3497
        %3499 = vmatmul.bf16.gmra.mxu0 %v3367
        %v3500 = vpop.f32.mrf.mxu0
        %v3501 = vadd.f32 0.0, %v3500
        %v3502 = vpop.f32.mrf.mxu0
        %v3503 = vadd.f32 0.0, %v3502
        %3504 = vmatmul.bf16.gmra.mxu0 %v3368
        %v3505 = vpop.f32.mrf.mxu0
        %v3506 = vadd.f32 0.0, %v3505
        %v3507 = vpop.f32.mrf.mxu0
        %v3508 = vadd.f32 0.0, %v3507
        %3509 = vmatmul.bf16.gmra.mxu0 %v3369
        %v3510 = vpop.f32.mrf.mxu0
        %v3511 = vadd.f32 0.0, %v3510
        %v3512 = vpop.f32.mrf.mxu0
        %v3513 = vadd.f32 0.0, %v3512
        %3514 = vmatmul.bf16.gmra.mxu0 %v3370
        %v3515 = vpop.f32.mrf.mxu0
        %v3516 = vadd.f32 0.0, %v3515
        %v3517 = vpop.f32.mrf.mxu0
        %v3518 = vadd.f32 0.0, %v3517
        %3519 = vmatmul.bf16.gmra.mxu0 %v3371
        %v3520 = vpop.f32.mrf.mxu0
        %v3521 = vadd.f32 0.0, %v3520
        %v3522 = vpop.f32.mrf.mxu0
        %v3523 = vadd.f32 0.0, %v3522
        %3524 = vmatmul.bf16.gmra.mxu0 %v3372
        %v3525 = vpop.f32.mrf.mxu0
        %v3526 = vadd.f32 0.0, %v3525
        %v3527 = vpop.f32.mrf.mxu0
        %v3528 = vadd.f32 0.0, %v3527
        %3529 = vmatmul.bf16.gmra.mxu0 %v3373
        %v3530 = vpop.f32.mrf.mxu0
        %v3531 = vadd.f32 0.0, %v3530
        %v3532 = vpop.f32.mrf.mxu0
        %v3533 = vadd.f32 0.0, %v3532
        %3534 = vmatmul.bf16.gmra.mxu0 %v3374
        %v3535 = vpop.f32.mrf.mxu0
        %v3536 = vadd.f32 0.0, %v3535
        %v3537 = vpop.f32.mrf.mxu0
        %v3538 = vadd.f32 0.0, %v3537
        %3539 = vmatmul.bf16.gmra.mxu0 %v3375
        %v3540 = vpop.f32.mrf.mxu0
        %v3541 = vadd.f32 0.0, %v3540
        %v3542 = vpop.f32.mrf.mxu0
        %v3543 = vadd.f32 0.0, %v3542
        %3544 = vmatmul.bf16.gmra.mxu0 %v3376
        %v3545 = vpop.f32.mrf.mxu0
        %v3546 = vadd.f32 0.0, %v3545
        %v3547 = vpop.f32.mrf.mxu0
        %v3548 = vadd.f32 0.0, %v3547
        %3549 = vmatmul.bf16.gmra.mxu0 %v3377
        %v3550 = vpop.f32.mrf.mxu0
        %v3551 = vadd.f32 0.0, %v3550
        %v3552 = vpop.f32.mrf.mxu0
        %v3553 = vadd.f32 0.0, %v3552
        %3554 = vmatmul.bf16.gmra.mxu0 %v3378
        %v3555 = vpop.f32.mrf.mxu0
        %v3556 = vadd.f32 0.0, %v3555
        %v3557 = vpop.f32.mrf.mxu0
        %v3558 = vadd.f32 0.0, %v3557
        %3559 = vmatmul.bf16.gmra.mxu0 %v3379
        %v3560 = vpop.f32.mrf.mxu0
        %v3561 = vadd.f32 0.0, %v3560
        %v3562 = vpop.f32.mrf.mxu0
        %v3563 = vadd.f32 0.0, %v3562
        %3564 = vdwg.mxu0
        %3565 = vmatpush.bf16.msra.mxu0 %v3459
        %3566 = vmatpush.bf16.msra.mxu0 %v3457
        %3567 = vmatpush.bf16.msra.mxu0 %v3455
        %3568 = vmatpush.bf16.msra.mxu0 %v3453
        %3569 = vmatpush.bf16.msra.mxu0 %v3451
        %3570 = vmatpush.bf16.msra.mxu0 %v3449
        %3571 = vmatpush.bf16.msra.mxu0 %v3447
        %3572 = vmatpush.bf16.msra.mxu0 %v3445
        %3573 = vmatmul.bf16.gmra.mxu0 %v3364
        %v3574 = vpop.f32.mrf.mxu0
        %v3575 = vadd.f32 0.0, %v3574
        %v3576 = vpop.f32.mrf.mxu0
        %v3577 = vadd.f32 0.0, %v3576
        %3578 = vmatmul.bf16.gmra.mxu0 %v3365
        %v3579 = vpop.f32.mrf.mxu0
        %v3580 = vadd.f32 0.0, %v3579
        %v3581 = vpop.f32.mrf.mxu0
        %v3582 = vadd.f32 0.0, %v3581
        %3583 = vmatmul.bf16.gmra.mxu0 %v3366
        %v3584 = vpop.f32.mrf.mxu0
        %v3585 = vadd.f32 0.0, %v3584
        %v3586 = vpop.f32.mrf.mxu0
        %v3587 = vadd.f32 0.0, %v3586
        %3588 = vmatmul.bf16.gmra.mxu0 %v3367
        %v3589 = vpop.f32.mrf.mxu0
        %v3590 = vadd.f32 0.0, %v3589
        %v3591 = vpop.f32.mrf.mxu0
        %v3592 = vadd.f32 0.0, %v3591
        %3593 = vmatmul.bf16.gmra.mxu0 %v3368
        %v3594 = vpop.f32.mrf.mxu0
        %v3595 = vadd.f32 0.0, %v3594
        %v3596 = vpop.f32.mrf.mxu0
        %v3597 = vadd.f32 0.0, %v3596
        %3598 = vmatmul.bf16.gmra.mxu0 %v3369
        %v3599 = vpop.f32.mrf.mxu0
        %v3600 = vadd.f32 0.0, %v3599
        %v3601 = vpop.f32.mrf.mxu0
        %v3602 = vadd.f32 0.0, %v3601
        %3603 = vmatmul.bf16.gmra.mxu0 %v3370
        %v3604 = vpop.f32.mrf.mxu0
        %v3605 = vadd.f32 0.0, %v3604
        %v3606 = vpop.f32.mrf.mxu0
        %v3607 = vadd.f32 0.0, %v3606
        %3608 = vmatmul.bf16.gmra.mxu0 %v3371
        %v3609 = vpop.f32.mrf.mxu0
        %v3610 = vadd.f32 0.0, %v3609
        %v3611 = vpop.f32.mrf.mxu0
        %v3612 = vadd.f32 0.0, %v3611
        %3613 = vmatmul.bf16.gmra.mxu0 %v3372
        %v3614 = vpop.f32.mrf.mxu0
        %v3615 = vadd.f32 0.0, %v3614
        %v3616 = vpop.f32.mrf.mxu0
        %v3617 = vadd.f32 0.0, %v3616
        %3618 = vmatmul.bf16.gmra.mxu0 %v3373
        %v3619 = vpop.f32.mrf.mxu0
        %v3620 = vadd.f32 0.0, %v3619
        %v3621 = vpop.f32.mrf.mxu0
        %v3622 = vadd.f32 0.0, %v3621
        %3623 = vmatmul.bf16.gmra.mxu0 %v3374
        %v3624 = vpop.f32.mrf.mxu0
        %v3625 = vadd.f32 0.0, %v3624
        %v3626 = vpop.f32.mrf.mxu0
        %v3627 = vadd.f32 0.0, %v3626
        %3628 = vmatmul.bf16.gmra.mxu0 %v3375
        %v3629 = vpop.f32.mrf.mxu0
        %v3630 = vadd.f32 0.0, %v3629
        %v3631 = vpop.f32.mrf.mxu0
        %v3632 = vadd.f32 0.0, %v3631
        %3633 = vmatmul.bf16.gmra.mxu0 %v3376
        %v3634 = vpop.f32.mrf.mxu0
        %v3635 = vadd.f32 0.0, %v3634
        %v3636 = vpop.f32.mrf.mxu0
        %v3637 = vadd.f32 0.0, %v3636
        %3638 = vmatmul.bf16.gmra.mxu0 %v3377
        %v3639 = vpop.f32.mrf.mxu0
        %v3640 = vadd.f32 0.0, %v3639
        %v3641 = vpop.f32.mrf.mxu0
        %v3642 = vadd.f32 0.0, %v3641
        %3643 = vmatmul.bf16.gmra.mxu0 %v3378
        %v3644 = vpop.f32.mrf.mxu0
        %v3645 = vadd.f32 0.0, %v3644
        %v3646 = vpop.f32.mrf.mxu0
        %v3647 = vadd.f32 0.0, %v3646
        %3648 = vmatmul.bf16.gmra.mxu0 %v3379
        %v3649 = vpop.f32.mrf.mxu0
        %v3650 = vadd.f32 0.0, %v3649
        %v3651 = vpop.f32.mrf.mxu0
        %v3652 = vadd.f32 0.0, %v3651
        %3653 = vdwg.mxu0
        %v3670 = vunpack.c.l.b16 %v3316
        %v3671 = vunpack.c.h.b16 %v3316
        %v3672 = vunpack.c.l.b16 %v3317
        %v3673 = vunpack.c.h.b16 %v3317
        %v3674 = vunpack.c.l.b16 %v3318
        %v3675 = vunpack.c.h.b16 %v3318
        %v3676 = vunpack.c.l.b16 %v3319
        %v3677 = vunpack.c.h.b16 %v3319
        %v3678 = vunpack.c.l.b16 %v3320
        %v3679 = vunpack.c.h.b16 %v3320
        %v3680 = vunpack.c.l.b16 %v3321
        %v3681 = vunpack.c.h.b16 %v3321
        %v3682 = vunpack.c.l.b16 %v3322
        %v3683 = vunpack.c.h.b16 %v3322
        %v3684 = vunpack.c.l.b16 %v3323
        %v3685 = vunpack.c.h.b16 %v3323
        %v3686 = vunpack.c.l.b16 %v3324
        %v3687 = vunpack.c.h.b16 %v3324
        %v3688 = vunpack.c.l.b16 %v3325
        %v3689 = vunpack.c.h.b16 %v3325
        %v3690 = vunpack.c.l.b16 %v3326
        %v3691 = vunpack.c.h.b16 %v3326
        %v3692 = vunpack.c.l.b16 %v3327
        %v3693 = vunpack.c.h.b16 %v3327
        %v3694 = vunpack.c.l.b16 %v3328
        %v3695 = vunpack.c.h.b16 %v3328
        %v3696 = vunpack.c.l.b16 %v3329
        %v3697 = vunpack.c.h.b16 %v3329
        %v3698 = vunpack.c.l.b16 %v3330
        %v3699 = vunpack.c.h.b16 %v3330
        %v3700 = vunpack.c.l.b16 %v3331
        %v3701 = vunpack.c.h.b16 %v3331
        %v3702 = vpack.c.b16 %v3672, %v3670
        %v3703 = vpack.c.b16 %v3673, %v3671
        %v3704 = vpack.c.b16 %v3676, %v3674
        %v3705 = vpack.c.b16 %v3677, %v3675
        %v3706 = vpack.c.b16 %v3680, %v3678
        %v3707 = vpack.c.b16 %v3681, %v3679
        %v3708 = vpack.c.b16 %v3684, %v3682
        %v3709 = vpack.c.b16 %v3685, %v3683
        %v3710 = vpack.c.b16 %v3688, %v3686
        %v3711 = vpack.c.b16 %v3689, %v3687
        %v3712 = vpack.c.b16 %v3692, %v3690
        %v3713 = vpack.c.b16 %v3693, %v3691
        %v3714 = vpack.c.b16 %v3696, %v3694
        %v3715 = vpack.c.b16 %v3697, %v3695
        %v3716 = vpack.c.b16 %v3700, %v3698
        %v3717 = vpack.c.b16 %v3701, %v3699
        %3734 = vmatpush.bf16.msra.mxu0 %v3716
        %3735 = vmatpush.bf16.msra.mxu0 %v3714
        %3736 = vmatpush.bf16.msra.mxu0 %v3712
        %3737 = vmatpush.bf16.msra.mxu0 %v3710
        %3738 = vmatpush.bf16.msra.mxu0 %v3708
        %3739 = vmatpush.bf16.msra.mxu0 %v3706
        %3740 = vmatpush.bf16.msra.mxu0 %v3704
        %3741 = vmatpush.bf16.msra.mxu0 %v3702
        %3742 = vmatmul.bf16.gmra.mxu0 %v3300
        %v3743 = vpop.f32.mrf.mxu0
        %v3744 = vadd.f32 %v3486, %v3743
        %v3745 = vpop.f32.mrf.mxu0
        %v3746 = vadd.f32 %v3488, %v3745
        %3747 = vmatmul.bf16.gmra.mxu0 %v3301
        %v3748 = vpop.f32.mrf.mxu0
        %v3749 = vadd.f32 %v3491, %v3748
        %v3750 = vpop.f32.mrf.mxu0
        %v3751 = vadd.f32 %v3493, %v3750
        %3752 = vmatmul.bf16.gmra.mxu0 %v3302
        %v3753 = vpop.f32.mrf.mxu0
        %v3754 = vadd.f32 %v3496, %v3753
        %v3755 = vpop.f32.mrf.mxu0
        %v3756 = vadd.f32 %v3498, %v3755
        %3757 = vmatmul.bf16.gmra.mxu0 %v3303
        %v3758 = vpop.f32.mrf.mxu0
        %v3759 = vadd.f32 %v3501, %v3758
        %v3760 = vpop.f32.mrf.mxu0
        %v3761 = vadd.f32 %v3503, %v3760
        %3762 = vmatmul.bf16.gmra.mxu0 %v3304
        %v3763 = vpop.f32.mrf.mxu0
        %v3764 = vadd.f32 %v3506, %v3763
        %v3765 = vpop.f32.mrf.mxu0
        %v3766 = vadd.f32 %v3508, %v3765
        %3767 = vmatmul.bf16.gmra.mxu0 %v3305
        %v3768 = vpop.f32.mrf.mxu0
        %v3769 = vadd.f32 %v3511, %v3768
        %v3770 = vpop.f32.mrf.mxu0
        %v3771 = vadd.f32 %v3513, %v3770
        %3772 = vmatmul.bf16.gmra.mxu0 %v3306
        %v3773 = vpop.f32.mrf.mxu0
        %v3774 = vadd.f32 %v3516, %v3773
        %v3775 = vpop.f32.mrf.mxu0
        %v3776 = vadd.f32 %v3518, %v3775
        %3777 = vmatmul.bf16.gmra.mxu0 %v3307
        %v3778 = vpop.f32.mrf.mxu0
        %v3779 = vadd.f32 %v3521, %v3778
        %v3780 = vpop.f32.mrf.mxu0
        %v3781 = vadd.f32 %v3523, %v3780
        %3782 = vmatmul.bf16.gmra.mxu0 %v3308
        %v3783 = vpop.f32.mrf.mxu0
        %v3784 = vadd.f32 %v3526, %v3783
        %v3785 = vpop.f32.mrf.mxu0
        %v3786 = vadd.f32 %v3528, %v3785
        %3787 = vmatmul.bf16.gmra.mxu0 %v3309
        %v3788 = vpop.f32.mrf.mxu0
        %v3789 = vadd.f32 %v3531, %v3788
        %v3790 = vpop.f32.mrf.mxu0
        %v3791 = vadd.f32 %v3533, %v3790
        %3792 = vmatmul.bf16.gmra.mxu0 %v3310
        %v3793 = vpop.f32.mrf.mxu0
        %v3794 = vadd.f32 %v3536, %v3793
        %v3795 = vpop.f32.mrf.mxu0
        %v3796 = vadd.f32 %v3538, %v3795
        %3797 = vmatmul.bf16.gmra.mxu0 %v3311
        %v3798 = vpop.f32.mrf.mxu0
        %v3799 = vadd.f32 %v3541, %v3798
        %v3800 = vpop.f32.mrf.mxu0
        %v3801 = vadd.f32 %v3543, %v3800
        %3802 = vmatmul.bf16.gmra.mxu0 %v3312
        %v3803 = vpop.f32.mrf.mxu0
        %v3804 = vadd.f32 %v3546, %v3803
        %v3805 = vpop.f32.mrf.mxu0
        %v3806 = vadd.f32 %v3548, %v3805
        %3807 = vmatmul.bf16.gmra.mxu0 %v3313
        %v3808 = vpop.f32.mrf.mxu0
        %v3809 = vadd.f32 %v3551, %v3808
        %v3810 = vpop.f32.mrf.mxu0
        %v3811 = vadd.f32 %v3553, %v3810
        %3812 = vmatmul.bf16.gmra.mxu0 %v3314
        %v3813 = vpop.f32.mrf.mxu0
        %v3814 = vadd.f32 %v3556, %v3813
        %v3815 = vpop.f32.mrf.mxu0
        %v3816 = vadd.f32 %v3558, %v3815
        %3817 = vmatmul.bf16.gmra.mxu0 %v3315
        %v3818 = vpop.f32.mrf.mxu0
        %v3819 = vadd.f32 %v3561, %v3818
        %v3820 = vpop.f32.mrf.mxu0
        %v3821 = vadd.f32 %v3563, %v3820
        %3822 = vdwg.mxu0
        %3823 = vmatpush.bf16.msra.mxu0 %v3717
        %3824 = vmatpush.bf16.msra.mxu0 %v3715
        %3825 = vmatpush.bf16.msra.mxu0 %v3713
        %3826 = vmatpush.bf16.msra.mxu0 %v3711
        %3827 = vmatpush.bf16.msra.mxu0 %v3709
        %3828 = vmatpush.bf16.msra.mxu0 %v3707
        %3829 = vmatpush.bf16.msra.mxu0 %v3705
        %3830 = vmatpush.bf16.msra.mxu0 %v3703
        %3831 = vmatmul.bf16.gmra.mxu0 %v3300
        %v3832 = vpop.f32.mrf.mxu0
        %v3833 = vadd.f32 %v3575, %v3832
        %v3834 = vpop.f32.mrf.mxu0
        %v3835 = vadd.f32 %v3577, %v3834
        %3836 = vmatmul.bf16.gmra.mxu0 %v3301
        %v3837 = vpop.f32.mrf.mxu0
        %v3838 = vadd.f32 %v3580, %v3837
        %v3839 = vpop.f32.mrf.mxu0
        %v3840 = vadd.f32 %v3582, %v3839
        %3841 = vmatmul.bf16.gmra.mxu0 %v3302
        %v3842 = vpop.f32.mrf.mxu0
        %v3843 = vadd.f32 %v3585, %v3842
        %v3844 = vpop.f32.mrf.mxu0
        %v3845 = vadd.f32 %v3587, %v3844
        %3846 = vmatmul.bf16.gmra.mxu0 %v3303
        %v3847 = vpop.f32.mrf.mxu0
        %v3848 = vadd.f32 %v3590, %v3847
        %v3849 = vpop.f32.mrf.mxu0
        %v3850 = vadd.f32 %v3592, %v3849
        %3851 = vmatmul.bf16.gmra.mxu0 %v3304
        %v3852 = vpop.f32.mrf.mxu0
        %v3853 = vadd.f32 %v3595, %v3852
        %v3854 = vpop.f32.mrf.mxu0
        %v3855 = vadd.f32 %v3597, %v3854
        %3856 = vmatmul.bf16.gmra.mxu0 %v3305
        %v3857 = vpop.f32.mrf.mxu0
        %v3858 = vadd.f32 %v3600, %v3857
        %v3859 = vpop.f32.mrf.mxu0
        %v3860 = vadd.f32 %v3602, %v3859
        %3861 = vmatmul.bf16.gmra.mxu0 %v3306
        %v3862 = vpop.f32.mrf.mxu0
        %v3863 = vadd.f32 %v3605, %v3862
        %v3864 = vpop.f32.mrf.mxu0
        %v3865 = vadd.f32 %v3607, %v3864
        %3866 = vmatmul.bf16.gmra.mxu0 %v3307
        %v3867 = vpop.f32.mrf.mxu0
        %v3868 = vadd.f32 %v3610, %v3867
        %v3869 = vpop.f32.mrf.mxu0
        %v3870 = vadd.f32 %v3612, %v3869
        %3871 = vmatmul.bf16.gmra.mxu0 %v3308
        %v3872 = vpop.f32.mrf.mxu0
        %v3873 = vadd.f32 %v3615, %v3872
        %v3874 = vpop.f32.mrf.mxu0
        %v3875 = vadd.f32 %v3617, %v3874
        %3876 = vmatmul.bf16.gmra.mxu0 %v3309
        %v3877 = vpop.f32.mrf.mxu0
        %v3878 = vadd.f32 %v3620, %v3877
        %v3879 = vpop.f32.mrf.mxu0
        %v3880 = vadd.f32 %v3622, %v3879
        %3881 = vmatmul.bf16.gmra.mxu0 %v3310
        %v3882 = vpop.f32.mrf.mxu0
        %v3883 = vadd.f32 %v3625, %v3882
        %v3884 = vpop.f32.mrf.mxu0
        %v3885 = vadd.f32 %v3627, %v3884
        %3886 = vmatmul.bf16.gmra.mxu0 %v3311
        %v3887 = vpop.f32.mrf.mxu0
        %v3888 = vadd.f32 %v3630, %v3887
        %v3889 = vpop.f32.mrf.mxu0
        %v3890 = vadd.f32 %v3632, %v3889
        %3891 = vmatmul.bf16.gmra.mxu0 %v3312
        %v3892 = vpop.f32.mrf.mxu0
        %v3893 = vadd.f32 %v3635, %v3892
        %v3894 = vpop.f32.mrf.mxu0
        %v3895 = vadd.f32 %v3637, %v3894
        %3896 = vmatmul.bf16.gmra.mxu0 %v3313
        %v3897 = vpop.f32.mrf.mxu0
        %v3898 = vadd.f32 %v3640, %v3897
        %v3899 = vpop.f32.mrf.mxu0
        %v3900 = vadd.f32 %v3642, %v3899
        %3901 = vmatmul.bf16.gmra.mxu0 %v3314
        %v3902 = vpop.f32.mrf.mxu0
        %v3903 = vadd.f32 %v3645, %v3902
        %v3904 = vpop.f32.mrf.mxu0
        %v3905 = vadd.f32 %v3647, %v3904
        %3906 = vmatmul.bf16.gmra.mxu0 %v3315
        %v3907 = vpop.f32.mrf.mxu0
        %v3908 = vadd.f32 %v3650, %v3907
        %v3909 = vpop.f32.mrf.mxu0
        %v3910 = vadd.f32 %v3652, %v3909
        %3911 = vdwg.mxu0
        %s3912 = scalar_lea.vmem [#allocation10], 112
        %v3913 = vld [vmem:[%s3912] ss:$8 sm:$0x3]
        %v3915 = vperm.slane %v3913, 0
        %v3916 = vperm.slane %v3913, 1
        %v3919 = vadd.f32 %v3744, %v3915
        %v3920 = vadd.f32 %v3833, %v3916
        %v3921 = vadd.f32 %v3746, %v3915
        %v3922 = vadd.f32 %v3835, %v3916
        %v3923 = vadd.f32 %v3749, %v3915
        %v3924 = vadd.f32 %v3838, %v3916
        %v3925 = vadd.f32 %v3751, %v3915
        %v3926 = vadd.f32 %v3840, %v3916
        %v3927 = vadd.f32 %v3754, %v3915
        %v3928 = vadd.f32 %v3843, %v3916
        %v3929 = vadd.f32 %v3756, %v3915
        %v3930 = vadd.f32 %v3845, %v3916
        %v3931 = vadd.f32 %v3759, %v3915
        %v3932 = vadd.f32 %v3848, %v3916
        %v3933 = vadd.f32 %v3761, %v3915
        %v3934 = vadd.f32 %v3850, %v3916
        %v3935 = vadd.f32 %v3764, %v3915
        %v3936 = vadd.f32 %v3853, %v3916
        %v3937 = vadd.f32 %v3766, %v3915
        %v3938 = vadd.f32 %v3855, %v3916
        %v3939 = vadd.f32 %v3769, %v3915
        %v3940 = vadd.f32 %v3858, %v3916
        %v3941 = vadd.f32 %v3771, %v3915
        %v3942 = vadd.f32 %v3860, %v3916
        %v3943 = vadd.f32 %v3774, %v3915
        %v3944 = vadd.f32 %v3863, %v3916
        %v3945 = vadd.f32 %v3776, %v3915
        %v3946 = vadd.f32 %v3865, %v3916
        %v3947 = vadd.f32 %v3779, %v3915
        %v3948 = vadd.f32 %v3868, %v3916
        %v3949 = vadd.f32 %v3781, %v3915
        %v3950 = vadd.f32 %v3870, %v3916
        %v3951 = vadd.f32 %v3784, %v3915
        %v3952 = vadd.f32 %v3873, %v3916
        %v3953 = vadd.f32 %v3786, %v3915
        %v3954 = vadd.f32 %v3875, %v3916
        %v3955 = vadd.f32 %v3789, %v3915
        %v3956 = vadd.f32 %v3878, %v3916
        %v3957 = vadd.f32 %v3791, %v3915
        %v3958 = vadd.f32 %v3880, %v3916
        %v3959 = vadd.f32 %v3794, %v3915
        %v3960 = vadd.f32 %v3883, %v3916
        %v3961 = vadd.f32 %v3796, %v3915
        %v3962 = vadd.f32 %v3885, %v3916
        %v3963 = vadd.f32 %v3799, %v3915
        %v3964 = vadd.f32 %v3888, %v3916
        %v3965 = vadd.f32 %v3801, %v3915
        %v3966 = vadd.f32 %v3890, %v3916
        %v3967 = vadd.f32 %v3804, %v3915
        %v3968 = vadd.f32 %v3893, %v3916
        %v3969 = vadd.f32 %v3806, %v3915
        %v3970 = vadd.f32 %v3895, %v3916
        %v3971 = vadd.f32 %v3809, %v3915
        %v3972 = vadd.f32 %v3898, %v3916
        %v3973 = vadd.f32 %v3811, %v3915
        %v3974 = vadd.f32 %v3900, %v3916
        %v3975 = vadd.f32 %v3814, %v3915
        %v3976 = vadd.f32 %v3903, %v3916
        %v3977 = vadd.f32 %v3816, %v3915
        %v3978 = vadd.f32 %v3905, %v3916
        %v3979 = vadd.f32 %v3819, %v3915
        %v3980 = vadd.f32 %v3908, %v3916
        %v3981 = vadd.f32 %v3821, %v3915
        %v3982 = vadd.f32 %v3910, %v3916
        %v3983 = vmax.f32 %v3919, 0.0
        %v3984 = vmax.f32 %v3920, 0.0
        %v3985 = vmax.f32 %v3921, 0.0
        %v3986 = vmax.f32 %v3922, 0.0
        %v3987 = vmax.f32 %v3923, 0.0
        %v3988 = vmax.f32 %v3924, 0.0
        %v3989 = vmax.f32 %v3925, 0.0
        %v3990 = vmax.f32 %v3926, 0.0
        %v3991 = vmax.f32 %v3927, 0.0
        %v3992 = vmax.f32 %v3928, 0.0
        %v3993 = vmax.f32 %v3929, 0.0
        %v3994 = vmax.f32 %v3930, 0.0
        %v3995 = vmax.f32 %v3931, 0.0
        %v3996 = vmax.f32 %v3932, 0.0
        %v3997 = vmax.f32 %v3933, 0.0
        %v3998 = vmax.f32 %v3934, 0.0
        %v3999 = vmax.f32 %v3935, 0.0
        %v4000 = vmax.f32 %v3936, 0.0
        %v4001 = vmax.f32 %v3937, 0.0
        %v4002 = vmax.f32 %v3938, 0.0
        %v4003 = vmax.f32 %v3939, 0.0
        %v4004 = vmax.f32 %v3940, 0.0
        %v4005 = vmax.f32 %v3941, 0.0
        %v4006 = vmax.f32 %v3942, 0.0
        %v4007 = vmax.f32 %v3943, 0.0
        %v4008 = vmax.f32 %v3944, 0.0
        %v4009 = vmax.f32 %v3945, 0.0
        %v4010 = vmax.f32 %v3946, 0.0
        %v4011 = vmax.f32 %v3947, 0.0
        %v4012 = vmax.f32 %v3948, 0.0
        %v4013 = vmax.f32 %v3949, 0.0
        %v4014 = vmax.f32 %v3950, 0.0
        %v4015 = vmax.f32 %v3951, 0.0
        %v4016 = vmax.f32 %v3952, 0.0
        %v4017 = vmax.f32 %v3953, 0.0
        %v4018 = vmax.f32 %v3954, 0.0
        %v4019 = vmax.f32 %v3955, 0.0
        %v4020 = vmax.f32 %v3956, 0.0
        %v4021 = vmax.f32 %v3957, 0.0
        %v4022 = vmax.f32 %v3958, 0.0
        %v4023 = vmax.f32 %v3959, 0.0
        %v4024 = vmax.f32 %v3960, 0.0
        %v4025 = vmax.f32 %v3961, 0.0
        %v4026 = vmax.f32 %v3962, 0.0
        %v4027 = vmax.f32 %v3963, 0.0
        %v4028 = vmax.f32 %v3964, 0.0
        %v4029 = vmax.f32 %v3965, 0.0
        %v4030 = vmax.f32 %v3966, 0.0
        %v4031 = vmax.f32 %v3967, 0.0
        %v4032 = vmax.f32 %v3968, 0.0
        %v4033 = vmax.f32 %v3969, 0.0
        %v4034 = vmax.f32 %v3970, 0.0
        %v4035 = vmax.f32 %v3971, 0.0
        %v4036 = vmax.f32 %v3972, 0.0
        %v4037 = vmax.f32 %v3973, 0.0
        %v4038 = vmax.f32 %v3974, 0.0
        %v4039 = vmax.f32 %v3975, 0.0
        %v4040 = vmax.f32 %v3976, 0.0
        %v4041 = vmax.f32 %v3977, 0.0
        %v4042 = vmax.f32 %v3978, 0.0
        %v4043 = vmax.f32 %v3979, 0.0
        %v4044 = vmax.f32 %v3980, 0.0
        %v4045 = vmax.f32 %v3981, 0.0
        %v4046 = vmax.f32 %v3982, 0.0
        %v4047 = vpack.c.bf16 %v3985, %v3983
        %v4048 = vpack.c.bf16 %v3986, %v3984
        %v4049 = vpack.c.bf16 %v3989, %v3987
        %v4050 = vpack.c.bf16 %v3990, %v3988
        %v4051 = vpack.c.bf16 %v3993, %v3991
        %v4052 = vpack.c.bf16 %v3994, %v3992
        %v4053 = vpack.c.bf16 %v3997, %v3995
        %v4054 = vpack.c.bf16 %v3998, %v3996
        %v4055 = vpack.c.bf16 %v4001, %v3999
        %v4056 = vpack.c.bf16 %v4002, %v4000
        %v4057 = vpack.c.bf16 %v4005, %v4003
        %v4058 = vpack.c.bf16 %v4006, %v4004
        %v4059 = vpack.c.bf16 %v4009, %v4007
        %v4060 = vpack.c.bf16 %v4010, %v4008
        %v4061 = vpack.c.bf16 %v4013, %v4011
        %v4062 = vpack.c.bf16 %v4014, %v4012
        %v4063 = vpack.c.bf16 %v4017, %v4015
        %v4064 = vpack.c.bf16 %v4018, %v4016
        %v4065 = vpack.c.bf16 %v4021, %v4019
        %v4066 = vpack.c.bf16 %v4022, %v4020
        %v4067 = vpack.c.bf16 %v4025, %v4023
        %v4068 = vpack.c.bf16 %v4026, %v4024
        %v4069 = vpack.c.bf16 %v4029, %v4027
        %v4070 = vpack.c.bf16 %v4030, %v4028
        %v4071 = vpack.c.bf16 %v4033, %v4031
        %v4072 = vpack.c.bf16 %v4034, %v4032
        %v4073 = vpack.c.bf16 %v4037, %v4035
        %v4074 = vpack.c.bf16 %v4038, %v4036
        %v4075 = vpack.c.bf16 %v4041, %v4039
        %v4076 = vpack.c.bf16 %v4042, %v4040
        %v4077 = vpack.c.bf16 %v4045, %v4043
        %v4078 = vpack.c.bf16 %v4046, %v4044
        %v4079 = vld [vmem:[#allocation8 + $0x600] sm:$0xf]
        %v4080 = vld [vmem:[#allocation8 + $0x608] sm:$0xf]
        %v4081 = vld [vmem:[#allocation8 + $0x610] sm:$0xf]
        %v4082 = vld [vmem:[#allocation8 + $0x618] sm:$0xf]
        %v4083 = vld [vmem:[#allocation8 + $0x620] sm:$0xf]
        %v4084 = vld [vmem:[#allocation8 + $0x628] sm:$0xf]
        %v4085 = vld [vmem:[#allocation8 + $0x630] sm:$0xf]
        %v4086 = vld [vmem:[#allocation8 + $0x638] sm:$0xf]
        %v4087 = vld [vmem:[#allocation8 + $0x640] sm:$0xf]
        %v4088 = vld [vmem:[#allocation8 + $0x648] sm:$0xf]
        %v4089 = vld [vmem:[#allocation8 + $0x650] sm:$0xf]
        %v4090 = vld [vmem:[#allocation8 + $0x658] sm:$0xf]
        %v4091 = vld [vmem:[#allocation8 + $0x660] sm:$0xf]
        %v4092 = vld [vmem:[#allocation8 + $0x668] sm:$0xf]
        %v4093 = vld [vmem:[#allocation8 + $0x670] sm:$0xf]
        %v4094 = vld [vmem:[#allocation8 + $0x678] sm:$0xf]
        %v4095 = vld [vmem:[#allocation8 + $0x680] sm:$0xf]
        %v4096 = vld [vmem:[#allocation8 + $0x688] sm:$0xf]
        %v4097 = vld [vmem:[#allocation8 + $0x690] sm:$0xf]
        %v4098 = vld [vmem:[#allocation8 + $0x698] sm:$0xf]
        %v4099 = vld [vmem:[#allocation8 + $0x6a0] sm:$0xf]
        %v4100 = vld [vmem:[#allocation8 + $0x6a8] sm:$0xf]
        %v4101 = vld [vmem:[#allocation8 + $0x6b0] sm:$0xf]
        %v4102 = vld [vmem:[#allocation8 + $0x6b8] sm:$0xf]
        %v4103 = vld [vmem:[#allocation8 + $0x6c0] sm:$0xf]
        %v4104 = vld [vmem:[#allocation8 + $0x6c8] sm:$0xf]
        %v4105 = vld [vmem:[#allocation8 + $0x6d0] sm:$0xf]
        %v4106 = vld [vmem:[#allocation8 + $0x6d8] sm:$0xf]
        %v4107 = vld [vmem:[#allocation8 + $0x6e0] sm:$0xf]
        %v4108 = vld [vmem:[#allocation8 + $0x6e8] sm:$0xf]
        %v4109 = vld [vmem:[#allocation8 + $0x6f0] sm:$0xf]
        %v4110 = vld [vmem:[#allocation8 + $0x6f8] sm:$0xf]
        %v4111 = vld [vmem:[#allocation10 + $0x80] ss:$0 sm:$0xff]
        %v4144 = vunpack.c.l.b16 %v4079
        %v4145 = vunpack.c.l.b16 %v4080
        %v4146 = vunpack.c.l.b16 %v4081
        %v4147 = vunpack.c.l.b16 %v4082
        %v4148 = vunpack.c.l.b16 %v4083
        %v4149 = vunpack.c.l.b16 %v4084
        %v4150 = vunpack.c.l.b16 %v4085
        %v4151 = vunpack.c.l.b16 %v4086
        %v4152 = vunpack.c.l.b16 %v4087
        %v4153 = vunpack.c.l.b16 %v4088
        %v4154 = vunpack.c.l.b16 %v4089
        %v4155 = vunpack.c.l.b16 %v4090
        %v4156 = vunpack.c.l.b16 %v4091
        %v4157 = vunpack.c.l.b16 %v4092
        %v4158 = vunpack.c.l.b16 %v4093
        %v4159 = vunpack.c.l.b16 %v4094
        %v4160 = vunpack.c.l.b16 %v4095
        %v4161 = vunpack.c.l.b16 %v4096
        %v4162 = vunpack.c.l.b16 %v4097
        %v4163 = vunpack.c.l.b16 %v4098
        %v4164 = vunpack.c.l.b16 %v4099
        %v4165 = vunpack.c.l.b16 %v4100
        %v4166 = vunpack.c.l.b16 %v4101
        %v4167 = vunpack.c.l.b16 %v4102
        %v4168 = vunpack.c.l.b16 %v4103
        %v4169 = vunpack.c.l.b16 %v4104
        %v4170 = vunpack.c.l.b16 %v4105
        %v4171 = vunpack.c.l.b16 %v4106
        %v4172 = vunpack.c.l.b16 %v4107
        %v4173 = vunpack.c.l.b16 %v4108
        %v4174 = vunpack.c.l.b16 %v4109
        %v4175 = vunpack.c.l.b16 %v4110
        %v4176 = vpack.c.b16 %v4145, %v4144
        %v4177 = vpack.c.b16 %v4147, %v4146
        %v4178 = vpack.c.b16 %v4149, %v4148
        %v4179 = vpack.c.b16 %v4151, %v4150
        %v4180 = vpack.c.b16 %v4153, %v4152
        %v4181 = vpack.c.b16 %v4155, %v4154
        %v4182 = vpack.c.b16 %v4157, %v4156
        %v4183 = vpack.c.b16 %v4159, %v4158
        %v4184 = vpack.c.b16 %v4161, %v4160
        %v4185 = vpack.c.b16 %v4163, %v4162
        %v4186 = vpack.c.b16 %v4165, %v4164
        %v4187 = vpack.c.b16 %v4167, %v4166
        %v4188 = vpack.c.b16 %v4169, %v4168
        %v4189 = vpack.c.b16 %v4171, %v4170
        %v4190 = vpack.c.b16 %v4173, %v4172
        %v4191 = vpack.c.b16 %v4175, %v4174
        %4208 = vmatpush.bf16.msra.mxu0 %v4183
        %4209 = vmatpush.bf16.msra.mxu0 %v4182
        %4210 = vmatpush.bf16.msra.mxu0 %v4181
        %4211 = vmatpush.bf16.msra.mxu0 %v4180
        %4212 = vmatpush.bf16.msra.mxu0 %v4179
        %4213 = vmatpush.bf16.msra.mxu0 %v4178
        %4214 = vmatpush.bf16.msra.mxu0 %v4177
        %4215 = vmatpush.bf16.msra.mxu0 %v4176
        %4216 = vmatmul.bf16.gmra.mxu0 %v4047
        %v4217 = vpop.f32.mrf.mxu0
        %v4218 = vadd.f32 %v4111, %v4217
        %v4219 = vpop.f32.mrf.mxu0
        %v4220 = vadd.f32 %v4111, %v4219
        %4221 = vmatmul.bf16.gmra.mxu0 %v4049
        %v4222 = vpop.f32.mrf.mxu0
        %v4223 = vadd.f32 %v4111, %v4222
        %v4224 = vpop.f32.mrf.mxu0
        %v4225 = vadd.f32 %v4111, %v4224
        %4226 = vmatmul.bf16.gmra.mxu0 %v4051
        %v4227 = vpop.f32.mrf.mxu0
        %v4228 = vadd.f32 %v4111, %v4227
        %v4229 = vpop.f32.mrf.mxu0
        %v4230 = vadd.f32 %v4111, %v4229
        %4231 = vmatmul.bf16.gmra.mxu0 %v4053
        %v4232 = vpop.f32.mrf.mxu0
        %v4233 = vadd.f32 %v4111, %v4232
        %v4234 = vpop.f32.mrf.mxu0
        %v4235 = vadd.f32 %v4111, %v4234
        %4236 = vmatmul.bf16.gmra.mxu0 %v4055
        %v4237 = vpop.f32.mrf.mxu0
        %v4238 = vadd.f32 %v4111, %v4237
        %v4239 = vpop.f32.mrf.mxu0
        %v4240 = vadd.f32 %v4111, %v4239
        %4241 = vmatmul.bf16.gmra.mxu0 %v4057
        %v4242 = vpop.f32.mrf.mxu0
        %v4243 = vadd.f32 %v4111, %v4242
        %v4244 = vpop.f32.mrf.mxu0
        %v4245 = vadd.f32 %v4111, %v4244
        %4246 = vmatmul.bf16.gmra.mxu0 %v4059
        %v4247 = vpop.f32.mrf.mxu0
        %v4248 = vadd.f32 %v4111, %v4247
        %v4249 = vpop.f32.mrf.mxu0
        %v4250 = vadd.f32 %v4111, %v4249
        %4251 = vmatmul.bf16.gmra.mxu0 %v4061
        %v4252 = vpop.f32.mrf.mxu0
        %v4253 = vadd.f32 %v4111, %v4252
        %v4254 = vpop.f32.mrf.mxu0
        %v4255 = vadd.f32 %v4111, %v4254
        %4256 = vmatmul.bf16.gmra.mxu0 %v4063
        %v4257 = vpop.f32.mrf.mxu0
        %v4258 = vadd.f32 %v4111, %v4257
        %v4259 = vpop.f32.mrf.mxu0
        %v4260 = vadd.f32 %v4111, %v4259
        %4261 = vmatmul.bf16.gmra.mxu0 %v4065
        %v4262 = vpop.f32.mrf.mxu0
        %v4263 = vadd.f32 %v4111, %v4262
        %v4264 = vpop.f32.mrf.mxu0
        %v4265 = vadd.f32 %v4111, %v4264
        %4266 = vmatmul.bf16.gmra.mxu0 %v4067
        %v4267 = vpop.f32.mrf.mxu0
        %v4268 = vadd.f32 %v4111, %v4267
        %v4269 = vpop.f32.mrf.mxu0
        %v4270 = vadd.f32 %v4111, %v4269
        %4271 = vmatmul.bf16.gmra.mxu0 %v4069
        %v4272 = vpop.f32.mrf.mxu0
        %v4273 = vadd.f32 %v4111, %v4272
        %v4274 = vpop.f32.mrf.mxu0
        %v4275 = vadd.f32 %v4111, %v4274
        %4276 = vmatmul.bf16.gmra.mxu0 %v4071
        %v4277 = vpop.f32.mrf.mxu0
        %v4278 = vadd.f32 %v4111, %v4277
        %v4279 = vpop.f32.mrf.mxu0
        %v4280 = vadd.f32 %v4111, %v4279
        %4281 = vmatmul.bf16.gmra.mxu0 %v4073
        %v4282 = vpop.f32.mrf.mxu0
        %v4283 = vadd.f32 %v4111, %v4282
        %v4284 = vpop.f32.mrf.mxu0
        %v4285 = vadd.f32 %v4111, %v4284
        %4286 = vmatmul.bf16.gmra.mxu0 %v4075
        %v4287 = vpop.f32.mrf.mxu0
        %v4288 = vadd.f32 %v4111, %v4287
        %v4289 = vpop.f32.mrf.mxu0
        %v4290 = vadd.f32 %v4111, %v4289
        %4291 = vmatmul.bf16.gmra.mxu0 %v4077
        %v4292 = vpop.f32.mrf.mxu0
        %v4293 = vadd.f32 %v4111, %v4292
        %v4294 = vpop.f32.mrf.mxu0
        %v4295 = vadd.f32 %v4111, %v4294
        %4296 = vdwg.mxu0
        %4297 = vmatpush.bf16.msra.mxu0 %v4191
        %4298 = vmatpush.bf16.msra.mxu0 %v4190
        %4299 = vmatpush.bf16.msra.mxu0 %v4189
        %4300 = vmatpush.bf16.msra.mxu0 %v4188
        %4301 = vmatpush.bf16.msra.mxu0 %v4187
        %4302 = vmatpush.bf16.msra.mxu0 %v4186
        %4303 = vmatpush.bf16.msra.mxu0 %v4185
        %4304 = vmatpush.bf16.msra.mxu0 %v4184
        %4305 = vmatmul.bf16.gmra.mxu0 %v4048
        %v4306 = vpop.f32.mrf.mxu0
        %v4307 = vadd.f32 %v4218, %v4306
        %v4308 = vpop.f32.mrf.mxu0
        %v4309 = vadd.f32 %v4220, %v4308
        %4310 = vmatmul.bf16.gmra.mxu0 %v4050
        %v4311 = vpop.f32.mrf.mxu0
        %v4312 = vadd.f32 %v4223, %v4311
        %v4313 = vpop.f32.mrf.mxu0
        %v4314 = vadd.f32 %v4225, %v4313
        %4315 = vmatmul.bf16.gmra.mxu0 %v4052
        %v4316 = vpop.f32.mrf.mxu0
        %v4317 = vadd.f32 %v4228, %v4316
        %v4318 = vpop.f32.mrf.mxu0
        %v4319 = vadd.f32 %v4230, %v4318
        %4320 = vmatmul.bf16.gmra.mxu0 %v4054
        %v4321 = vpop.f32.mrf.mxu0
        %v4322 = vadd.f32 %v4233, %v4321
        %v4323 = vpop.f32.mrf.mxu0
        %v4324 = vadd.f32 %v4235, %v4323
        %4325 = vmatmul.bf16.gmra.mxu0 %v4056
        %v4326 = vpop.f32.mrf.mxu0
        %v4327 = vadd.f32 %v4238, %v4326
        %v4328 = vpop.f32.mrf.mxu0
        %v4329 = vadd.f32 %v4240, %v4328
        %4330 = vmatmul.bf16.gmra.mxu0 %v4058
        %v4331 = vpop.f32.mrf.mxu0
        %v4332 = vadd.f32 %v4243, %v4331
        %v4333 = vpop.f32.mrf.mxu0
        %v4334 = vadd.f32 %v4245, %v4333
        %4335 = vmatmul.bf16.gmra.mxu0 %v4060
        %v4336 = vpop.f32.mrf.mxu0
        %v4337 = vadd.f32 %v4248, %v4336
        %v4338 = vpop.f32.mrf.mxu0
        %v4339 = vadd.f32 %v4250, %v4338
        %4340 = vmatmul.bf16.gmra.mxu0 %v4062
        %v4341 = vpop.f32.mrf.mxu0
        %v4342 = vadd.f32 %v4253, %v4341
        %v4343 = vpop.f32.mrf.mxu0
        %v4344 = vadd.f32 %v4255, %v4343
        %4345 = vmatmul.bf16.gmra.mxu0 %v4064
        %v4346 = vpop.f32.mrf.mxu0
        %v4347 = vadd.f32 %v4258, %v4346
        %v4348 = vpop.f32.mrf.mxu0
        %v4349 = vadd.f32 %v4260, %v4348
        %4350 = vmatmul.bf16.gmra.mxu0 %v4066
        %v4351 = vpop.f32.mrf.mxu0
        %v4352 = vadd.f32 %v4263, %v4351
        %v4353 = vpop.f32.mrf.mxu0
        %v4354 = vadd.f32 %v4265, %v4353
        %4355 = vmatmul.bf16.gmra.mxu0 %v4068
        %v4356 = vpop.f32.mrf.mxu0
        %v4357 = vadd.f32 %v4268, %v4356
        %v4358 = vpop.f32.mrf.mxu0
        %v4359 = vadd.f32 %v4270, %v4358
        %4360 = vmatmul.bf16.gmra.mxu0 %v4070
        %v4361 = vpop.f32.mrf.mxu0
        %v4362 = vadd.f32 %v4273, %v4361
        %v4363 = vpop.f32.mrf.mxu0
        %v4364 = vadd.f32 %v4275, %v4363
        %4365 = vmatmul.bf16.gmra.mxu0 %v4072
        %v4366 = vpop.f32.mrf.mxu0
        %v4367 = vadd.f32 %v4278, %v4366
        %v4368 = vpop.f32.mrf.mxu0
        %v4369 = vadd.f32 %v4280, %v4368
        %4370 = vmatmul.bf16.gmra.mxu0 %v4074
        %v4371 = vpop.f32.mrf.mxu0
        %v4372 = vadd.f32 %v4283, %v4371
        %v4373 = vpop.f32.mrf.mxu0
        %v4374 = vadd.f32 %v4285, %v4373
        %4375 = vmatmul.bf16.gmra.mxu0 %v4076
        %v4376 = vpop.f32.mrf.mxu0
        %v4377 = vadd.f32 %v4288, %v4376
        %v4378 = vpop.f32.mrf.mxu0
        %v4379 = vadd.f32 %v4290, %v4378
        %4380 = vmatmul.bf16.gmra.mxu0 %v4078
        %v4381 = vpop.f32.mrf.mxu0
        %v4382 = vadd.f32 %v4293, %v4381
        %v4383 = vpop.f32.mrf.mxu0
        %v4384 = vadd.f32 %v4295, %v4383
        %4385 = vdwg.mxu0
        %4386 = vst [vmem:[%s358] sm:$0xff] %v4307
        %4387 = vst [vmem:[%s358 + $0x20] sm:$0xff] %v4309
        %4388 = vst [vmem:[%s358 + $0x40] sm:$0xff] %v4312
        %4389 = vst [vmem:[%s358 + $0x60] sm:$0xff] %v4314
        %4390 = vst [vmem:[%s358 + $0x80] sm:$0xff] %v4317
        %4391 = vst [vmem:[%s358 + $0xa0] sm:$0xff] %v4319
        %4392 = vst [vmem:[%s358 + $0xc0] sm:$0xff] %v4322
        %4393 = vst [vmem:[%s358 + $0xe0] sm:$0xff] %v4324
        %4394 = vst [vmem:[%s358 + $0x100] sm:$0xff] %v4327
        %4395 = vst [vmem:[%s358 + $0x120] sm:$0xff] %v4329
        %4396 = vst [vmem:[%s358 + $0x140] sm:$0xff] %v4332
        %4397 = vst [vmem:[%s358 + $0x160] sm:$0xff] %v4334
        %4398 = vst [vmem:[%s358 + $0x180] sm:$0xff] %v4337
        %4399 = vst [vmem:[%s358 + $0x1a0] sm:$0xff] %v4339
        %4400 = vst [vmem:[%s358 + $0x1c0] sm:$0xff] %v4342
        %4401 = vst [vmem:[%s358 + $0x1e0] sm:$0xff] %v4344
        %4402 = vst [vmem:[%s358 + $0x200] sm:$0xff] %v4347
        %4403 = vst [vmem:[%s358 + $0x220] sm:$0xff] %v4349
        %4404 = vst [vmem:[%s358 + $0x240] sm:$0xff] %v4352
        %4405 = vst [vmem:[%s358 + $0x260] sm:$0xff] %v4354
        %4406 = vst [vmem:[%s358 + $0x280] sm:$0xff] %v4357
        %4407 = vst [vmem:[%s358 + $0x2a0] sm:$0xff] %v4359
        %4408 = vst [vmem:[%s358 + $0x2c0] sm:$0xff] %v4362
        %4409 = vst [vmem:[%s358 + $0x2e0] sm:$0xff] %v4364
        %4410 = vst [vmem:[%s358 + $0x300] sm:$0xff] %v4367
        %4411 = vst [vmem:[%s358 + $0x320] sm:$0xff] %v4369
        %4412 = vst [vmem:[%s358 + $0x340] sm:$0xff] %v4372
        %4413 = vst [vmem:[%s358 + $0x360] sm:$0xff] %v4374
        %4414 = vst [vmem:[%s358 + $0x380] sm:$0xff] %v4377
        %4415 = vst [vmem:[%s358 + $0x3a0] sm:$0xff] %v4379
        %4416 = vst [vmem:[%s358 + $0x3c0] sm:$0xff] %v4382
        %4417 = vst [vmem:[%s358 + $0x3e0] sm:$0xff] %v4384
        %4418 = vst [vmem:[%s358 + $0x8] sm:$0xff] %v2851
        %4419 = vst [vmem:[%s358 + $0x28] sm:$0xff] %v2853
        %4420 = vst [vmem:[%s358 + $0x48] sm:$0xff] %v2856
        %4421 = vst [vmem:[%s358 + $0x68] sm:$0xff] %v2858
        %4422 = vst [vmem:[%s358 + $0x88] sm:$0xff] %v2861
        %4423 = vst [vmem:[%s358 + $0xa8] sm:$0xff] %v2863
        %4424 = vst [vmem:[%s358 + $0xc8] sm:$0xff] %v2866
        %4425 = vst [vmem:[%s358 + $0xe8] sm:$0xff] %v2868
        %4426 = vst [vmem:[%s358 + $0x108] sm:$0xff] %v2871
        %4427 = vst [vmem:[%s358 + $0x128] sm:$0xff] %v2873
        %4428 = vst [vmem:[%s358 + $0x148] sm:$0xff] %v2876
        %4429 = vst [vmem:[%s358 + $0x168] sm:$0xff] %v2878
        %4430 = vst [vmem:[%s358 + $0x188] sm:$0xff] %v2881
        %4431 = vst [vmem:[%s358 + $0x1a8] sm:$0xff] %v2883
        %4432 = vst [vmem:[%s358 + $0x1c8] sm:$0xff] %v2886
        %4433 = vst [vmem:[%s358 + $0x1e8] sm:$0xff] %v2888
        %4434 = vst [vmem:[%s358 + $0x208] sm:$0xff] %v2891
        %4435 = vst [vmem:[%s358 + $0x228] sm:$0xff] %v2893
        %4436 = vst [vmem:[%s358 + $0x248] sm:$0xff] %v2896
        %4437 = vst [vmem:[%s358 + $0x268] sm:$0xff] %v2898
        %4438 = vst [vmem:[%s358 + $0x288] sm:$0xff] %v2901
        %4439 = vst [vmem:[%s358 + $0x2a8] sm:$0xff] %v2903
        %4440 = vst [vmem:[%s358 + $0x2c8] sm:$0xff] %v2906
        %4441 = vst [vmem:[%s358 + $0x2e8] sm:$0xff] %v2908
        %4442 = vst [vmem:[%s358 + $0x308] sm:$0xff] %v2911
        %4443 = vst [vmem:[%s358 + $0x328] sm:$0xff] %v2913
        %4444 = vst [vmem:[%s358 + $0x348] sm:$0xff] %v2916
        %4445 = vst [vmem:[%s358 + $0x368] sm:$0xff] %v2918
        %4446 = vst [vmem:[%s358 + $0x388] sm:$0xff] %v2921
        %4447 = vst [vmem:[%s358 + $0x3a8] sm:$0xff] %v2923
        %4448 = vst [vmem:[%s358 + $0x3c8] sm:$0xff] %v2926
        %4449 = vst [vmem:[%s358 + $0x3e8] sm:$0xff] %v2928
        %4450 = vst [vmem:[%s358 + $0x10] sm:$0xff] %v3029
        %4451 = vst [vmem:[%s358 + $0x30] sm:$0xff] %v3031
        %4452 = vst [vmem:[%s358 + $0x50] sm:$0xff] %v3034
        %4453 = vst [vmem:[%s358 + $0x70] sm:$0xff] %v3036
        %4454 = vst [vmem:[%s358 + $0x90] sm:$0xff] %v3039
        %4455 = vst [vmem:[%s358 + $0xb0] sm:$0xff] %v3041
        %4456 = vst [vmem:[%s358 + $0xd0] sm:$0xff] %v3044
        %4457 = vst [vmem:[%s358 + $0xf0] sm:$0xff] %v3046
        %4458 = vst [vmem:[%s358 + $0x110] sm:$0xff] %v3049
        %4459 = vst [vmem:[%s358 + $0x130] sm:$0xff] %v3051
        %4460 = vst [vmem:[%s358 + $0x150] sm:$0xff] %v3054
        %4461 = vst [vmem:[%s358 + $0x170] sm:$0xff] %v3056
        %4462 = vst [vmem:[%s358 + $0x190] sm:$0xff] %v3059
        %4463 = vst [vmem:[%s358 + $0x1b0] sm:$0xff] %v3061
        %4464 = vst [vmem:[%s358 + $0x1d0] sm:$0xff] %v3064
        %4465 = vst [vmem:[%s358 + $0x1f0] sm:$0xff] %v3066
        %4466 = vst [vmem:[%s358 + $0x210] sm:$0xff] %v3069
        %4467 = vst [vmem:[%s358 + $0x230] sm:$0xff] %v3071
        %4468 = vst [vmem:[%s358 + $0x250] sm:$0xff] %v3074
        %4469 = vst [vmem:[%s358 + $0x270] sm:$0xff] %v3076
        %4470 = vst [vmem:[%s358 + $0x290] sm:$0xff] %v3079
        %4471 = vst [vmem:[%s358 + $0x2b0] sm:$0xff] %v3081
        %4472 = vst [vmem:[%s358 + $0x2d0] sm:$0xff] %v3084
        %4473 = vst [vmem:[%s358 + $0x2f0] sm:$0xff] %v3086
        %4474 = vst [vmem:[%s358 + $0x310] sm:$0xff] %v3089
        %4475 = vst [vmem:[%s358 + $0x330] sm:$0xff] %v3091
        %4476 = vst [vmem:[%s358 + $0x350] sm:$0xff] %v3094
        %4477 = vst [vmem:[%s358 + $0x370] sm:$0xff] %v3096
        %4478 = vst [vmem:[%s358 + $0x390] sm:$0xff] %v3099
        %4479 = vst [vmem:[%s358 + $0x3b0] sm:$0xff] %v3101
        %4480 = vst [vmem:[%s358 + $0x3d0] sm:$0xff] %v3104
        %4481 = vst [vmem:[%s358 + $0x3f0] sm:$0xff] %v3106
        %4482 = vst [vmem:[%s358 + $0x18] sm:$0xff] %v1092
        %4483 = vst [vmem:[%s358 + $0x38] sm:$0xff] %v1094
        %4484 = vst [vmem:[%s358 + $0x58] sm:$0xff] %v1097
        %4485 = vst [vmem:[%s358 + $0x78] sm:$0xff] %v1099
        %4486 = vst [vmem:[%s358 + $0x98] sm:$0xff] %v1102
        %4487 = vst [vmem:[%s358 + $0xb8] sm:$0xff] %v1104
        %4488 = vst [vmem:[%s358 + $0xd8] sm:$0xff] %v1107
        %4489 = vst [vmem:[%s358 + $0xf8] sm:$0xff] %v1109
        %4490 = vst [vmem:[%s358 + $0x118] sm:$0xff] %v1112
        %4491 = vst [vmem:[%s358 + $0x138] sm:$0xff] %v1114
        %4492 = vst [vmem:[%s358 + $0x158] sm:$0xff] %v1117
        %4493 = vst [vmem:[%s358 + $0x178] sm:$0xff] %v1119
        %4494 = vst [vmem:[%s358 + $0x198] sm:$0xff] %v1122
        %4495 = vst [vmem:[%s358 + $0x1b8] sm:$0xff] %v1124
        %4496 = vst [vmem:[%s358 + $0x1d8] sm:$0xff] %v1127
        %4497 = vst [vmem:[%s358 + $0x1f8] sm:$0xff] %v1129
        %4498 = vst [vmem:[%s358 + $0x218] sm:$0xff] %v1132
        %4499 = vst [vmem:[%s358 + $0x238] sm:$0xff] %v1134
        %4500 = vst [vmem:[%s358 + $0x258] sm:$0xff] %v1137
        %4501 = vst [vmem:[%s358 + $0x278] sm:$0xff] %v1139
        %4502 = vst [vmem:[%s358 + $0x298] sm:$0xff] %v1142
        %4503 = vst [vmem:[%s358 + $0x2b8] sm:$0xff] %v1144
        %4504 = vst [vmem:[%s358 + $0x2d8] sm:$0xff] %v1147
        %4505 = vst [vmem:[%s358 + $0x2f8] sm:$0xff] %v1149
        %4506 = vst [vmem:[%s358 + $0x318] sm:$0xff] %v1152
        %4507 = vst [vmem:[%s358 + $0x338] sm:$0xff] %v1154
        %4508 = vst [vmem:[%s358 + $0x358] sm:$0xff] %v1157
        %4509 = vst [vmem:[%s358 + $0x378] sm:$0xff] %v1159
        %4510 = vst [vmem:[%s358 + $0x398] sm:$0xff] %v1162
        %4511 = vst [vmem:[%s358 + $0x3b8] sm:$0xff] %v1164
        %4512 = vst [vmem:[%s358 + $0x3d8] sm:$0xff] %v1167
        %4513 = vst [vmem:[%s358 + $0x3f8] sm:$0xff] %v1169
        %s4514 = sand.u32 %s154, 1
        %s4515 = scalar_lea.sflag [#allocation4], %s4514
        %s4516 = sand.u32 %s154, 1
        %s4517 = smul.addr %s4516, 1024
        %s4518 = scalar_lea.vmem [#allocation11], %s4517
        // Predicated region
        $region61: #{tpu_custom_call.1} parent=39 // pred_check
          %p4519 = pneg %p164
        $region62: #{tpu_custom_call.1} parent=39 // pred_check_branch
          %4521 = sbr.rel (%p4519) target = $region64
        $region63: #{tpu_custom_call.1} parent=39 // pred_region
          %s4522 = smul.u32 32, %s26
          %4524 = vsyncadd %s4515, 0
          %s4525 = smul.addr %s4522, 4
          %s4526 = smul.addr %s4525, 8
          %s4527 = scalar_lea.hbm %s5, %s4526
          %s4528 = sshll.u32 %s4518, 4
          %s4529 = int_to_ptr.vmem [resolvable:$true] %s4528
          %s4530 = sshll.u32 %s4527, 4
          %s4531 = int_to_ptr.hbm [resolvable:$true] %s4530
          %4536 = dma.vmem_to_hbm [thread:$0]  %s4529, 16384, %s4531, %s4515, 512, 512, 32
        $region64: #{tpu_custom_call.1} parent=39 // pred_fallthru
          _
      $region40: #{tpu_custom_call.1} parent=5 // pred_fallthru
        _
      %p4537 = scmp.le.s32.totalorder 2, %s21
      // Predicated region
      $region65: #{tpu_custom_call.1} parent=5 // pred_check
        %p4538 = pneg %p4537
      $region66: #{tpu_custom_call.1} parent=5 // pred_check_branch
        %4540 = sbr.rel (%p4538) target = $region68
      $region67: #{tpu_custom_call.1} parent=5 // pred_region
        %s4541 = ssub.s32 %s21, 2
        // Predicated region
        $region69: #{tpu_custom_call.1} parent=67 // pred_check
          %p4542 = pneg %p170
        $region70: #{tpu_custom_call.1} parent=67 // pred_check_branch
          %4544 = sbr.rel (%p4542) target = $region72
        $region71: #{tpu_custom_call.1} parent=67 // pred_region
          %s4545 = sand.u32 %s155, 1
          %s4546 = scalar_lea.sflag [#allocation4], %s4545
          %s4547 = sand.u32 %s155, 1
          %s4548 = smul.addr %s4547, 1024
          %s4549 = scalar_lea.vmem [#allocation11], %s4548
          %4551 = dma.done %s4546, 16384
        $region72: #{tpu_custom_call.1} parent=67 // pred_fallthru
          _
      $region68: #{tpu_custom_call.1} parent=5 // pred_fallthru
        _
    $region6: #{tpu_custom_call.1} parent=1 // loop_footer
      %s25 = sadd.s32 1, %s21
    $region7: #{tpu_custom_call.1} parent=1 // loop_footer_branch
      %20 = sbr.rel target = $region3
    $region8: #{tpu_custom_call.1} parent=1 // loop_exit
      _
    %4552 = vsyncpa [#allocation3], 1
    %s4553 = scalar_lea.sflag [#allocation3], 1
    %4554 = vsyncpa %s4553, 1
    %4555 = vsyncpa [#allocation6], 1
    %s4556 = scalar_lea.sflag [#allocation6], 1
    %4557 = vsyncpa %s4556, 1
    %4558 = vsyncpa [#allocation9], 1
    %4559 = vsyncpa [#allocation4], 1
    %s4560 = scalar_lea.sflag [#allocation4], 1
    %4561 = vsyncpa %s4560, 1

</llo_original>
